<compile_context>
chip_gen: v7x
topology: tpu7x:2x2x1
jax: 0.10.0
libtpu: 0.0.40
codegen_flags: <defaults>
</compile_context>

<pallas_src>
import functools

import jax
import jax.numpy as jnp
import numpy as np
from jax.experimental import pallas as pl
from jax.experimental.pallas import tpu as pltpu


# ----------------------------------------------------------------------------
# Fused Bottleneck kernel
# ----------------------------------------------------------------------------
def _bottleneck_kernel(x_ref, w1_ref, b1_ref, w2_ref, b2_ref, w3_ref, b3_ref,
                       o_ref, sh0_ref, sh1_ref, sh2_ref, *, chunk_h):
    """One grid step = one batch element (full image).

    x_ref  : (H, W, Cin)      bf16 input image (channels on lanes)
    w1_ref : (Cin, Cmid)      bf16, BN1 scale folded in
    b1_ref : (1, Cmid)        f32
    w2_ref : (9, Cmid, Cmid)  bf16, 3x3 taps (ky*3+kx), BN2 scale folded in
    b2_ref : (1, Cmid)        f32
    w3_ref : (Cmid, Cexp)     bf16, BN3 scale folded in
    b3_ref : (1, Cexp)        f32
    o_ref  : (H, W, Cexp)     bf16 output image
    sh{K}_ref : (H+2, W, Cmid) bf16 VMEM scratch holding the conv1 output shifted
        by kx = K columns (K=1 is the unshifted centre), i.e.
        shK[r, w] == conv1_padded[r, w + K], with zero rows 0 / H+1 and zero
        shift-in columns.  This makes every 3x3 tap a contiguous row slice.
    """
    H, W, Cin = x_ref.shape
    Cmid = w1_ref.shape[1]
    Cexp = w3_ref.shape[1]
    n_chunks = H // chunk_h
    shifted = (sh0_ref, sh1_ref, sh2_ref)

    # ---- zero ONLY the padding borders of the shifted scratch ----------------
    zrow = jnp.zeros((1, W, Cmid), jnp.bfloat16)
    for s in shifted:
        s[0:1, :, :] = zrow                   # top padding row
        s[H + 1:H + 2, :, :] = zrow           # bottom padding row
    zcol = jnp.zeros((H + 2, 1, Cmid), jnp.bfloat16)
    sh0_ref[:, 0:1, :] = zcol                 # left padding column (kx=0 shift)
    sh2_ref[:, W - 1:W, :] = zcol             # right padding column (kx=2 shift)

    # ---- conv1 (1x1) + BN1 + ReLU, whole image, chunked over rows ------------
    for c in range(n_chunks):
        r0 = c * chunk_h
        m = chunk_h * W
        xin = x_ref[r0:r0 + chunk_h, :, :].reshape(m, Cin)
        t1 = jnp.dot(xin, w1_ref[...], preferred_element_type=jnp.float32)
        t1 = jnp.maximum(t1 + b1_ref[...], 0.0)
        t1 = t1.astype(jnp.bfloat16).reshape(chunk_h, W, Cmid)
        # centre (kx=1) plus the two column-shifted copies used by the 3x3 taps.
        sh1_ref[r0 + 1:r0 + 1 + chunk_h, :, :] = t1
        sh0_ref[r0 + 1:r0 + 1 + chunk_h, 1:W, :] = t1[:, 0:W - 1, :]
        sh2_ref[r0 + 1:r0 + 1 + chunk_h, 0:W - 1, :] = t1[:, 1:W, :]

    # ---- conv2 (3x3) + BN2 + ReLU, conv3 (1x1) + BN3 + residual + ReLU -------
    for c in range(n_chunks):
        r0 = c * chunk_h
        m = chunk_h * W
        acc = jnp.zeros((m, Cmid), jnp.float32)
        for ky in range(3):
            for kx in range(3):
                patch = shifted[kx][r0 + ky:r0 + ky + chunk_h, :, :]
                acc = acc + jnp.dot(patch.reshape(m, Cmid),
                                    w2_ref[ky * 3 + kx],
                                    preferred_element_type=jnp.float32)
        t2 = jnp.maximum(acc + b2_ref[...], 0.0).astype(jnp.bfloat16)

        y = jnp.dot(t2, w3_ref[...], preferred_element_type=jnp.float32)
        y = y + b3_ref[...]
        identity = x_ref[r0:r0 + chunk_h, :, :].reshape(m, Cexp).astype(jnp.float32)
        y = jnp.maximum(y + identity, 0.0)
        o_ref[r0:r0 + chunk_h, :, :] = y.reshape(chunk_h, W, Cexp).astype(o_ref.dtype)


def _pick_chunk_h(H, W, target_m=256):
    """Largest divisor of H whose flattened pixel count chunk_h*W stays <= target_m."""
    best = 1
    for t in range(1, H + 1):
        if H % t == 0 and t * W <= target_m:
            best = t
    return best


def bottleneck_fused(x_nhwc_bf16, w1, b1, w2, b2, w3, b3, *, chunk_h=None):
    N, H, W, Cin = x_nhwc_bf16.shape
    Cmid = w1.shape[1]
    Cexp = w3.shape[1]
    assert Cexp == Cin, "no-downsample path requires in_channel == out_channel * 4"
    if chunk_h is None:
        chunk_h = _pick_chunk_h(H, W)
    assert H % chunk_h == 0

    kernel = functools.partial(_bottleneck_kernel, chunk_h=chunk_h)

    return pl.pallas_call(
        kernel,
        out_shape=jax.ShapeDtypeStruct((N, H, W, Cexp), jnp.bfloat16),
        grid_spec=pltpu.PrefetchScalarGridSpec(
            num_scalar_prefetch=0,
            grid=(N,),
            in_specs=[
                # full image of one batch element (leading N dim squeezed)
                pl.BlockSpec((None, H, W, Cin), lambda n: (n, 0, 0, 0)),
                # TODO(synk): at the Cmid=512 stage, pipeline_mode=pl.Buffered(1)
                # on these grid-invariant weight specs would halve their VMEM use.
                pl.BlockSpec((Cin, Cmid), lambda n: (0, 0)),
                pl.BlockSpec((1, Cmid), lambda n: (0, 0)),
                pl.BlockSpec((9, Cmid, Cmid), lambda n: (0, 0, 0)),
                pl.BlockSpec((1, Cmid), lambda n: (0, 0)),
                pl.BlockSpec((Cmid, Cexp), lambda n: (0, 0)),
                pl.BlockSpec((1, Cexp), lambda n: (0, 0)),
            ],
            out_specs=pl.BlockSpec((None, H, W, Cexp), lambda n: (n, 0, 0, 0)),
            scratch_shapes=[
                pltpu.VMEM((H + 2, W, Cmid), jnp.bfloat16),   # kx = 0 shift
                pltpu.VMEM((H + 2, W, Cmid), jnp.bfloat16),   # kx = 1 (centre)
                pltpu.VMEM((H + 2, W, Cmid), jnp.bfloat16),   # kx = 2 shift
            ],
        ),
        compiler_params=pltpu.CompilerParams(
            dimension_semantics=("parallel",),
            vmem_limit_bytes=32 * 1024 * 1024,
        ),
    )(x_nhwc_bf16, w1, b1, w2, b2, w3, b3)


# ----------------------------------------------------------------------------
# Parameter setup (deterministic, synthetic) + BN folding + forward wrapper
# ----------------------------------------------------------------------------
def fold_bn(gamma, beta, mean, var, eps=1e-5):
    scale = gamma / jnp.sqrt(var + eps)
    bias = beta - mean * scale
    return scale.astype(jnp.float32), bias.astype(jnp.float32)


def init_params(key, in_channel, out_channel, expansion=4):
    ks = jax.random.split(key, 6)
    cexp = out_channel * expansion
    p = {}
    # conv weights (PyTorch OIHW -> matmul layouts)
    w1 = jax.random.normal(ks[0], (out_channel, in_channel, 1, 1), jnp.float32) * 0.05
    w2 = jax.random.normal(ks[1], (out_channel, out_channel, 3, 3), jnp.float32) * 0.05
    w3 = jax.random.normal(ks[2], (cexp, out_channel, 1, 1), jnp.float32) * 0.05
    p["w1"] = jnp.transpose(w1[:, :, 0, 0], (1, 0))                                  # (Cin, Cmid)
    p["w2"] = jnp.transpose(w2, (2, 3, 1, 0)).reshape(9, out_channel, out_channel)   # (9, Cmid, Cmid)
    p["w3"] = jnp.transpose(w3[:, :, 0, 0], (1, 0))                                  # (Cmid, Cexp)

    # BN params (inference-mode running stats)
    def bn(k, c):
        k1, k2, k3, k4 = jax.random.split(k, 4)
        gamma = 1.0 + 0.1 * jax.random.normal(k1, (c,), jnp.float32)
        beta = 0.1 * jax.random.normal(k2, (c,), jnp.float32)
        mean = 0.1 * jax.random.normal(k3, (c,), jnp.float32)
        var = jnp.abs(jax.random.normal(k4, (c,), jnp.float32)) + 0.5
        return gamma, beta, mean, var

    p["bn1"] = bn(ks[3], out_channel)
    p["bn2"] = bn(ks[4], out_channel)
    p["bn3"] = bn(ks[5], cexp)
    return p


def prepare_inference_params(params):
    """Fold BN scale into conv weights, cast weights to bf16; biases stay f32."""
    s1, b1 = fold_bn(*params["bn1"])
    s2, b2 = fold_bn(*params["bn2"])
    s3, b3 = fold_bn(*params["bn3"])
    return dict(
        w1=(params["w1"] * s1.reshape(1, -1)).astype(jnp.bfloat16),
        b1=b1.reshape(1, -1),
        w2=(params["w2"] * s2.reshape(1, 1, -1)).astype(jnp.bfloat16),
        b2=b2.reshape(1, -1),
        w3=(params["w3"] * s3.reshape(1, -1)).astype(jnp.bfloat16),
        b3=b3.reshape(1, -1),
    )


def bottleneck_forward(x_nchw, params):
    """Bottleneck forward (stride=1, downsample=None). Input NCHW f32, output NCHW bf16."""
    prep = prepare_inference_params(params)
    x = jnp.transpose(x_nchw, (0, 2, 3, 1))          # NHWC (channels on lanes)
    out = bottleneck_fused(x.astype(jnp.bfloat16),
                           prep["w1"], prep["b1"],
                           prep["w2"], prep["b2"],
                           prep["w3"], prep["b3"])
    return jnp.transpose(out, (0, 3, 1, 2))          # back to NCHW (bf16)


# ----------------------------------------------------------------------------
# Pure-JAX reference (mirrors the kernel's bf16 quantization points exactly)
# ----------------------------------------------------------------------------
def bottleneck_reference(x_nchw, params):
    prep = prepare_inference_params(params)
    x = jnp.transpose(x_nchw, (0, 2, 3, 1)).astype(jnp.bfloat16)
    x32 = x.astype(jnp.float32)
    w1 = prep["w1"].astype(jnp.float32)
    w2 = prep["w2"].astype(jnp.float32)
    w3 = prep["w3"].astype(jnp.float32)
    b1, b2, b3 = prep["b1"], prep["b2"], prep["b3"]
    N, H, W, _ = x.shape
    Cmid = w1.shape[1]

    t1 = jnp.maximum(jnp.einsum("nhwc,cd->nhwd", x32, w1)
                     + b1.reshape(1, 1, 1, -1), 0.0).astype(jnp.bfloat16)

    t1p = jnp.pad(t1, ((0, 0), (1, 1), (1, 1), (0, 0))).astype(jnp.float32)
    acc = jnp.zeros((N, H, W, Cmid), jnp.float32)
    for ky in range(3):
        for kx in range(3):
            acc = acc + jnp.einsum("nhwc,cd->nhwd",
                                   t1p[:, ky:ky + H, kx:kx + W, :],
                                   w2[ky * 3 + kx])
    t2 = jnp.maximum(acc + b2.reshape(1, 1, 1, -1), 0.0).astype(jnp.bfloat16)

    y = jnp.einsum("nhwc,cd->nhwd", t2.astype(jnp.float32), w3) + b3.reshape(1, 1, 1, -1)
    out = jnp.maximum(y + x32, 0.0).astype(jnp.bfloat16)
    return jnp.transpose(out, (0, 3, 1, 2))


if __name__ == "__main__":
    key = jax.random.PRNGKey(0)
    k_x, k_p = jax.random.split(key)

    # Small shapes: batch=2, out_channel=8, in_channel=4*8=32, spatial=16
    out_channel = 8
    in_channel = out_channel * 4
    N, H, W = 2, 16, 16

    x = jax.random.normal(k_x, (N, in_channel, H, W), jnp.float32)
    params = init_params(k_p, in_channel, out_channel)

    y = jax.block_until_ready(bottleneck_forward(x, params))
    y_ref = jax.block_until_ready(bottleneck_reference(x, params))
    np.testing.assert_allclose(np.asarray(y).astype(np.float32),
                               np.asarray(y_ref).astype(np.float32),
                               rtol=2e-2, atol=2e-2)

    print("KERNEL_OK")
</pallas_src>

<mosaic_0001>
module attributes {stable_mosaic.version = 11 : i64} {
  func.func @_bottleneck_kernel(%arg0: i32, %arg1: memref<1x16x16x32xbf16, #tpu.memory_space<vmem>>, %arg2: memref<32x8xbf16, #tpu.memory_space<vmem>>, %arg3: memref<1x8xf32, #tpu.memory_space<vmem>>, %arg4: memref<9x8x8xbf16, #tpu.memory_space<vmem>>, %arg5: memref<1x8xf32, #tpu.memory_space<vmem>>, %arg6: memref<8x32xbf16, #tpu.memory_space<vmem>>, %arg7: memref<1x32xf32, #tpu.memory_space<vmem>>, %arg8: memref<1x16x16x32xbf16, #tpu.memory_space<vmem>>, %arg9: memref<18x16x8xbf16, #tpu.memory_space<vmem>>, %arg10: memref<18x16x8xbf16, #tpu.memory_space<vmem>>, %arg11: memref<18x16x8xbf16, #tpu.memory_space<vmem>>) attributes {dimension_semantics = [#tpu.dimension_semantics<parallel>], iteration_bounds = array<i64: 2>, scalar_prefetch = 0 : i64, scratch_operands = 3 : i64, tpu.core_type = #tpu.core_type<tc>, window_params = [{transform_indices = @transform_0, window_bounds = array<i64: 1, 16, 16, 32>}, {pipeline_mode = #tpu.pipeline_mode<synchronous>, transform_indices = @transform_1, window_bounds = array<i64: 32, 8>}, {pipeline_mode = #tpu.pipeline_mode<synchronous>, transform_indices = @transform_2, window_bounds = array<i64: 1, 8>}, {pipeline_mode = #tpu.pipeline_mode<synchronous>, transform_indices = @transform_3, window_bounds = array<i64: 9, 8, 8>}, {pipeline_mode = #tpu.pipeline_mode<synchronous>, transform_indices = @transform_4, window_bounds = array<i64: 1, 8>}, {pipeline_mode = #tpu.pipeline_mode<synchronous>, transform_indices = @transform_5, window_bounds = array<i64: 8, 32>}, {pipeline_mode = #tpu.pipeline_mode<synchronous>, transform_indices = @transform_6, window_bounds = array<i64: 1, 32>}, {transform_indices = @transform_7, window_bounds = array<i64: 1, 16, 16, 32>}]} {
    %cst = arith.constant 0.000000e+00 : bf16
    %0 = vector.broadcast %cst : bf16 to vector<1x16x8xbf16>
    %c0 = arith.constant 0 : index
    %c0_0 = arith.constant 0 : index
    %c0_1 = arith.constant 0 : index
    %1 = vector.load %arg9[%c0, %c0_0, %c0_1] : memref<18x16x8xbf16, #tpu.memory_space<vmem>>, vector<1x16x8xbf16>
    tpu.vector_store %arg9[%c0, %c0_0, %c0_1], %0 {strides = array<i32>} : memref<18x16x8xbf16, #tpu.memory_space<vmem>>, vector<1x16x8xbf16>,
    %c17 = arith.constant 17 : index
    %c0_2 = arith.constant 0 : index
    %c0_3 = arith.constant 0 : index
    %2 = vector.load %arg9[%c17, %c0_2, %c0_3] : memref<18x16x8xbf16, #tpu.memory_space<vmem>>, vector<1x16x8xbf16>
    tpu.vector_store %arg9[%c17, %c0_2, %c0_3], %0 {strides = array<i32>} : memref<18x16x8xbf16, #tpu.memory_space<vmem>>, vector<1x16x8xbf16>,
    %c0_4 = arith.constant 0 : index
    %c0_5 = arith.constant 0 : index
    %c0_6 = arith.constant 0 : index
    %3 = vector.load %arg10[%c0_4, %c0_5, %c0_6] : memref<18x16x8xbf16, #tpu.memory_space<vmem>>, vector<1x16x8xbf16>
    tpu.vector_store %arg10[%c0_4, %c0_5, %c0_6], %0 {strides = array<i32>} : memref<18x16x8xbf16, #tpu.memory_space<vmem>>, vector<1x16x8xbf16>,
    %c17_7 = arith.constant 17 : index
    %c0_8 = arith.constant 0 : index
    %c0_9 = arith.constant 0 : index
    %4 = vector.load %arg10[%c17_7, %c0_8, %c0_9] : memref<18x16x8xbf16, #tpu.memory_space<vmem>>, vector<1x16x8xbf16>
    tpu.vector_store %arg10[%c17_7, %c0_8, %c0_9], %0 {strides = array<i32>} : memref<18x16x8xbf16, #tpu.memory_space<vmem>>, vector<1x16x8xbf16>,
    %c0_10 = arith.constant 0 : index
    %c0_11 = arith.constant 0 : index
    %c0_12 = arith.constant 0 : index
    %5 = vector.load %arg11[%c0_10, %c0_11, %c0_12] : memref<18x16x8xbf16, #tpu.memory_space<vmem>>, vector<1x16x8xbf16>
    tpu.vector_store %arg11[%c0_10, %c0_11, %c0_12], %0 {strides = array<i32>} : memref<18x16x8xbf16, #tpu.memory_space<vmem>>, vector<1x16x8xbf16>,
    %c17_13 = arith.constant 17 : index
    %c0_14 = arith.constant 0 : index
    %c0_15 = arith.constant 0 : index
    %6 = vector.load %arg11[%c17_13, %c0_14, %c0_15] : memref<18x16x8xbf16, #tpu.memory_space<vmem>>, vector<1x16x8xbf16>
    tpu.vector_store %arg11[%c17_13, %c0_14, %c0_15], %0 {strides = array<i32>} : memref<18x16x8xbf16, #tpu.memory_space<vmem>>, vector<1x16x8xbf16>,
    %cst_16 = arith.constant 0.000000e+00 : bf16
    %7 = vector.broadcast %cst_16 : bf16 to vector<18x1x8xbf16>
    %c0_17 = arith.constant 0 : index
    %c0_18 = arith.constant 0 : index
    %c0_19 = arith.constant 0 : index
    %8 = vector.load %arg9[%c0_17, %c0_18, %c0_19] : memref<18x16x8xbf16, #tpu.memory_space<vmem>>, vector<18x1x8xbf16>
    tpu.vector_store %arg9[%c0_17, %c0_18, %c0_19], %7 {strides = array<i32>} : memref<18x16x8xbf16, #tpu.memory_space<vmem>>, vector<18x1x8xbf16>,
    %c0_20 = arith.constant 0 : index
    %c15 = arith.constant 15 : index
    %c0_21 = arith.constant 0 : index
    %9 = vector.load %arg11[%c0_20, %c15, %c0_21] : memref<18x16x8xbf16, #tpu.memory_space<vmem>>, vector<18x1x8xbf16>
    tpu.vector_store %arg11[%c0_20, %c15, %c0_21], %7 {strides = array<i32>} : memref<18x16x8xbf16, #tpu.memory_space<vmem>>, vector<18x1x8xbf16>,
    %c0_22 = arith.constant 0 : index
    %c0_23 = arith.constant 0 : index
    %c0_24 = arith.constant 0 : index
    %c0_25 = arith.constant 0 : index
    %10 = vector.load %arg1[%c0_22, %c0_23, %c0_24, %c0_25] : memref<1x16x16x32xbf16, #tpu.memory_space<vmem>>, vector<1x16x16x32xbf16>
    %11 = vector.shape_cast %10 : vector<1x16x16x32xbf16> to vector<16x16x32xbf16>
    %12 = vector.shape_cast %11 : vector<16x16x32xbf16> to vector<256x32xbf16>
    %c0_26 = arith.constant 0 : index
    %c0_27 = arith.constant 0 : index
    %13 = vector.load %arg2[%c0_26, %c0_27] : memref<32x8xbf16, #tpu.memory_space<vmem>>, vector<32x8xbf16>
    %cst_28 = arith.constant dense<0.000000e+00> : vector<256x8xf32>
    %14 = tpu.matmul %12, %13, %cst_28 {dimension_numbers = #tpu.dot_dimension_numbers<[1], [0], [0], [1], [0, 0, 1, 1], [], []>} : vector<256x32xbf16>, vector<32x8xbf16>, vector<256x8xf32> -> vector<256x8xf32>
    %c0_29 = arith.constant 0 : index
    %c0_30 = arith.constant 0 : index
    %15 = vector.load %arg3[%c0_29, %c0_30] : memref<1x8xf32, #tpu.memory_space<vmem>>, vector<1x8xf32>
    %16 = vector.broadcast %15 : vector<1x8xf32> to vector<256x8xf32>
    %17 = arith.addf %14, %16 : vector<256x8xf32>
    %cst_31 = arith.constant 0.000000e+00 : f32
    %18 = vector.broadcast %cst_31 : f32 to vector<256x8xf32>
    %19 = arith.maximumf %17, %18 : vector<256x8xf32>
    %20 = arith.truncf %19 : vector<256x8xf32> to vector<256x8xbf16>
    %21 = vector.shape_cast %20 : vector<256x8xbf16> to vector<16x16x8xbf16>
    %c1 = arith.constant 1 : index
    %c0_32 = arith.constant 0 : index
    %c0_33 = arith.constant 0 : index
    %22 = vector.load %arg10[%c1, %c0_32, %c0_33] : memref<18x16x8xbf16, #tpu.memory_space<vmem>>, vector<16x16x8xbf16>
    tpu.vector_store %arg10[%c1, %c0_32, %c0_33], %21 {strides = array<i32>} : memref<18x16x8xbf16, #tpu.memory_space<vmem>>, vector<16x16x8xbf16>,
    %23 = vector.extract_strided_slice %21 {offsets = [0, 0, 0], sizes = [16, 15, 8], strides = [1, 1, 1]} : vector<16x16x8xbf16> to vector<16x15x8xbf16>
    %c1_34 = arith.constant 1 : index
    %c1_35 = arith.constant 1 : index
    %c0_36 = arith.constant 0 : index
    %24 = vector.load %arg9[%c1_34, %c1_35, %c0_36] : memref<18x16x8xbf16, #tpu.memory_space<vmem>>, vector<16x15x8xbf16>
    tpu.vector_store %arg9[%c1_34, %c1_35, %c0_36], %23 {strides = array<i32>} : memref<18x16x8xbf16, #tpu.memory_space<vmem>>, vector<16x15x8xbf16>,
    %25 = vector.extract_strided_slice %21 {offsets = [0, 1, 0], sizes = [16, 15, 8], strides = [1, 1, 1]} : vector<16x16x8xbf16> to vector<16x15x8xbf16>
    %c1_37 = arith.constant 1 : index
    %c0_38 = arith.constant 0 : index
    %c0_39 = arith.constant 0 : index
    %26 = vector.load %arg11[%c1_37, %c0_38, %c0_39] : memref<18x16x8xbf16, #tpu.memory_space<vmem>>, vector<16x15x8xbf16>
    tpu.vector_store %arg11[%c1_37, %c0_38, %c0_39], %25 {strides = array<i32>} : memref<18x16x8xbf16, #tpu.memory_space<vmem>>, vector<16x15x8xbf16>,
    %cst_40 = arith.constant 0.000000e+00 : f32
    %27 = vector.broadcast %cst_40 : f32 to vector<256x8xf32>
    %c0_41 = arith.constant 0 : index
    %c0_42 = arith.constant 0 : index
    %c0_43 = arith.constant 0 : index
    %28 = vector.load %arg9[%c0_41, %c0_42, %c0_43] : memref<18x16x8xbf16, #tpu.memory_space<vmem>>, vector<16x16x8xbf16>
    %29 = vector.shape_cast %28 : vector<16x16x8xbf16> to vector<256x8xbf16>
    %c0_44 = arith.constant 0 : index
    %c0_45 = arith.constant 0 : index
    %c0_46 = arith.constant 0 : index
    %30 = vector.load %arg4[%c0_44, %c0_45, %c0_46] : memref<9x8x8xbf16, #tpu.memory_space<vmem>>, vector<1x8x8xbf16>
    %31 = vector.shape_cast %30 : vector<1x8x8xbf16> to vector<8x8xbf16>
    %cst_47 = arith.constant dense<0.000000e+00> : vector<256x8xf32>
    %32 = tpu.matmul %29, %31, %cst_47 {dimension_numbers = #tpu.dot_dimension_numbers<[1], [0], [0], [1], [0, 0, 1, 1], [], []>} : vector<256x8xbf16>, vector<8x8xbf16>, vector<256x8xf32> -> vector<256x8xf32>
    %33 = arith.addf %27, %32 : vector<256x8xf32>
    %c0_48 = arith.constant 0 : index
    %c0_49 = arith.constant 0 : index
    %c0_50 = arith.constant 0 : index
    %34 = vector.load %arg10[%c0_48, %c0_49, %c0_50] : memref<18x16x8xbf16, #tpu.memory_space<vmem>>, vector<16x16x8xbf16>
    %35 = vector.shape_cast %34 : vector<16x16x8xbf16> to vector<256x8xbf16>
    %c1_51 = arith.constant 1 : index
    %c0_52 = arith.constant 0 : index
    %c0_53 = arith.constant 0 : index
    %36 = vector.load %arg4[%c1_51, %c0_52, %c0_53] : memref<9x8x8xbf16, #tpu.memory_space<vmem>>, vector<1x8x8xbf16>
    %37 = vector.shape_cast %36 : vector<1x8x8xbf16> to vector<8x8xbf16>
    %cst_54 = arith.constant dense<0.000000e+00> : vector<256x8xf32>
    %38 = tpu.matmul %35, %37, %cst_54 {dimension_numbers = #tpu.dot_dimension_numbers<[1], [0], [0], [1], [0, 0, 1, 1], [], []>} : vector<256x8xbf16>, vector<8x8xbf16>, vector<256x8xf32> -> vector<256x8xf32>
    %39 = arith.addf %33, %38 : vector<256x8xf32>
    %c0_55 = arith.constant 0 : index
    %c0_56 = arith.constant 0 : index
    %c0_57 = arith.constant 0 : index
    %40 = vector.load %arg11[%c0_55, %c0_56, %c0_57] : memref<18x16x8xbf16, #tpu.memory_space<vmem>>, vector<16x16x8xbf16>
    %41 = vector.shape_cast %40 : vector<16x16x8xbf16> to vector<256x8xbf16>
    %c2 = arith.constant 2 : index
    %c0_58 = arith.constant 0 : index
    %c0_59 = arith.constant 0 : index
    %42 = vector.load %arg4[%c2, %c0_58, %c0_59] : memref<9x8x8xbf16, #tpu.memory_space<vmem>>, vector<1x8x8xbf16>
    %43 = vector.shape_cast %42 : vector<1x8x8xbf16> to vector<8x8xbf16>
    %cst_60 = arith.constant dense<0.000000e+00> : vector<256x8xf32>
    %44 = tpu.matmul %41, %43, %cst_60 {dimension_numbers = #tpu.dot_dimension_numbers<[1], [0], [0], [1], [0, 0, 1, 1], [], []>} : vector<256x8xbf16>, vector<8x8xbf16>, vector<256x8xf32> -> vector<256x8xf32>
    %45 = arith.addf %39, %44 : vector<256x8xf32>
    %c1_61 = arith.constant 1 : index
    %c0_62 = arith.constant 0 : index
    %c0_63 = arith.constant 0 : index
    %46 = vector.load %arg9[%c1_61, %c0_62, %c0_63] : memref<18x16x8xbf16, #tpu.memory_space<vmem>>, vector<16x16x8xbf16>
    %47 = vector.shape_cast %46 : vector<16x16x8xbf16> to vector<256x8xbf16>
    %c3 = arith.constant 3 : index
    %c0_64 = arith.constant 0 : index
    %c0_65 = arith.constant 0 : index
    %48 = vector.load %arg4[%c3, %c0_64, %c0_65] : memref<9x8x8xbf16, #tpu.memory_space<vmem>>, vector<1x8x8xbf16>
    %49 = vector.shape_cast %48 : vector<1x8x8xbf16> to vector<8x8xbf16>
    %cst_66 = arith.constant dense<0.000000e+00> : vector<256x8xf32>
    %50 = tpu.matmul %47, %49, %cst_66 {dimension_numbers = #tpu.dot_dimension_numbers<[1], [0], [0], [1], [0, 0, 1, 1], [], []>} : vector<256x8xbf16>, vector<8x8xbf16>, vector<256x8xf32> -> vector<256x8xf32>
    %51 = arith.addf %45, %50 : vector<256x8xf32>
    %c1_67 = arith.constant 1 : index
    %c0_68 = arith.constant 0 : index
    %c0_69 = arith.constant 0 : index
    %52 = vector.load %arg10[%c1_67, %c0_68, %c0_69] : memref<18x16x8xbf16, #tpu.memory_space<vmem>>, vector<16x16x8xbf16>
    %53 = vector.shape_cast %52 : vector<16x16x8xbf16> to vector<256x8xbf16>
    %c4 = arith.constant 4 : index
    %c0_70 = arith.constant 0 : index
    %c0_71 = arith.constant 0 : index
    %54 = vector.load %arg4[%c4, %c0_70, %c0_71] : memref<9x8x8xbf16, #tpu.memory_space<vmem>>, vector<1x8x8xbf16>
    %55 = vector.shape_cast %54 : vector<1x8x8xbf16> to vector<8x8xbf16>
    %cst_72 = arith.constant dense<0.000000e+00> : vector<256x8xf32>
    %56 = tpu.matmul %53, %55, %cst_72 {dimension_numbers = #tpu.dot_dimension_numbers<[1], [0], [0], [1], [0, 0, 1, 1], [], []>} : vector<256x8xbf16>, vector<8x8xbf16>, vector<256x8xf32> -> vector<256x8xf32>
    %57 = arith.addf %51, %56 : vector<256x8xf32>
    %c1_73 = arith.constant 1 : index
    %c0_74 = arith.constant 0 : index
    %c0_75 = arith.constant 0 : index
    %58 = vector.load %arg11[%c1_73, %c0_74, %c0_75] : memref<18x16x8xbf16, #tpu.memory_space<vmem>>, vector<16x16x8xbf16>
    %59 = vector.shape_cast %58 : vector<16x16x8xbf16> to vector<256x8xbf16>
    %c5 = arith.constant 5 : index
    %c0_76 = arith.constant 0 : index
    %c0_77 = arith.constant 0 : index
    %60 = vector.load %arg4[%c5, %c0_76, %c0_77] : memref<9x8x8xbf16, #tpu.memory_space<vmem>>, vector<1x8x8xbf16>
    %61 = vector.shape_cast %60 : vector<1x8x8xbf16> to vector<8x8xbf16>
    %cst_78 = arith.constant dense<0.000000e+00> : vector<256x8xf32>
    %62 = tpu.matmul %59, %61, %cst_78 {dimension_numbers = #tpu.dot_dimension_numbers<[1], [0], [0], [1], [0, 0, 1, 1], [], []>} : vector<256x8xbf16>, vector<8x8xbf16>, vector<256x8xf32> -> vector<256x8xf32>
    %63 = arith.addf %57, %62 : vector<256x8xf32>
    %c2_79 = arith.constant 2 : index
    %c0_80 = arith.constant 0 : index
    %c0_81 = arith.constant 0 : index
    %64 = vector.load %arg9[%c2_79, %c0_80, %c0_81] : memref<18x16x8xbf16, #tpu.memory_space<vmem>>, vector<16x16x8xbf16>
    %65 = vector.shape_cast %64 : vector<16x16x8xbf16> to vector<256x8xbf16>
    %c6 = arith.constant 6 : index
    %c0_82 = arith.constant 0 : index
    %c0_83 = arith.constant 0 : index
    %66 = vector.load %arg4[%c6, %c0_82, %c0_83] : memref<9x8x8xbf16, #tpu.memory_space<vmem>>, vector<1x8x8xbf16>
    %67 = vector.shape_cast %66 : vector<1x8x8xbf16> to vector<8x8xbf16>
    %cst_84 = arith.constant dense<0.000000e+00> : vector<256x8xf32>
    %68 = tpu.matmul %65, %67, %cst_84 {dimension_numbers = #tpu.dot_dimension_numbers<[1], [0], [0], [1], [0, 0, 1, 1], [], []>} : vector<256x8xbf16>, vector<8x8xbf16>, vector<256x8xf32> -> vector<256x8xf32>
    %69 = arith.addf %63, %68 : vector<256x8xf32>
    %c2_85 = arith.constant 2 : index
    %c0_86 = arith.constant 0 : index
    %c0_87 = arith.constant 0 : index
    %70 = vector.load %arg10[%c2_85, %c0_86, %c0_87] : memref<18x16x8xbf16, #tpu.memory_space<vmem>>, vector<16x16x8xbf16>
    %71 = vector.shape_cast %70 : vector<16x16x8xbf16> to vector<256x8xbf16>
    %c7 = arith.constant 7 : index
    %c0_88 = arith.constant 0 : index
    %c0_89 = arith.constant 0 : index
    %72 = vector.load %arg4[%c7, %c0_88, %c0_89] : memref<9x8x8xbf16, #tpu.memory_space<vmem>>, vector<1x8x8xbf16>
    %73 = vector.shape_cast %72 : vector<1x8x8xbf16> to vector<8x8xbf16>
    %cst_90 = arith.constant dense<0.000000e+00> : vector<256x8xf32>
    %74 = tpu.matmul %71, %73, %cst_90 {dimension_numbers = #tpu.dot_dimension_numbers<[1], [0], [0], [1], [0, 0, 1, 1], [], []>} : vector<256x8xbf16>, vector<8x8xbf16>, vector<256x8xf32> -> vector<256x8xf32>
    %75 = arith.addf %69, %74 : vector<256x8xf32>
    %c2_91 = arith.constant 2 : index
    %c0_92 = arith.constant 0 : index
    %c0_93 = arith.constant 0 : index
    %76 = vector.load %arg11[%c2_91, %c0_92, %c0_93] : memref<18x16x8xbf16, #tpu.memory_space<vmem>>, vector<16x16x8xbf16>
    %77 = vector.shape_cast %76 : vector<16x16x8xbf16> to vector<256x8xbf16>
    %c8 = arith.constant 8 : index
    %c0_94 = arith.constant 0 : index
    %c0_95 = arith.constant 0 : index
    %78 = vector.load %arg4[%c8, %c0_94, %c0_95] : memref<9x8x8xbf16, #tpu.memory_space<vmem>>, vector<1x8x8xbf16>
    %79 = vector.shape_cast %78 : vector<1x8x8xbf16> to vector<8x8xbf16>
    %cst_96 = arith.constant dense<0.000000e+00> : vector<256x8xf32>
    %80 = tpu.matmul %77, %79, %cst_96 {dimension_numbers = #tpu.dot_dimension_numbers<[1], [0], [0], [1], [0, 0, 1, 1], [], []>} : vector<256x8xbf16>, vector<8x8xbf16>, vector<256x8xf32> -> vector<256x8xf32>
    %81 = arith.addf %75, %80 : vector<256x8xf32>
    %c0_97 = arith.constant 0 : index
    %c0_98 = arith.constant 0 : index
    %82 = vector.load %arg5[%c0_97, %c0_98] : memref<1x8xf32, #tpu.memory_space<vmem>>, vector<1x8xf32>
    %83 = vector.broadcast %82 : vector<1x8xf32> to vector<256x8xf32>
    %84 = arith.addf %81, %83 : vector<256x8xf32>
    %cst_99 = arith.constant 0.000000e+00 : f32
    %85 = vector.broadcast %cst_99 : f32 to vector<256x8xf32>
    %86 = arith.maximumf %84, %85 : vector<256x8xf32>
    %87 = arith.truncf %86 : vector<256x8xf32> to vector<256x8xbf16>
    %c0_100 = arith.constant 0 : index
    %c0_101 = arith.constant 0 : index
    %88 = vector.load %arg6[%c0_100, %c0_101] : memref<8x32xbf16, #tpu.memory_space<vmem>>, vector<8x32xbf16>
    %cst_102 = arith.constant dense<0.000000e+00> : vector<256x32xf32>
    %89 = tpu.matmul %87, %88, %cst_102 {dimension_numbers = #tpu.dot_dimension_numbers<[1], [0], [0], [1], [0, 0, 1, 1], [], []>} : vector<256x8xbf16>, vector<8x32xbf16>, vector<256x32xf32> -> vector<256x32xf32>
    %c0_103 = arith.constant 0 : index
    %c0_104 = arith.constant 0 : index
    %90 = vector.load %arg7[%c0_103, %c0_104] : memref<1x32xf32, #tpu.memory_space<vmem>>, vector<1x32xf32>
    %91 = vector.broadcast %90 : vector<1x32xf32> to vector<256x32xf32>
    %92 = arith.addf %89, %91 : vector<256x32xf32>
    %c0_105 = arith.constant 0 : index
    %c0_106 = arith.constant 0 : index
    %c0_107 = arith.constant 0 : index
    %c0_108 = arith.constant 0 : index
    %93 = vector.load %arg1[%c0_105, %c0_106, %c0_107, %c0_108] : memref<1x16x16x32xbf16, #tpu.memory_space<vmem>>, vector<1x16x16x32xbf16>
    %94 = vector.shape_cast %93 : vector<1x16x16x32xbf16> to vector<16x16x32xbf16>
    %95 = vector.shape_cast %94 : vector<16x16x32xbf16> to vector<256x32xbf16>
    %96 = arith.extf %95 : vector<256x32xbf16> to vector<256x32xf32>
    %97 = arith.addf %92, %96 : vector<256x32xf32>
    %cst_109 = arith.constant 0.000000e+00 : f32
    %98 = vector.broadcast %cst_109 : f32 to vector<256x32xf32>
    %99 = arith.maximumf %97, %98 : vector<256x32xf32>
    %100 = vector.shape_cast %99 : vector<256x32xf32> to vector<16x16x32xf32>
    %101 = arith.truncf %100 : vector<16x16x32xf32> to vector<16x16x32xbf16>
    %c0_110 = arith.constant 0 : index
    %c0_111 = arith.constant 0 : index
    %c0_112 = arith.constant 0 : index
    %c0_113 = arith.constant 0 : index
    %102 = vector.load %arg8[%c0_110, %c0_111, %c0_112, %c0_113] : memref<1x16x16x32xbf16, #tpu.memory_space<vmem>>, vector<1x16x16x32xbf16>
    %103 = vector.shape_cast %102 : vector<1x16x16x32xbf16> to vector<16x16x32xbf16>
    %104 = vector.shape_cast %101 : vector<16x16x32xbf16> to vector<1x16x16x32xbf16>
    tpu.vector_store %arg8[%c0_110, %c0_111, %c0_112, %c0_113], %104 {strides = array<i32>} : memref<1x16x16x32xbf16, #tpu.memory_space<vmem>>, vector<1x16x16x32xbf16>,
    return
  }
  func.func @transform_0(%arg0: i32) -> (i32, i32, i32, i32) {
    %c0_i32 = arith.constant 0 : i32
    %c0_i32_0 = arith.constant 0 : i32
    %c0_i32_1 = arith.constant 0 : i32
    %c0_i32_2 = arith.constant 0 : i32
    return %arg0, %c0_i32, %c0_i32_0, %c0_i32_1 : i32, i32, i32, i32
  }
  func.func @transform_1(%arg0: i32) -> (i32, i32) {
    %c0_i32 = arith.constant 0 : i32
    %c0_i32_0 = arith.constant 0 : i32
    %c0_i32_1 = arith.constant 0 : i32
    return %c0_i32, %c0_i32_0 : i32, i32
  }
  func.func @transform_2(%arg0: i32) -> (i32, i32) {
    %c0_i32 = arith.constant 0 : i32
    %c0_i32_0 = arith.constant 0 : i32
    %c0_i32_1 = arith.constant 0 : i32
    return %c0_i32, %c0_i32_0 : i32, i32
  }
  func.func @transform_3(%arg0: i32) -> (i32, i32, i32) {
    %c0_i32 = arith.constant 0 : i32
    %c0_i32_0 = arith.constant 0 : i32
    %c0_i32_1 = arith.constant 0 : i32
    %c0_i32_2 = arith.constant 0 : i32
    return %c0_i32, %c0_i32_0, %c0_i32_1 : i32, i32, i32
  }
  func.func @transform_4(%arg0: i32) -> (i32, i32) {
    %c0_i32 = arith.constant 0 : i32
    %c0_i32_0 = arith.constant 0 : i32
    %c0_i32_1 = arith.constant 0 : i32
    return %c0_i32, %c0_i32_0 : i32, i32
  }
  func.func @transform_5(%arg0: i32) -> (i32, i32) {
    %c0_i32 = arith.constant 0 : i32
    %c0_i32_0 = arith.constant 0 : i32
    %c0_i32_1 = arith.constant 0 : i32
    return %c0_i32, %c0_i32_0 : i32, i32
  }
  func.func @transform_6(%arg0: i32) -> (i32, i32) {
    %c0_i32 = arith.constant 0 : i32
    %c0_i32_0 = arith.constant 0 : i32
    %c0_i32_1 = arith.constant 0 : i32
    return %c0_i32, %c0_i32_0 : i32, i32
  }
  func.func @transform_7(%arg0: i32) -> (i32, i32, i32, i32) {
    %c0_i32 = arith.constant 0 : i32
    %c0_i32_0 = arith.constant 0 : i32
    %c0_i32_1 = arith.constant 0 : i32
    %c0_i32_2 = arith.constant 0 : i32
    return %arg0, %c0_i32, %c0_i32_0, %c0_i32_1 : i32, i32, i32, i32
  }
}

</mosaic_0001>

<llo_original>
// kernel: tpu_custom_call.1
$region0: #{tpu_custom_call.1}
  #allocation0 [shape = 'u32[]', space=smem, size = 0x4, offset = 0x4, fixed_abs, tag = 'smem constant byte address 0x4 - core index']
  #allocation1 [shape = 'u32[144,128]{1,0:T(1,128)}', space=vmem, size = 0x12000, scoped, tag = 'internal scratch']
  #allocation2 [shape = 'bf16[18,16,8]{2,1,0:T(16,128)(2,1)}', space=vmem, size = 0x12000, scoped, tag = 'scratch operand']
  #allocation3 [shape = 'bf16[18,16,8]{2,1,0:T(16,128)(2,1)}', space=vmem, size = 0x12000, scoped, tag = 'scratch operand']
  #allocation4 [shape = 'bf16[18,16,8]{2,1,0:T(16,128)(2,1)}', space=vmem, size = 0x12000, scoped, tag = 'scratch operand']
  %s0 = inlined_call_operand.hbm [shape: bf16[2,16,16,32], index: 0, kind: input, shape index: {}]
  %s1 = inlined_call_operand.vmem [shape: bf16[32,8], index: 1, kind: input, shape index: {}]
  %s2 = inlined_call_operand.vmem [shape: f32[1,8], index: 2, kind: input, shape index: {}]
  %s3 = inlined_call_operand.vmem [shape: bf16[9,8,8], index: 3, kind: input, shape index: {}]
  %s4 = inlined_call_operand.vmem [shape: f32[1,8], index: 4, kind: input, shape index: {}]
  %s5 = inlined_call_operand.vmem [shape: bf16[8,32], index: 5, kind: input, shape index: {}]
  %s6 = inlined_call_operand.vmem [shape: f32[1,32], index: 6, kind: input, shape index: {}]
  %s7 = inlined_call_operand.hbm [shape: bf16[2,16,16,32], index: 7, kind: output, shape index: {}]
  %s8 = sld [smem:[#allocation0]]
  $region65: #{tpu_custom_call.1} parent=0
    _
  %s10 = ssub.s32 1, %s8
  %s11 = scalar_select 0, %s10, %s8
  $region1: #{tpu_custom_call.1} parent=0
    #allocation5 [shape = 'u8[131072]{0}', space=vmem, size = 0x20000, scoped, tag = 'input window, operand 0']
    #allocation6 [shape = 's32[2]{0}', space=sflag, size = 0x8, scoped, tag = 'scoped memory for tpu_custom_call.1']
    #allocation7 [shape = 's32[2]{0}', space=sflag, size = 0x8, scoped, tag = 'scoped memory for tpu_custom_call.1']
    #allocation8 [shape = 'u8[131072]{0}', space=vmem, size = 0x20000, scoped, tag = 'output window, operand 0']
    %12 = vsyncpa [#allocation6], 0
    %s13 = scalar_lea.sflag [#allocation6], 1
    %14 = vsyncpa %s13, 0
    %15 = vsyncpa [#allocation7], 0
    %s16 = scalar_lea.sflag [#allocation7], 1
    %17 = vsyncpa %s16, 0
    loop: start=0, step=1, limit=4
    $region2: #{tpu_custom_call.1} parent=1 // loop_pre_header
      _
    $region3: #{tpu_custom_call.1} parent=1 // loop_header
      %s19 = sphi 0, %s23
      %p20 = scmp.ge.s32.totalorder %s19, 4
      %s29 = sphi 0, %s31
      %s32 = sphi 0, %s29
      %s33 = sphi 0, %s32
      %s49 = sphi 0, %s33
      %s53 = sphi 0, %s53
      %s55 = sphi 0, %s53
      %s56 = sphi 0, %s55
      %s70 = sphi 0, %s56
      %s74 = sphi 0, %s74
      %s76 = sphi 0, %s74
      %s77 = sphi 0, %s76
      %s91 = sphi 0, %s77
      %s95 = sphi 0, %s95
      %s97 = sphi 0, %s95
      %s98 = sphi 0, %s97
      %s112 = sphi 0, %s98
      %s116 = sphi 0, %s116
      %s118 = sphi 0, %s116
      %s119 = sphi 0, %s118
      %s133 = sphi 0, %s119
      %s137 = sphi 0, %s137
      %s139 = sphi 0, %s137
      %s140 = sphi 0, %s139
      %s154 = sphi 0, %s140
      %s158 = sphi 0, %s158
      %s160 = sphi 0, %s158
      %s161 = sphi 0, %s160
      %s175 = sphi 0, %s161
      %s181 = sphi 0, %s183
      %s184 = sphi 0, %s181
      %s185 = sphi 0, %s184
      %s201 = sphi 0, %s185
    $region4: #{tpu_custom_call.1} parent=1 // loop_header_branch
      %22 = sbr.rel (%p20) target = $region8
    $region5: #{tpu_custom_call.1} parent=1 // loop_body
      %s24 = ssub.s32 %s19, 1
      %s25 = ssub.s32 %s19, 2
      %s26 = sadd.s32 %s19, 1
      %s27 = ssub.s32 %s19, %s26
      %p28 = scmp.eq.s32.totalorder %s27, 0
      %s30 = sadd.s32 %s29, 1
      %s31 = scalar_select %p28, %s29, %s30
      %p34 = pneg %p28
      %p35 = scmp.eq.s32.totalorder %s19, 1
      %p36 = por %p34, %p35
      %p37 = scmp.ne.s32.totalorder %s29, %s32
      %p38 = scmp.eq.s32.totalorder %s19, 0
      %p39 = por %p37, %p38
      %p40 = scmp.ne.s32.totalorder %s29, %s32
      %p41 = scmp.eq.s32.totalorder %s24, 1
      %p42 = por %p40, %p41
      %p43 = scmp.ne.s32.totalorder %s32, %s33
      %p44 = scmp.eq.s32.totalorder %s24, 0
      %p45 = por %p43, %p44
      %p46 = scmp.ne.s32.totalorder %s32, %s33
      %p47 = scmp.eq.s32.totalorder %s25, 1
      %p48 = por %p46, %p47
      %p50 = scmp.ne.s32.totalorder %s33, %s49
      %p51 = scmp.eq.s32.totalorder %s25, 0
      %p52 = por %p50, %p51
      %s54 = sadd.s32 %s53, 1
      %p57 = scmp.eq.s32.totalorder %s19, 1
      %p58 = scmp.ne.s32.totalorder %s53, %s55
      %p59 = scmp.eq.s32.totalorder %s19, 0
      %p60 = por %p58, %p59
      %p61 = scmp.ne.s32.totalorder %s53, %s55
      %p62 = scmp.eq.s32.totalorder %s24, 1
      %p63 = por %p61, %p62
      %p64 = scmp.ne.s32.totalorder %s55, %s56
      %p65 = scmp.eq.s32.totalorder %s24, 0
      %p66 = por %p64, %p65
      %p67 = scmp.ne.s32.totalorder %s55, %s56
      %p68 = scmp.eq.s32.totalorder %s25, 1
      %p69 = por %p67, %p68
      %p71 = scmp.ne.s32.totalorder %s56, %s70
      %p72 = scmp.eq.s32.totalorder %s25, 0
      %p73 = por %p71, %p72
      %s75 = sadd.s32 %s74, 1
      %p78 = scmp.eq.s32.totalorder %s19, 1
      %p79 = scmp.ne.s32.totalorder %s74, %s76
      %p80 = scmp.eq.s32.totalorder %s19, 0
      %p81 = por %p79, %p80
      %p82 = scmp.ne.s32.totalorder %s74, %s76
      %p83 = scmp.eq.s32.totalorder %s24, 1
      %p84 = por %p82, %p83
      %p85 = scmp.ne.s32.totalorder %s76, %s77
      %p86 = scmp.eq.s32.totalorder %s24, 0
      %p87 = por %p85, %p86
      %p88 = scmp.ne.s32.totalorder %s76, %s77
      %p89 = scmp.eq.s32.totalorder %s25, 1
      %p90 = por %p88, %p89
      %p92 = scmp.ne.s32.totalorder %s77, %s91
      %p93 = scmp.eq.s32.totalorder %s25, 0
      %p94 = por %p92, %p93
      %s96 = sadd.s32 %s95, 1
      %p99 = scmp.eq.s32.totalorder %s19, 1
      %p100 = scmp.ne.s32.totalorder %s95, %s97
      %p101 = scmp.eq.s32.totalorder %s19, 0
      %p102 = por %p100, %p101
      %p103 = scmp.ne.s32.totalorder %s95, %s97
      %p104 = scmp.eq.s32.totalorder %s24, 1
      %p105 = por %p103, %p104
      %p106 = scmp.ne.s32.totalorder %s97, %s98
      %p107 = scmp.eq.s32.totalorder %s24, 0
      %p108 = por %p106, %p107
      %p109 = scmp.ne.s32.totalorder %s97, %s98
      %p110 = scmp.eq.s32.totalorder %s25, 1
      %p111 = por %p109, %p110
      %p113 = scmp.ne.s32.totalorder %s98, %s112
      %p114 = scmp.eq.s32.totalorder %s25, 0
      %p115 = por %p113, %p114
      %s117 = sadd.s32 %s116, 1
      %p120 = scmp.eq.s32.totalorder %s19, 1
      %p121 = scmp.ne.s32.totalorder %s116, %s118
      %p122 = scmp.eq.s32.totalorder %s19, 0
      %p123 = por %p121, %p122
      %p124 = scmp.ne.s32.totalorder %s116, %s118
      %p125 = scmp.eq.s32.totalorder %s24, 1
      %p126 = por %p124, %p125
      %p127 = scmp.ne.s32.totalorder %s118, %s119
      %p128 = scmp.eq.s32.totalorder %s24, 0
      %p129 = por %p127, %p128
      %p130 = scmp.ne.s32.totalorder %s118, %s119
      %p131 = scmp.eq.s32.totalorder %s25, 1
      %p132 = por %p130, %p131
      %p134 = scmp.ne.s32.totalorder %s119, %s133
      %p135 = scmp.eq.s32.totalorder %s25, 0
      %p136 = por %p134, %p135
      %s138 = sadd.s32 %s137, 1
      %p141 = scmp.eq.s32.totalorder %s19, 1
      %p142 = scmp.ne.s32.totalorder %s137, %s139
      %p143 = scmp.eq.s32.totalorder %s19, 0
      %p144 = por %p142, %p143
      %p145 = scmp.ne.s32.totalorder %s137, %s139
      %p146 = scmp.eq.s32.totalorder %s24, 1
      %p147 = por %p145, %p146
      %p148 = scmp.ne.s32.totalorder %s139, %s140
      %p149 = scmp.eq.s32.totalorder %s24, 0
      %p150 = por %p148, %p149
      %p151 = scmp.ne.s32.totalorder %s139, %s140
      %p152 = scmp.eq.s32.totalorder %s25, 1
      %p153 = por %p151, %p152
      %p155 = scmp.ne.s32.totalorder %s140, %s154
      %p156 = scmp.eq.s32.totalorder %s25, 0
      %p157 = por %p155, %p156
      %s159 = sadd.s32 %s158, 1
      %p162 = scmp.eq.s32.totalorder %s19, 1
      %p163 = scmp.ne.s32.totalorder %s158, %s160
      %p164 = scmp.eq.s32.totalorder %s19, 0
      %p165 = por %p163, %p164
      %p166 = scmp.ne.s32.totalorder %s158, %s160
      %p167 = scmp.eq.s32.totalorder %s24, 1
      %p168 = por %p166, %p167
      %p169 = scmp.ne.s32.totalorder %s160, %s161
      %p170 = scmp.eq.s32.totalorder %s24, 0
      %p171 = por %p169, %p170
      %p172 = scmp.ne.s32.totalorder %s160, %s161
      %p173 = scmp.eq.s32.totalorder %s25, 1
      %p174 = por %p172, %p173
      %p176 = scmp.ne.s32.totalorder %s161, %s175
      %p177 = scmp.eq.s32.totalorder %s25, 0
      %p178 = por %p176, %p177
      %s179 = ssub.s32 %s19, %s26
      %p180 = scmp.eq.s32.totalorder %s179, 0
      %s182 = sadd.s32 %s181, 1
      %s183 = scalar_select %p180, %s181, %s182
      %p186 = pneg %p180
      %p187 = scmp.eq.s32.totalorder %s19, 1
      %p188 = por %p186, %p187
      %p189 = scmp.ne.s32.totalorder %s181, %s184
      %p190 = scmp.eq.s32.totalorder %s19, 0
      %p191 = por %p189, %p190
      %p192 = scmp.ne.s32.totalorder %s181, %s184
      %p193 = scmp.eq.s32.totalorder %s24, 1
      %p194 = por %p192, %p193
      %p195 = scmp.ne.s32.totalorder %s184, %s185
      %p196 = scmp.eq.s32.totalorder %s24, 0
      %p197 = por %p195, %p196
      %p198 = scmp.ne.s32.totalorder %s184, %s185
      %p199 = scmp.eq.s32.totalorder %s25, 1
      %p200 = por %p198, %p199
      %p202 = scmp.ne.s32.totalorder %s185, %s201
      %p203 = scmp.eq.s32.totalorder %s25, 0
      %p204 = por %p202, %p203
      %p205 = scmp.le.s32.totalorder 1, %s19
      %p206 = scmp.lt.s32.totalorder %s19, 3
      %p207 = pnand %p205, %p206
      %p208 = pneg %p207
      // Predicated region
      $region9: #{tpu_custom_call.1} parent=5 // pred_check
        _
      $region10: #{tpu_custom_call.1} parent=5 // pred_check_branch
        %210 = sbr.rel (%p207) target = $region12
      $region11: #{tpu_custom_call.1} parent=5 // pred_region
        %s211 = ssub.s32 %s19, 1
        // Predicated region
        $region13: #{tpu_custom_call.1} parent=11 // pred_check
          %p212 = pneg %p66
        $region14: #{tpu_custom_call.1} parent=11 // pred_check_branch
          %214 = sbr.rel (%p212) target = $region16
        $region15: #{tpu_custom_call.1} parent=11 // pred_region
          _
        $region16: #{tpu_custom_call.1} parent=11 // pred_fallthru
          _
        // Predicated region
        $region17: #{tpu_custom_call.1} parent=11 // pred_check
          %p215 = pneg %p87
        $region18: #{tpu_custom_call.1} parent=11 // pred_check_branch
          %217 = sbr.rel (%p215) target = $region20
        $region19: #{tpu_custom_call.1} parent=11 // pred_region
          _
        $region20: #{tpu_custom_call.1} parent=11 // pred_fallthru
          _
        // Predicated region
        $region21: #{tpu_custom_call.1} parent=11 // pred_check
          %p218 = pneg %p108
        $region22: #{tpu_custom_call.1} parent=11 // pred_check_branch
          %220 = sbr.rel (%p218) target = $region24
        $region23: #{tpu_custom_call.1} parent=11 // pred_region
          _
        $region24: #{tpu_custom_call.1} parent=11 // pred_fallthru
          _
        // Predicated region
        $region25: #{tpu_custom_call.1} parent=11 // pred_check
          %p221 = pneg %p129
        $region26: #{tpu_custom_call.1} parent=11 // pred_check_branch
          %223 = sbr.rel (%p221) target = $region28
        $region27: #{tpu_custom_call.1} parent=11 // pred_region
          _
        $region28: #{tpu_custom_call.1} parent=11 // pred_fallthru
          _
        // Predicated region
        $region29: #{tpu_custom_call.1} parent=11 // pred_check
          %p224 = pneg %p150
        $region30: #{tpu_custom_call.1} parent=11 // pred_check_branch
          %226 = sbr.rel (%p224) target = $region32
        $region31: #{tpu_custom_call.1} parent=11 // pred_region
          _
        $region32: #{tpu_custom_call.1} parent=11 // pred_fallthru
          _
        // Predicated region
        $region33: #{tpu_custom_call.1} parent=11 // pred_check
          %p227 = pneg %p171
        $region34: #{tpu_custom_call.1} parent=11 // pred_check_branch
          %229 = sbr.rel (%p227) target = $region36
        $region35: #{tpu_custom_call.1} parent=11 // pred_region
          _
        $region36: #{tpu_custom_call.1} parent=11 // pred_fallthru
          _
      $region12: #{tpu_custom_call.1} parent=5 // pred_fallthru
        _
      %p230 = scmp.lt.s32.totalorder %s19, 2
      // Predicated region
      $region37: #{tpu_custom_call.1} parent=5 // pred_check
        %p231 = pneg %p230
      $region38: #{tpu_custom_call.1} parent=5 // pred_check_branch
        %233 = sbr.rel (%p231) target = $region40
      $region39: #{tpu_custom_call.1} parent=5 // pred_region
        // Predicated region
        $region41: #{tpu_custom_call.1} parent=39 // pred_check
          %p234 = pneg %p39
        $region42: #{tpu_custom_call.1} parent=39 // pred_check_branch
          %236 = sbr.rel (%p234) target = $region44
        $region43: #{tpu_custom_call.1} parent=39 // pred_region
          %s237 = sand.u32 %s29, 1
          %s238 = scalar_lea.sflag [#allocation6], %s237
          %s239 = sand.u32 %s29, 1
          %s240 = smul.addr %s239, 128
          %s241 = scalar_lea.vmem [#allocation5], %s240
          %s243 = ssub.s32 2048, 2048
          %244 = vsyncadd %s238, %s243
          %s245 = smul.addr %s19, 32
          %s246 = smul.addr %s245, 64
          %s247 = scalar_lea.hbm %s0, %s246
          %s248 = sshll.u32 %s241, 4
          %s249 = int_to_ptr.vmem [resolvable:$true] %s248
          %254 = dma.hbm_to_vmem [thread:$0]  %s247, 2048, %s249, %s238, 64, 64, 4
        $region44: #{tpu_custom_call.1} parent=39 // pred_fallthru
          _
      $region40: #{tpu_custom_call.1} parent=5 // pred_fallthru
        _
      %p255 = scmp.le.s32.totalorder 1, %s19
      %p256 = scmp.lt.s32.totalorder %s19, 3
      %p257 = pnand %p255, %p256
      %p258 = pneg %p257
      // Predicated region
      $region45: #{tpu_custom_call.1} parent=5 // pred_check
        _
      $region46: #{tpu_custom_call.1} parent=5 // pred_check_branch
        %260 = sbr.rel (%p257) target = $region48
      $region47: #{tpu_custom_call.1} parent=5 // pred_region
        %s261 = ssub.s32 %s19, 1
        %s262 = sand.u32 %s32, 1
        %s263 = scalar_lea.sflag [#allocation6], %s262
        %s264 = sand.u32 %s32, 1
        %s265 = smul.addr %s264, 128
        %s266 = scalar_lea.vmem [#allocation5], %s265
        // Predicated region
        $region49: #{tpu_custom_call.1} parent=47 // pred_check
          %p267 = pneg %p45
        $region50: #{tpu_custom_call.1} parent=47 // pred_check_branch
          %269 = sbr.rel (%p267) target = $region52
        $region51: #{tpu_custom_call.1} parent=47 // pred_region
          %270 = dma.done %s263, 2048
        $region52: #{tpu_custom_call.1} parent=47 // pred_fallthru
          _
        %s271 = sand.u32 %s32, 1
        %s272 = scalar_lea.sflag [#allocation6], %s271
        %s273 = sand.u32 %s32, 1
        %s274 = smul.addr %s273, 128
        %s275 = scalar_lea.vmem [#allocation5], %s274
        %p276 = pneg %p45
        %p277 = pneg %p42
        %p278 = pneg %p66
        %p279 = pneg %p63
        %p280 = pneg %p87
        %p281 = pneg %p84
        %p282 = pneg %p108
        %p283 = pneg %p105
        %p284 = pneg %p129
        %p285 = pneg %p126
        %p286 = pneg %p150
        %p287 = pneg %p147
        %p288 = pneg %p171
        %p289 = pneg %p168
        %p290 = pneg %p197
        %p291 = pneg %p194
        %s292 = sand.u32 %s184, 1
        %s293 = scalar_lea.sflag [#allocation7], %s292
        %s294 = sand.u32 %s184, 1
        %s295 = smul.addr %s294, 128
        %s296 = scalar_lea.vmem [#allocation8], %s295
        %vm298 = vcmask 64512
        %299 = vst.msk [vmem:[#allocation2] sm:$0xff] %vm298, 0
        %s300 = scalar_lea.vmem [#allocation2], 136
        %301 = vst.msk [vmem:[%s300] sm:$0xff] %vm298, 0
        %302 = vst.msk [vmem:[#allocation3] sm:$0xff] %vm298, 0
        %s303 = scalar_lea.vmem [#allocation3], 136
        %304 = vst.msk [vmem:[%s303] sm:$0xff] %vm298, 0
        %305 = vst.msk [vmem:[#allocation4] sm:$0xff] %vm298, 0
        %s306 = scalar_lea.vmem [#allocation4], 136
        %307 = vst.msk [vmem:[%s306] sm:$0xff] %vm298, 0
        %vm308 = vcmask 57344
        %vm309 = vsmask.f32 256
        %vm310 = vmand %vm308, %vm309
        %v311 = vld [vmem:[#allocation2] sm:$0x1]
        %v312 = vsel %vm310, 0, %v311
        %313 = vst [vmem:[#allocation2] sm:$0x1] %v312
        %v314 = vld [vmem:[#allocation2 + $0x8] sm:$0x1]
        %v315 = vsel %vm310, 0, %v314
        %316 = vst [vmem:[#allocation2 + $0x8] sm:$0x1] %v315
        %v317 = vld [vmem:[#allocation2 + $0x10] sm:$0x1]
        %v318 = vsel %vm310, 0, %v317
        %319 = vst [vmem:[#allocation2 + $0x10] sm:$0x1] %v318
        %v320 = vld [vmem:[#allocation2 + $0x18] sm:$0x1]
        %v321 = vsel %vm310, 0, %v320
        %322 = vst [vmem:[#allocation2 + $0x18] sm:$0x1] %v321
        %v323 = vld [vmem:[#allocation2 + $0x20] sm:$0x1]
        %v324 = vsel %vm310, 0, %v323
        %325 = vst [vmem:[#allocation2 + $0x20] sm:$0x1] %v324
        %v326 = vld [vmem:[#allocation2 + $0x28] sm:$0x1]
        %v327 = vsel %vm310, 0, %v326
        %328 = vst [vmem:[#allocation2 + $0x28] sm:$0x1] %v327
        %v329 = vld [vmem:[#allocation2 + $0x30] sm:$0x1]
        %v330 = vsel %vm310, 0, %v329
        %331 = vst [vmem:[#allocation2 + $0x30] sm:$0x1] %v330
        %v332 = vld [vmem:[#allocation2 + $0x38] sm:$0x1]
        %v333 = vsel %vm310, 0, %v332
        %334 = vst [vmem:[#allocation2 + $0x38] sm:$0x1] %v333
        %v335 = vld [vmem:[#allocation2 + $0x40] sm:$0x1]
        %v336 = vsel %vm310, 0, %v335
        %337 = vst [vmem:[#allocation2 + $0x40] sm:$0x1] %v336
        %v338 = vld [vmem:[#allocation2 + $0x48] sm:$0x1]
        %v339 = vsel %vm310, 0, %v338
        %340 = vst [vmem:[#allocation2 + $0x48] sm:$0x1] %v339
        %v341 = vld [vmem:[#allocation2 + $0x50] sm:$0x1]
        %v342 = vsel %vm310, 0, %v341
        %343 = vst [vmem:[#allocation2 + $0x50] sm:$0x1] %v342
        %v344 = vld [vmem:[#allocation2 + $0x58] sm:$0x1]
        %v345 = vsel %vm310, 0, %v344
        %346 = vst [vmem:[#allocation2 + $0x58] sm:$0x1] %v345
        %v347 = vld [vmem:[#allocation2 + $0x60] sm:$0x1]
        %v348 = vsel %vm310, 0, %v347
        %349 = vst [vmem:[#allocation2 + $0x60] sm:$0x1] %v348
        %v350 = vld [vmem:[#allocation2 + $0x68] sm:$0x1]
        %v351 = vsel %vm310, 0, %v350
        %352 = vst [vmem:[#allocation2 + $0x68] sm:$0x1] %v351
        %v353 = vld [vmem:[#allocation2 + $0x70] sm:$0x1]
        %v354 = vsel %vm310, 0, %v353
        %355 = vst [vmem:[#allocation2 + $0x70] sm:$0x1] %v354
        %v356 = vld [vmem:[#allocation2 + $0x78] sm:$0x1]
        %v357 = vsel %vm310, 0, %v356
        %358 = vst [vmem:[#allocation2 + $0x78] sm:$0x1] %v357
        %v359 = vld [vmem:[#allocation2 + $0x80] sm:$0x1]
        %v360 = vsel %vm310, 0, %v359
        %361 = vst [vmem:[#allocation2 + $0x80] sm:$0x1] %v360
        %v362 = vld [vmem:[#allocation2 + $0x88] sm:$0x1]
        %v363 = vsel %vm310, 0, %v362
        %364 = vst [vmem:[#allocation2 + $0x88] sm:$0x1] %v363
        %vm365 = vcmask 64519
        %vm366 = vsmask.f32 7966
        %vm367 = vmand %vm365, %vm366
        %v368 = vld [vmem:[#allocation4] sm:$0x80]
        %v369 = vsel %vm367, 0, %v368
        %370 = vst [vmem:[#allocation4] sm:$0x80] %v369
        %v371 = vld [vmem:[#allocation4 + $0x8] sm:$0x80]
        %v372 = vsel %vm367, 0, %v371
        %373 = vst [vmem:[#allocation4 + $0x8] sm:$0x80] %v372
        %v374 = vld [vmem:[#allocation4 + $0x10] sm:$0x80]
        %v375 = vsel %vm367, 0, %v374
        %376 = vst [vmem:[#allocation4 + $0x10] sm:$0x80] %v375
        %v377 = vld [vmem:[#allocation4 + $0x18] sm:$0x80]
        %v378 = vsel %vm367, 0, %v377
        %379 = vst [vmem:[#allocation4 + $0x18] sm:$0x80] %v378
        %v380 = vld [vmem:[#allocation4 + $0x20] sm:$0x80]
        %v381 = vsel %vm367, 0, %v380
        %382 = vst [vmem:[#allocation4 + $0x20] sm:$0x80] %v381
        %v383 = vld [vmem:[#allocation4 + $0x28] sm:$0x80]
        %v384 = vsel %vm367, 0, %v383
        %385 = vst [vmem:[#allocation4 + $0x28] sm:$0x80] %v384
        %v386 = vld [vmem:[#allocation4 + $0x30] sm:$0x80]
        %v387 = vsel %vm367, 0, %v386
        %388 = vst [vmem:[#allocation4 + $0x30] sm:$0x80] %v387
        %v389 = vld [vmem:[#allocation4 + $0x38] sm:$0x80]
        %v390 = vsel %vm367, 0, %v389
        %391 = vst [vmem:[#allocation4 + $0x38] sm:$0x80] %v390
        %v392 = vld [vmem:[#allocation4 + $0x40] sm:$0x80]
        %v393 = vsel %vm367, 0, %v392
        %394 = vst [vmem:[#allocation4 + $0x40] sm:$0x80] %v393
        %v395 = vld [vmem:[#allocation4 + $0x48] sm:$0x80]
        %v396 = vsel %vm367, 0, %v395
        %397 = vst [vmem:[#allocation4 + $0x48] sm:$0x80] %v396
        %v398 = vld [vmem:[#allocation4 + $0x50] sm:$0x80]
        %v399 = vsel %vm367, 0, %v398
        %400 = vst [vmem:[#allocation4 + $0x50] sm:$0x80] %v399
        %v401 = vld [vmem:[#allocation4 + $0x58] sm:$0x80]
        %v402 = vsel %vm367, 0, %v401
        %403 = vst [vmem:[#allocation4 + $0x58] sm:$0x80] %v402
        %v404 = vld [vmem:[#allocation4 + $0x60] sm:$0x80]
        %v405 = vsel %vm367, 0, %v404
        %406 = vst [vmem:[#allocation4 + $0x60] sm:$0x80] %v405
        %v407 = vld [vmem:[#allocation4 + $0x68] sm:$0x80]
        %v408 = vsel %vm367, 0, %v407
        %409 = vst [vmem:[#allocation4 + $0x68] sm:$0x80] %v408
        %v410 = vld [vmem:[#allocation4 + $0x70] sm:$0x80]
        %v411 = vsel %vm367, 0, %v410
        %412 = vst [vmem:[#allocation4 + $0x70] sm:$0x80] %v411
        %v413 = vld [vmem:[#allocation4 + $0x78] sm:$0x80]
        %v414 = vsel %vm367, 0, %v413
        %415 = vst [vmem:[#allocation4 + $0x78] sm:$0x80] %v414
        %v416 = vld [vmem:[#allocation4 + $0x80] sm:$0x80]
        %v417 = vsel %vm367, 0, %v416
        %418 = vst [vmem:[#allocation4 + $0x80] sm:$0x80] %v417
        %v419 = vld [vmem:[#allocation4 + $0x88] sm:$0x80]
        %v420 = vsel %vm367, 0, %v419
        %421 = vst [vmem:[#allocation4 + $0x88] sm:$0x80] %v420
        %v422 = vld [vmem:[%s266] sm:$0xf]
        %v423 = vld [vmem:[%s266 + $0x4] sm:$0xf]
        %v424 = vld [vmem:[%s266 + $0x8] sm:$0xf]
        %v425 = vld [vmem:[%s266 + $0xc] sm:$0xf]
        %v426 = vld [vmem:[%s266 + $0x10] sm:$0xf]
        %v427 = vld [vmem:[%s266 + $0x14] sm:$0xf]
        %v428 = vld [vmem:[%s266 + $0x18] sm:$0xf]
        %v429 = vld [vmem:[%s266 + $0x1c] sm:$0xf]
        %v430 = vld [vmem:[%s266 + $0x20] sm:$0xf]
        %v431 = vld [vmem:[%s266 + $0x24] sm:$0xf]
        %v432 = vld [vmem:[%s266 + $0x28] sm:$0xf]
        %v433 = vld [vmem:[%s266 + $0x2c] sm:$0xf]
        %v434 = vld [vmem:[%s266 + $0x30] sm:$0xf]
        %v435 = vld [vmem:[%s266 + $0x34] sm:$0xf]
        %v436 = vld [vmem:[%s266 + $0x38] sm:$0xf]
        %v437 = vld [vmem:[%s266 + $0x3c] sm:$0xf]
        %v438 = vld [vmem:[%s266 + $0x40] sm:$0xf]
        %v439 = vld [vmem:[%s266 + $0x44] sm:$0xf]
        %v440 = vld [vmem:[%s266 + $0x48] sm:$0xf]
        %v441 = vld [vmem:[%s266 + $0x4c] sm:$0xf]
        %v442 = vld [vmem:[%s266 + $0x50] sm:$0xf]
        %v443 = vld [vmem:[%s266 + $0x54] sm:$0xf]
        %v444 = vld [vmem:[%s266 + $0x58] sm:$0xf]
        %v445 = vld [vmem:[%s266 + $0x5c] sm:$0xf]
        %v446 = vld [vmem:[%s266 + $0x60] sm:$0xf]
        %v447 = vld [vmem:[%s266 + $0x64] sm:$0xf]
        %v448 = vld [vmem:[%s266 + $0x68] sm:$0xf]
        %v449 = vld [vmem:[%s266 + $0x6c] sm:$0xf]
        %v450 = vld [vmem:[%s266 + $0x70] sm:$0xf]
        %v451 = vld [vmem:[%s266 + $0x74] sm:$0xf]
        %v452 = vld [vmem:[%s266 + $0x78] sm:$0xf]
        %v453 = vld [vmem:[%s266 + $0x7c] sm:$0xf]
        %v454 = vld [vmem:[%s1] sm:$0xf]
        %v455 = vld [vmem:[%s1 + $0x4] sm:$0xf]
        %v456 = vld [vmem:[%s1 + $0x8] sm:$0xf]
        %v457 = vld [vmem:[%s1 + $0xc] sm:$0xf]
        %v458 = vld [vmem:[%s2] sm:$0x1]
        %v460 = vlaneseq
        %v461 = vshrl.u32 %v460, 7
        %v462 = vsub.s32 0, %v461
        %v463 = vrot.slane %v458, %v462
        %v497 = vunpack.c.l.b16 %v422
        %v498 = vunpack.c.l.b16 %v423
        %v499 = vunpack.c.l.b16 %v424
        %v500 = vunpack.c.l.b16 %v425
        %v501 = vunpack.c.l.b16 %v426
        %v502 = vunpack.c.l.b16 %v427
        %v503 = vunpack.c.l.b16 %v428
        %v504 = vunpack.c.l.b16 %v429
        %v505 = vunpack.c.l.b16 %v430
        %v506 = vunpack.c.l.b16 %v431
        %v507 = vunpack.c.l.b16 %v432
        %v508 = vunpack.c.l.b16 %v433
        %v509 = vunpack.c.l.b16 %v434
        %v510 = vunpack.c.l.b16 %v435
        %v511 = vunpack.c.l.b16 %v436
        %v512 = vunpack.c.l.b16 %v437
        %v513 = vunpack.c.l.b16 %v438
        %v514 = vunpack.c.l.b16 %v439
        %v515 = vunpack.c.l.b16 %v440
        %v516 = vunpack.c.l.b16 %v441
        %v517 = vunpack.c.l.b16 %v442
        %v518 = vunpack.c.l.b16 %v443
        %v519 = vunpack.c.l.b16 %v444
        %v520 = vunpack.c.l.b16 %v445
        %v521 = vunpack.c.l.b16 %v446
        %v522 = vunpack.c.l.b16 %v447
        %v523 = vunpack.c.l.b16 %v448
        %v524 = vunpack.c.l.b16 %v449
        %v525 = vunpack.c.l.b16 %v450
        %v526 = vunpack.c.l.b16 %v451
        %v527 = vunpack.c.l.b16 %v452
        %v528 = vunpack.c.l.b16 %v453
        %v529 = vpack.c.b16 %v498, %v497
        %v530 = vpack.c.b16 %v500, %v499
        %v531 = vpack.c.b16 %v502, %v501
        %v532 = vpack.c.b16 %v504, %v503
        %v533 = vpack.c.b16 %v506, %v505
        %v534 = vpack.c.b16 %v508, %v507
        %v535 = vpack.c.b16 %v510, %v509
        %v536 = vpack.c.b16 %v512, %v511
        %v537 = vpack.c.b16 %v514, %v513
        %v538 = vpack.c.b16 %v516, %v515
        %v539 = vpack.c.b16 %v518, %v517
        %v540 = vpack.c.b16 %v520, %v519
        %v541 = vpack.c.b16 %v522, %v521
        %v542 = vpack.c.b16 %v524, %v523
        %v543 = vpack.c.b16 %v526, %v525
        %v544 = vpack.c.b16 %v528, %v527
        %v549 = vunpack.c.l.b16 %v454
        %v550 = vunpack.c.l.b16 %v455
        %v551 = vunpack.c.l.b16 %v456
        %v552 = vunpack.c.l.b16 %v457
        %v553 = vpack.c.b16 %v550, %v549
        %v554 = vpack.c.b16 %v552, %v551
        %vm557 = vcmask 261120
        %v559 = vsel %vm557, %v529, 0
        %v562 = vsel %vm557, %v530, 0
        %v565 = vsel %vm557, %v531, 0
        %v568 = vsel %vm557, %v532, 0
        %v571 = vsel %vm557, %v533, 0
        %v574 = vsel %vm557, %v534, 0
        %v577 = vsel %vm557, %v535, 0
        %v580 = vsel %vm557, %v536, 0
        %v583 = vsel %vm557, %v537, 0
        %v586 = vsel %vm557, %v538, 0
        %v589 = vsel %vm557, %v539, 0
        %v592 = vsel %vm557, %v540, 0
        %v595 = vsel %vm557, %v541, 0
        %v598 = vsel %vm557, %v542, 0
        %v601 = vsel %vm557, %v543, 0
        %v604 = vsel %vm557, %v544, 0
        %606 = vmatprep.subr.bf16.mxu0 0
        %607 = vmatpush1.bf16.msra.mxu0 %v553
        %608 = vmatprep.subr.bf16.mxu0 0
        %609 = vmatpush1.bf16.msra.mxu0 %v554
        %610 = vmatprep.subr.bf16.mxu0 0
        %611 = vmatpush1.bf16.msra.mxu0 0
        %612 = vmatprep.subr.bf16.mxu0 0
        %613 = vmatpush1.bf16.msra.mxu0 0
        %614 = vmatprep.subr.bf16.mxu0 0
        %615 = vmatpush1.bf16.msra.mxu0 0
        %616 = vmatprep.subr.bf16.mxu0 0
        %617 = vmatpush1.bf16.msra.mxu0 0
        %618 = vmatprep.subr.bf16.mxu0 0
        %619 = vmatpush1.bf16.msra.mxu0 0
        %620 = vmatprep.subr.bf16.mxu0 0
        %621 = vmatpush1.bf16.msra.mxu0 0
        %622 = vmatprep.subr.bf16.mxu0 0
        %623 = vmatpush1.bf16.msra.mxu0 0
        %624 = vmatprep.subr.bf16.mxu0 0
        %625 = vmatpush1.bf16.msra.mxu0 0
        %626 = vmatprep.subr.bf16.mxu0 0
        %627 = vmatpush1.bf16.msra.mxu0 0
        %628 = vmatprep.subr.bf16.mxu0 0
        %629 = vmatpush1.bf16.msra.mxu0 0
        %630 = vmatprep.subr.bf16.mxu0 0
        %631 = vmatpush1.bf16.msra.mxu0 0
        %632 = vmatprep.subr.bf16.mxu0 0
        %633 = vmatpush1.bf16.msra.mxu0 0
        %634 = vmatprep.subr.bf16.mxu0 0
        %635 = vmatpush1.bf16.msra.mxu0 0
        %636 = vmatprep.subr.bf16.mxu0 0
        %637 = vmatpush1.bf16.msra.mxu0 0
        %638 = vmatprep.mubr.bf16.mxu0 0
        %639 = vmatmul.mubr.bf16.gmra.mrb[0].mxu0 %v559
        %v640 = vpop.f32.mrb[0].mxu0
        %v641 = vadd.f32 %v463, %v640
        %v642 = vpop.f32.mrb[0].mxu0
        %v643 = vpop.f32.mrb[0].mxu0
        %v644 = vadd.f32 %v463, %v643
        %v645 = vpop.f32.mrb[0].mxu0
        %646 = vmatprep.mubr.bf16.mxu0 0
        %647 = vmatmul.mubr.bf16.gmra.mrb[0].mxu0 %v562
        %v648 = vpop.f32.mrb[0].mxu0
        %v649 = vadd.f32 %v463, %v648
        %v650 = vpop.f32.mrb[0].mxu0
        %v651 = vpop.f32.mrb[0].mxu0
        %v652 = vadd.f32 %v463, %v651
        %v653 = vpop.f32.mrb[0].mxu0
        %654 = vmatprep.mubr.bf16.mxu0 0
        %655 = vmatmul.mubr.bf16.gmra.mrb[0].mxu0 %v565
        %v656 = vpop.f32.mrb[0].mxu0
        %v657 = vadd.f32 %v463, %v656
        %v658 = vpop.f32.mrb[0].mxu0
        %v659 = vpop.f32.mrb[0].mxu0
        %v660 = vadd.f32 %v463, %v659
        %v661 = vpop.f32.mrb[0].mxu0
        %662 = vmatprep.mubr.bf16.mxu0 0
        %663 = vmatmul.mubr.bf16.gmra.mrb[0].mxu0 %v568
        %v664 = vpop.f32.mrb[0].mxu0
        %v665 = vadd.f32 %v463, %v664
        %v666 = vpop.f32.mrb[0].mxu0
        %v667 = vpop.f32.mrb[0].mxu0
        %v668 = vadd.f32 %v463, %v667
        %v669 = vpop.f32.mrb[0].mxu0
        %670 = vmatprep.mubr.bf16.mxu0 0
        %671 = vmatmul.mubr.bf16.gmra.mrb[0].mxu0 %v571
        %v672 = vpop.f32.mrb[0].mxu0
        %v673 = vadd.f32 %v463, %v672
        %v674 = vpop.f32.mrb[0].mxu0
        %v675 = vpop.f32.mrb[0].mxu0
        %v676 = vadd.f32 %v463, %v675
        %v677 = vpop.f32.mrb[0].mxu0
        %678 = vmatprep.mubr.bf16.mxu0 0
        %679 = vmatmul.mubr.bf16.gmra.mrb[0].mxu0 %v574
        %v680 = vpop.f32.mrb[0].mxu0
        %v681 = vadd.f32 %v463, %v680
        %v682 = vpop.f32.mrb[0].mxu0
        %v683 = vpop.f32.mrb[0].mxu0
        %v684 = vadd.f32 %v463, %v683
        %v685 = vpop.f32.mrb[0].mxu0
        %686 = vmatprep.mubr.bf16.mxu0 0
        %687 = vmatmul.mubr.bf16.gmra.mrb[0].mxu0 %v577
        %v688 = vpop.f32.mrb[0].mxu0
        %v689 = vadd.f32 %v463, %v688
        %v690 = vpop.f32.mrb[0].mxu0
        %v691 = vpop.f32.mrb[0].mxu0
        %v692 = vadd.f32 %v463, %v691
        %v693 = vpop.f32.mrb[0].mxu0
        %694 = vmatprep.mubr.bf16.mxu0 0
        %695 = vmatmul.mubr.bf16.gmra.mrb[0].mxu0 %v580
        %v696 = vpop.f32.mrb[0].mxu0
        %v697 = vadd.f32 %v463, %v696
        %v698 = vpop.f32.mrb[0].mxu0
        %v699 = vpop.f32.mrb[0].mxu0
        %v700 = vadd.f32 %v463, %v699
        %v701 = vpop.f32.mrb[0].mxu0
        %702 = vmatprep.mubr.bf16.mxu0 0
        %703 = vmatmul.mubr.bf16.gmra.mrb[0].mxu0 %v583
        %v704 = vpop.f32.mrb[0].mxu0
        %v705 = vadd.f32 %v463, %v704
        %v706 = vpop.f32.mrb[0].mxu0
        %v707 = vpop.f32.mrb[0].mxu0
        %v708 = vadd.f32 %v463, %v707
        %v709 = vpop.f32.mrb[0].mxu0
        %710 = vmatprep.mubr.bf16.mxu0 0
        %711 = vmatmul.mubr.bf16.gmra.mrb[0].mxu0 %v586
        %v712 = vpop.f32.mrb[0].mxu0
        %v713 = vadd.f32 %v463, %v712
        %v714 = vpop.f32.mrb[0].mxu0
        %v715 = vpop.f32.mrb[0].mxu0
        %v716 = vadd.f32 %v463, %v715
        %v717 = vpop.f32.mrb[0].mxu0
        %718 = vmatprep.mubr.bf16.mxu0 0
        %719 = vmatmul.mubr.bf16.gmra.mrb[0].mxu0 %v589
        %v720 = vpop.f32.mrb[0].mxu0
        %v721 = vadd.f32 %v463, %v720
        %v722 = vpop.f32.mrb[0].mxu0
        %v723 = vpop.f32.mrb[0].mxu0
        %v724 = vadd.f32 %v463, %v723
        %v725 = vpop.f32.mrb[0].mxu0
        %726 = vmatprep.mubr.bf16.mxu0 0
        %727 = vmatmul.mubr.bf16.gmra.mrb[0].mxu0 %v592
        %v728 = vpop.f32.mrb[0].mxu0
        %v729 = vadd.f32 %v463, %v728
        %v730 = vpop.f32.mrb[0].mxu0
        %v731 = vpop.f32.mrb[0].mxu0
        %v732 = vadd.f32 %v463, %v731
        %v733 = vpop.f32.mrb[0].mxu0
        %734 = vmatprep.mubr.bf16.mxu0 0
        %735 = vmatmul.mubr.bf16.gmra.mrb[0].mxu0 %v595
        %v736 = vpop.f32.mrb[0].mxu0
        %v737 = vadd.f32 %v463, %v736
        %v738 = vpop.f32.mrb[0].mxu0
        %v739 = vpop.f32.mrb[0].mxu0
        %v740 = vadd.f32 %v463, %v739
        %v741 = vpop.f32.mrb[0].mxu0
        %742 = vmatprep.mubr.bf16.mxu0 0
        %743 = vmatmul.mubr.bf16.gmra.mrb[0].mxu0 %v598
        %v744 = vpop.f32.mrb[0].mxu0
        %v745 = vadd.f32 %v463, %v744
        %v746 = vpop.f32.mrb[0].mxu0
        %v747 = vpop.f32.mrb[0].mxu0
        %v748 = vadd.f32 %v463, %v747
        %v749 = vpop.f32.mrb[0].mxu0
        %750 = vmatprep.mubr.bf16.mxu0 0
        %751 = vmatmul.mubr.bf16.gmra.mrb[0].mxu0 %v601
        %v752 = vpop.f32.mrb[0].mxu0
        %v753 = vadd.f32 %v463, %v752
        %v754 = vpop.f32.mrb[0].mxu0
        %v755 = vpop.f32.mrb[0].mxu0
        %v756 = vadd.f32 %v463, %v755
        %v757 = vpop.f32.mrb[0].mxu0
        %758 = vmatprep.mubr.bf16.mxu0 0
        %759 = vmatmul.mubr.bf16.gmra.mrb[0].mxu0 %v604
        %v760 = vpop.f32.mrb[0].mxu0
        %v761 = vadd.f32 %v463, %v760
        %v762 = vpop.f32.mrb[0].mxu0
        %v763 = vpop.f32.mrb[0].mxu0
        %v764 = vadd.f32 %v463, %v763
        %v765 = vpop.f32.mrb[0].mxu0
        %766 = vdwg.mxu0
        %v767 = vmax.f32 %v641, 0.0
        %v768 = vmax.f32 %v644, 0.0
        %v769 = vmax.f32 %v649, 0.0
        %v770 = vmax.f32 %v652, 0.0
        %v771 = vmax.f32 %v657, 0.0
        %v772 = vmax.f32 %v660, 0.0
        %v773 = vmax.f32 %v665, 0.0
        %v774 = vmax.f32 %v668, 0.0
        %v775 = vmax.f32 %v673, 0.0
        %v776 = vmax.f32 %v676, 0.0
        %v777 = vmax.f32 %v681, 0.0
        %v778 = vmax.f32 %v684, 0.0
        %v779 = vmax.f32 %v689, 0.0
        %v780 = vmax.f32 %v692, 0.0
        %v781 = vmax.f32 %v697, 0.0
        %v782 = vmax.f32 %v700, 0.0
        %v783 = vmax.f32 %v705, 0.0
        %v784 = vmax.f32 %v708, 0.0
        %v785 = vmax.f32 %v713, 0.0
        %v786 = vmax.f32 %v716, 0.0
        %v787 = vmax.f32 %v721, 0.0
        %v788 = vmax.f32 %v724, 0.0
        %v789 = vmax.f32 %v729, 0.0
        %v790 = vmax.f32 %v732, 0.0
        %v791 = vmax.f32 %v737, 0.0
        %v792 = vmax.f32 %v740, 0.0
        %v793 = vmax.f32 %v745, 0.0
        %v794 = vmax.f32 %v748, 0.0
        %v795 = vmax.f32 %v753, 0.0
        %v796 = vmax.f32 %v756, 0.0
        %v797 = vmax.f32 %v761, 0.0
        %v798 = vmax.f32 %v764, 0.0
        %v799 = vpack.c.bf16 %v768, %v767
        %v800 = vpack.c.bf16 %v770, %v769
        %v801 = vpack.c.bf16 %v772, %v771
        %v802 = vpack.c.bf16 %v774, %v773
        %v803 = vpack.c.bf16 %v776, %v775
        %v804 = vpack.c.bf16 %v778, %v777
        %v805 = vpack.c.bf16 %v780, %v779
        %v806 = vpack.c.bf16 %v782, %v781
        %v807 = vpack.c.bf16 %v784, %v783
        %v808 = vpack.c.bf16 %v786, %v785
        %v809 = vpack.c.bf16 %v788, %v787
        %v810 = vpack.c.bf16 %v790, %v789
        %v811 = vpack.c.bf16 %v792, %v791
        %v812 = vpack.c.bf16 %v794, %v793
        %v813 = vpack.c.bf16 %v796, %v795
        %v814 = vpack.c.bf16 %v798, %v797
        %s815 = scalar_lea.vmem [#allocation3], 8
        %816 = vst.msk [vmem:[%s815] sm:$0xff] %vm298, %v799
        %817 = vst.msk [vmem:[%s815 + $0x8] sm:$0xff] %vm298, %v800
        %818 = vst.msk [vmem:[%s815 + $0x10] sm:$0xff] %vm298, %v801
        %819 = vst.msk [vmem:[%s815 + $0x18] sm:$0xff] %vm298, %v802
        %820 = vst.msk [vmem:[%s815 + $0x20] sm:$0xff] %vm298, %v803
        %821 = vst.msk [vmem:[%s815 + $0x28] sm:$0xff] %vm298, %v804
        %822 = vst.msk [vmem:[%s815 + $0x30] sm:$0xff] %vm298, %v805
        %823 = vst.msk [vmem:[%s815 + $0x38] sm:$0xff] %vm298, %v806
        %824 = vst.msk [vmem:[%s815 + $0x40] sm:$0xff] %vm298, %v807
        %825 = vst.msk [vmem:[%s815 + $0x48] sm:$0xff] %vm298, %v808
        %826 = vst.msk [vmem:[%s815 + $0x50] sm:$0xff] %vm298, %v809
        %827 = vst.msk [vmem:[%s815 + $0x58] sm:$0xff] %vm298, %v810
        %828 = vst.msk [vmem:[%s815 + $0x60] sm:$0xff] %vm298, %v811
        %829 = vst.msk [vmem:[%s815 + $0x68] sm:$0xff] %vm298, %v812
        %830 = vst.msk [vmem:[%s815 + $0x70] sm:$0xff] %vm298, %v813
        %831 = vst.msk [vmem:[%s815 + $0x78] sm:$0xff] %vm298, %v814
        %v833 = vshrl.u32 %v799, 16
        %v835 = vrot.slane %v833, 7
        %v836 = vshll.u32 %v799, 16
        %v838 = vor.u32 %v835, %v836
        %v840 = vshrl.u32 %v800, 16
        %v842 = vrot.slane %v840, 7
        %v843 = vshll.u32 %v800, 16
        %v845 = vor.u32 %v842, %v843
        %v847 = vshrl.u32 %v801, 16
        %v849 = vrot.slane %v847, 7
        %v850 = vshll.u32 %v801, 16
        %v852 = vor.u32 %v849, %v850
        %v854 = vshrl.u32 %v802, 16
        %v856 = vrot.slane %v854, 7
        %v857 = vshll.u32 %v802, 16
        %v859 = vor.u32 %v856, %v857
        %v861 = vshrl.u32 %v803, 16
        %v863 = vrot.slane %v861, 7
        %v864 = vshll.u32 %v803, 16
        %v866 = vor.u32 %v863, %v864
        %v868 = vshrl.u32 %v804, 16
        %v870 = vrot.slane %v868, 7
        %v871 = vshll.u32 %v804, 16
        %v873 = vor.u32 %v870, %v871
        %v875 = vshrl.u32 %v805, 16
        %v877 = vrot.slane %v875, 7
        %v878 = vshll.u32 %v805, 16
        %v880 = vor.u32 %v877, %v878
        %v882 = vshrl.u32 %v806, 16
        %v884 = vrot.slane %v882, 7
        %v885 = vshll.u32 %v806, 16
        %v887 = vor.u32 %v884, %v885
        %v889 = vshrl.u32 %v807, 16
        %v891 = vrot.slane %v889, 7
        %v892 = vshll.u32 %v807, 16
        %v894 = vor.u32 %v891, %v892
        %v896 = vshrl.u32 %v808, 16
        %v898 = vrot.slane %v896, 7
        %v899 = vshll.u32 %v808, 16
        %v901 = vor.u32 %v898, %v899
        %v903 = vshrl.u32 %v809, 16
        %v905 = vrot.slane %v903, 7
        %v906 = vshll.u32 %v809, 16
        %v908 = vor.u32 %v905, %v906
        %v910 = vshrl.u32 %v810, 16
        %v912 = vrot.slane %v910, 7
        %v913 = vshll.u32 %v810, 16
        %v915 = vor.u32 %v912, %v913
        %v917 = vshrl.u32 %v811, 16
        %v919 = vrot.slane %v917, 7
        %v920 = vshll.u32 %v811, 16
        %v922 = vor.u32 %v919, %v920
        %v924 = vshrl.u32 %v812, 16
        %v926 = vrot.slane %v924, 7
        %v927 = vshll.u32 %v812, 16
        %v929 = vor.u32 %v926, %v927
        %v931 = vshrl.u32 %v813, 16
        %v933 = vrot.slane %v931, 7
        %v934 = vshll.u32 %v813, 16
        %v936 = vor.u32 %v933, %v934
        %v938 = vshrl.u32 %v814, 16
        %v940 = vrot.slane %v938, 7
        %v941 = vshll.u32 %v814, 16
        %v943 = vor.u32 %v940, %v941
        %s960 = scalar_lea.vmem [#allocation2], 8
        %vm961 = vcmask 64512
        %vm962 = vsmask.f32 7938
        %vm963 = vmand %vm961, %vm962
        %v964 = vld [vmem:[%s960] sm:$0xff]
        %v965 = vsel %vm963, %v838, %v964
        %966 = vst [vmem:[%s960] sm:$0xff] %v965
        %v967 = vld [vmem:[%s960 + $0x8] sm:$0xff]
        %v968 = vsel %vm963, %v845, %v967
        %969 = vst [vmem:[%s960 + $0x8] sm:$0xff] %v968
        %v970 = vld [vmem:[%s960 + $0x10] sm:$0xff]
        %v971 = vsel %vm963, %v852, %v970
        %972 = vst [vmem:[%s960 + $0x10] sm:$0xff] %v971
        %v973 = vld [vmem:[%s960 + $0x18] sm:$0xff]
        %v974 = vsel %vm963, %v859, %v973
        %975 = vst [vmem:[%s960 + $0x18] sm:$0xff] %v974
        %v976 = vld [vmem:[%s960 + $0x20] sm:$0xff]
        %v977 = vsel %vm963, %v866, %v976
        %978 = vst [vmem:[%s960 + $0x20] sm:$0xff] %v977
        %v979 = vld [vmem:[%s960 + $0x28] sm:$0xff]
        %v980 = vsel %vm963, %v873, %v979
        %981 = vst [vmem:[%s960 + $0x28] sm:$0xff] %v980
        %v982 = vld [vmem:[%s960 + $0x30] sm:$0xff]
        %v983 = vsel %vm963, %v880, %v982
        %984 = vst [vmem:[%s960 + $0x30] sm:$0xff] %v983
        %v985 = vld [vmem:[%s960 + $0x38] sm:$0xff]
        %v986 = vsel %vm963, %v887, %v985
        %987 = vst [vmem:[%s960 + $0x38] sm:$0xff] %v986
        %v988 = vld [vmem:[%s960 + $0x40] sm:$0xff]
        %v989 = vsel %vm963, %v894, %v988
        %990 = vst [vmem:[%s960 + $0x40] sm:$0xff] %v989
        %v991 = vld [vmem:[%s960 + $0x48] sm:$0xff]
        %v992 = vsel %vm963, %v901, %v991
        %993 = vst [vmem:[%s960 + $0x48] sm:$0xff] %v992
        %v994 = vld [vmem:[%s960 + $0x50] sm:$0xff]
        %v995 = vsel %vm963, %v908, %v994
        %996 = vst [vmem:[%s960 + $0x50] sm:$0xff] %v995
        %v997 = vld [vmem:[%s960 + $0x58] sm:$0xff]
        %v998 = vsel %vm963, %v915, %v997
        %999 = vst [vmem:[%s960 + $0x58] sm:$0xff] %v998
        %v1000 = vld [vmem:[%s960 + $0x60] sm:$0xff]
        %v1001 = vsel %vm963, %v922, %v1000
        %1002 = vst [vmem:[%s960 + $0x60] sm:$0xff] %v1001
        %v1003 = vld [vmem:[%s960 + $0x68] sm:$0xff]
        %v1004 = vsel %vm963, %v929, %v1003
        %1005 = vst [vmem:[%s960 + $0x68] sm:$0xff] %v1004
        %v1006 = vld [vmem:[%s960 + $0x70] sm:$0xff]
        %v1007 = vsel %vm963, %v936, %v1006
        %1008 = vst [vmem:[%s960 + $0x70] sm:$0xff] %v1007
        %v1009 = vld [vmem:[%s960 + $0x78] sm:$0xff]
        %v1010 = vsel %vm963, %v943, %v1009
        %1011 = vst [vmem:[%s960 + $0x78] sm:$0xff] %v1010
        %v1012 = vrot.slane %v836, 1
        %v1013 = vor.u32 %v833, %v1012
        %v1014 = vrot.slane %v843, 1
        %v1015 = vor.u32 %v840, %v1014
        %v1016 = vrot.slane %v850, 1
        %v1017 = vor.u32 %v847, %v1016
        %v1018 = vrot.slane %v857, 1
        %v1019 = vor.u32 %v854, %v1018
        %v1020 = vrot.slane %v864, 1
        %v1021 = vor.u32 %v861, %v1020
        %v1022 = vrot.slane %v871, 1
        %v1023 = vor.u32 %v868, %v1022
        %v1024 = vrot.slane %v878, 1
        %v1025 = vor.u32 %v875, %v1024
        %v1026 = vrot.slane %v885, 1
        %v1027 = vor.u32 %v882, %v1026
        %v1028 = vrot.slane %v892, 1
        %v1029 = vor.u32 %v889, %v1028
        %v1030 = vrot.slane %v899, 1
        %v1031 = vor.u32 %v896, %v1030
        %v1032 = vrot.slane %v906, 1
        %v1033 = vor.u32 %v903, %v1032
        %v1034 = vrot.slane %v913, 1
        %v1035 = vor.u32 %v910, %v1034
        %v1036 = vrot.slane %v920, 1
        %v1037 = vor.u32 %v917, %v1036
        %v1038 = vrot.slane %v927, 1
        %v1039 = vor.u32 %v924, %v1038
        %v1040 = vrot.slane %v934, 1
        %v1041 = vor.u32 %v931, %v1040
        %v1042 = vrot.slane %v941, 1
        %v1043 = vor.u32 %v938, %v1042
        %s1060 = scalar_lea.vmem [#allocation4], 8
        %vm1061 = vsmask.f32 7424
        %vm1062 = vmand %vm961, %vm1061
        %v1063 = vld [vmem:[%s1060] sm:$0xff]
        %v1064 = vsel %vm1062, %v1013, %v1063
        %1065 = vst [vmem:[%s1060] sm:$0xff] %v1064
        %v1066 = vld [vmem:[%s1060 + $0x8] sm:$0xff]
        %v1067 = vsel %vm1062, %v1015, %v1066
        %1068 = vst [vmem:[%s1060 + $0x8] sm:$0xff] %v1067
        %v1069 = vld [vmem:[%s1060 + $0x10] sm:$0xff]
        %v1070 = vsel %vm1062, %v1017, %v1069
        %1071 = vst [vmem:[%s1060 + $0x10] sm:$0xff] %v1070
        %v1072 = vld [vmem:[%s1060 + $0x18] sm:$0xff]
        %v1073 = vsel %vm1062, %v1019, %v1072
        %1074 = vst [vmem:[%s1060 + $0x18] sm:$0xff] %v1073
        %v1075 = vld [vmem:[%s1060 + $0x20] sm:$0xff]
        %v1076 = vsel %vm1062, %v1021, %v1075
        %1077 = vst [vmem:[%s1060 + $0x20] sm:$0xff] %v1076
        %v1078 = vld [vmem:[%s1060 + $0x28] sm:$0xff]
        %v1079 = vsel %vm1062, %v1023, %v1078
        %1080 = vst [vmem:[%s1060 + $0x28] sm:$0xff] %v1079
        %v1081 = vld [vmem:[%s1060 + $0x30] sm:$0xff]
        %v1082 = vsel %vm1062, %v1025, %v1081
        %1083 = vst [vmem:[%s1060 + $0x30] sm:$0xff] %v1082
        %v1084 = vld [vmem:[%s1060 + $0x38] sm:$0xff]
        %v1085 = vsel %vm1062, %v1027, %v1084
        %1086 = vst [vmem:[%s1060 + $0x38] sm:$0xff] %v1085
        %v1087 = vld [vmem:[%s1060 + $0x40] sm:$0xff]
        %v1088 = vsel %vm1062, %v1029, %v1087
        %1089 = vst [vmem:[%s1060 + $0x40] sm:$0xff] %v1088
        %v1090 = vld [vmem:[%s1060 + $0x48] sm:$0xff]
        %v1091 = vsel %vm1062, %v1031, %v1090
        %1092 = vst [vmem:[%s1060 + $0x48] sm:$0xff] %v1091
        %v1093 = vld [vmem:[%s1060 + $0x50] sm:$0xff]
        %v1094 = vsel %vm1062, %v1033, %v1093
        %1095 = vst [vmem:[%s1060 + $0x50] sm:$0xff] %v1094
        %v1096 = vld [vmem:[%s1060 + $0x58] sm:$0xff]
        %v1097 = vsel %vm1062, %v1035, %v1096
        %1098 = vst [vmem:[%s1060 + $0x58] sm:$0xff] %v1097
        %v1099 = vld [vmem:[%s1060 + $0x60] sm:$0xff]
        %v1100 = vsel %vm1062, %v1037, %v1099
        %1101 = vst [vmem:[%s1060 + $0x60] sm:$0xff] %v1100
        %v1102 = vld [vmem:[%s1060 + $0x68] sm:$0xff]
        %v1103 = vsel %vm1062, %v1039, %v1102
        %1104 = vst [vmem:[%s1060 + $0x68] sm:$0xff] %v1103
        %v1105 = vld [vmem:[%s1060 + $0x70] sm:$0xff]
        %v1106 = vsel %vm1062, %v1041, %v1105
        %1107 = vst [vmem:[%s1060 + $0x70] sm:$0xff] %v1106
        %v1108 = vld [vmem:[%s1060 + $0x78] sm:$0xff]
        %v1109 = vsel %vm1062, %v1043, %v1108
        %1110 = vst [vmem:[%s1060 + $0x78] sm:$0xff] %v1109
        %v1111 = vld [vmem:[#allocation2] sm:$0xff]
        %v1112 = vld [vmem:[#allocation2 + $0x8] sm:$0xff]
        %v1113 = vld [vmem:[#allocation2 + $0x10] sm:$0xff]
        %v1114 = vld [vmem:[#allocation2 + $0x18] sm:$0xff]
        %v1115 = vld [vmem:[#allocation2 + $0x20] sm:$0xff]
        %v1116 = vld [vmem:[#allocation2 + $0x28] sm:$0xff]
        %v1117 = vld [vmem:[#allocation2 + $0x30] sm:$0xff]
        %v1118 = vld [vmem:[#allocation2 + $0x38] sm:$0xff]
        %v1119 = vld [vmem:[#allocation2 + $0x40] sm:$0xff]
        %v1120 = vld [vmem:[#allocation2 + $0x48] sm:$0xff]
        %v1121 = vld [vmem:[#allocation2 + $0x50] sm:$0xff]
        %v1122 = vld [vmem:[#allocation2 + $0x58] sm:$0xff]
        %v1123 = vld [vmem:[#allocation2 + $0x60] sm:$0xff]
        %v1124 = vld [vmem:[#allocation2 + $0x68] sm:$0xff]
        %v1125 = vld [vmem:[#allocation2 + $0x70] sm:$0xff]
        %v1126 = vld [vmem:[#allocation2 + $0x78] sm:$0xff]
        %v1127 = vld [vmem:[%s3] sm:$0xf]
        %v1128 = vld [vmem:[#allocation3] sm:$0xff]
        %v1129 = vld [vmem:[#allocation3 + $0x8] sm:$0xff]
        %v1130 = vld [vmem:[#allocation3 + $0x10] sm:$0xff]
        %v1131 = vld [vmem:[#allocation3 + $0x18] sm:$0xff]
        %v1132 = vld [vmem:[#allocation3 + $0x20] sm:$0xff]
        %v1133 = vld [vmem:[#allocation3 + $0x28] sm:$0xff]
        %v1134 = vld [vmem:[#allocation3 + $0x30] sm:$0xff]
        %v1135 = vld [vmem:[#allocation3 + $0x38] sm:$0xff]
        %v1136 = vld [vmem:[#allocation3 + $0x40] sm:$0xff]
        %v1137 = vld [vmem:[#allocation3 + $0x48] sm:$0xff]
        %v1138 = vld [vmem:[#allocation3 + $0x50] sm:$0xff]
        %v1139 = vld [vmem:[#allocation3 + $0x58] sm:$0xff]
        %v1140 = vld [vmem:[#allocation3 + $0x60] sm:$0xff]
        %v1141 = vld [vmem:[#allocation3 + $0x68] sm:$0xff]
        %v1142 = vld [vmem:[#allocation3 + $0x70] sm:$0xff]
        %v1143 = vld [vmem:[#allocation3 + $0x78] sm:$0xff]
        %s1144 = scalar_lea.vmem %s3, 4
        %v1145 = vld [vmem:[%s1144] sm:$0xf]
        %v1147 = vsel %vm298, %v1128, 0
        %v1150 = vsel %vm298, %v1129, 0
        %v1153 = vsel %vm298, %v1130, 0
        %v1156 = vsel %vm298, %v1131, 0
        %v1159 = vsel %vm298, %v1132, 0
        %v1162 = vsel %vm298, %v1133, 0
        %v1165 = vsel %vm298, %v1134, 0
        %v1168 = vsel %vm298, %v1135, 0
        %v1171 = vsel %vm298, %v1136, 0
        %v1174 = vsel %vm298, %v1137, 0
        %v1177 = vsel %vm298, %v1138, 0
        %v1180 = vsel %vm298, %v1139, 0
        %v1183 = vsel %vm298, %v1140, 0
        %v1186 = vsel %vm298, %v1141, 0
        %v1189 = vsel %vm298, %v1142, 0
        %v1192 = vsel %vm298, %v1143, 0
        %vm1194 = vcmask 1043456
        %v1196 = vsel %vm1194, %v1145, 0
        %1198 = vmatprep.subr.bf16.mxu0 0
        %1199 = vmatpush1.bf16.msra.mxu0 %v1196
        %1200 = vmatprep.subr.bf16.mxu0 0
        %1201 = vmatpush1.bf16.msra.mxu0 0
        %1202 = vmatprep.subr.bf16.mxu0 0
        %1203 = vmatpush1.bf16.msra.mxu0 0
        %1204 = vmatprep.subr.bf16.mxu0 0
        %1205 = vmatpush1.bf16.msra.mxu0 0
        %1206 = vmatprep.subr.bf16.mxu0 0
        %1207 = vmatpush1.bf16.msra.mxu0 0
        %1208 = vmatprep.subr.bf16.mxu0 0
        %1209 = vmatpush1.bf16.msra.mxu0 0
        %1210 = vmatprep.subr.bf16.mxu0 0
        %1211 = vmatpush1.bf16.msra.mxu0 0
        %1212 = vmatprep.subr.bf16.mxu0 0
        %1213 = vmatpush1.bf16.msra.mxu0 0
        %1214 = vmatprep.subr.bf16.mxu0 0
        %1215 = vmatpush1.bf16.msra.mxu0 0
        %1216 = vmatprep.subr.bf16.mxu0 0
        %1217 = vmatpush1.bf16.msra.mxu0 0
        %1218 = vmatprep.subr.bf16.mxu0 0
        %1219 = vmatpush1.bf16.msra.mxu0 0
        %1220 = vmatprep.subr.bf16.mxu0 0
        %1221 = vmatpush1.bf16.msra.mxu0 0
        %1222 = vmatprep.subr.bf16.mxu0 0
        %1223 = vmatpush1.bf16.msra.mxu0 0
        %1224 = vmatprep.subr.bf16.mxu0 0
        %1225 = vmatpush1.bf16.msra.mxu0 0
        %1226 = vmatprep.subr.bf16.mxu0 0
        %1227 = vmatpush1.bf16.msra.mxu0 0
        %1228 = vmatprep.subr.bf16.mxu0 0
        %1229 = vmatpush1.bf16.msra.mxu0 0
        %1230 = vmatprep.mubr.bf16.mxu0 0
        %1231 = vmatmul.mubr.bf16.gmra.mrb[0].mxu0 %v1147
        %v1232 = vpop.f32.mrb[0].mxu0
        %v1233 = vadd.f32 0.0, %v1232
        %v1234 = vpop.f32.mrb[0].mxu0
        %v1235 = vpop.f32.mrb[0].mxu0
        %v1236 = vadd.f32 0.0, %v1235
        %v1237 = vpop.f32.mrb[0].mxu0
        %1238 = vmatprep.mubr.bf16.mxu0 0
        %1239 = vmatmul.mubr.bf16.gmra.mrb[0].mxu0 %v1150
        %v1240 = vpop.f32.mrb[0].mxu0
        %v1241 = vadd.f32 0.0, %v1240
        %v1242 = vpop.f32.mrb[0].mxu0
        %v1243 = vpop.f32.mrb[0].mxu0
        %v1244 = vadd.f32 0.0, %v1243
        %v1245 = vpop.f32.mrb[0].mxu0
        %1246 = vmatprep.mubr.bf16.mxu0 0
        %1247 = vmatmul.mubr.bf16.gmra.mrb[0].mxu0 %v1153
        %v1248 = vpop.f32.mrb[0].mxu0
        %v1249 = vadd.f32 0.0, %v1248
        %v1250 = vpop.f32.mrb[0].mxu0
        %v1251 = vpop.f32.mrb[0].mxu0
        %v1252 = vadd.f32 0.0, %v1251
        %v1253 = vpop.f32.mrb[0].mxu0
        %1254 = vmatprep.mubr.bf16.mxu0 0
        %1255 = vmatmul.mubr.bf16.gmra.mrb[0].mxu0 %v1156
        %v1256 = vpop.f32.mrb[0].mxu0
        %v1257 = vadd.f32 0.0, %v1256
        %v1258 = vpop.f32.mrb[0].mxu0
        %v1259 = vpop.f32.mrb[0].mxu0
        %v1260 = vadd.f32 0.0, %v1259
        %v1261 = vpop.f32.mrb[0].mxu0
        %1262 = vmatprep.mubr.bf16.mxu0 0
        %1263 = vmatmul.mubr.bf16.gmra.mrb[0].mxu0 %v1159
        %v1264 = vpop.f32.mrb[0].mxu0
        %v1265 = vadd.f32 0.0, %v1264
        %v1266 = vpop.f32.mrb[0].mxu0
        %v1267 = vpop.f32.mrb[0].mxu0
        %v1268 = vadd.f32 0.0, %v1267
        %v1269 = vpop.f32.mrb[0].mxu0
        %1270 = vmatprep.mubr.bf16.mxu0 0
        %1271 = vmatmul.mubr.bf16.gmra.mrb[0].mxu0 %v1162
        %v1272 = vpop.f32.mrb[0].mxu0
        %v1273 = vadd.f32 0.0, %v1272
        %v1274 = vpop.f32.mrb[0].mxu0
        %v1275 = vpop.f32.mrb[0].mxu0
        %v1276 = vadd.f32 0.0, %v1275
        %v1277 = vpop.f32.mrb[0].mxu0
        %1278 = vmatprep.mubr.bf16.mxu0 0
        %1279 = vmatmul.mubr.bf16.gmra.mrb[0].mxu0 %v1165
        %v1280 = vpop.f32.mrb[0].mxu0
        %v1281 = vadd.f32 0.0, %v1280
        %v1282 = vpop.f32.mrb[0].mxu0
        %v1283 = vpop.f32.mrb[0].mxu0
        %v1284 = vadd.f32 0.0, %v1283
        %v1285 = vpop.f32.mrb[0].mxu0
        %1286 = vmatprep.mubr.bf16.mxu0 0
        %1287 = vmatmul.mubr.bf16.gmra.mrb[0].mxu0 %v1168
        %v1288 = vpop.f32.mrb[0].mxu0
        %v1289 = vadd.f32 0.0, %v1288
        %v1290 = vpop.f32.mrb[0].mxu0
        %v1291 = vpop.f32.mrb[0].mxu0
        %v1292 = vadd.f32 0.0, %v1291
        %v1293 = vpop.f32.mrb[0].mxu0
        %1294 = vmatprep.mubr.bf16.mxu0 0
        %1295 = vmatmul.mubr.bf16.gmra.mrb[0].mxu0 %v1171
        %v1296 = vpop.f32.mrb[0].mxu0
        %v1297 = vadd.f32 0.0, %v1296
        %v1298 = vpop.f32.mrb[0].mxu0
        %v1299 = vpop.f32.mrb[0].mxu0
        %v1300 = vadd.f32 0.0, %v1299
        %v1301 = vpop.f32.mrb[0].mxu0
        %1302 = vmatprep.mubr.bf16.mxu0 0
        %1303 = vmatmul.mubr.bf16.gmra.mrb[0].mxu0 %v1174
        %v1304 = vpop.f32.mrb[0].mxu0
        %v1305 = vadd.f32 0.0, %v1304
        %v1306 = vpop.f32.mrb[0].mxu0
        %v1307 = vpop.f32.mrb[0].mxu0
        %v1308 = vadd.f32 0.0, %v1307
        %v1309 = vpop.f32.mrb[0].mxu0
        %1310 = vmatprep.mubr.bf16.mxu0 0
        %1311 = vmatmul.mubr.bf16.gmra.mrb[0].mxu0 %v1177
        %v1312 = vpop.f32.mrb[0].mxu0
        %v1313 = vadd.f32 0.0, %v1312
        %v1314 = vpop.f32.mrb[0].mxu0
        %v1315 = vpop.f32.mrb[0].mxu0
        %v1316 = vadd.f32 0.0, %v1315
        %v1317 = vpop.f32.mrb[0].mxu0
        %1318 = vmatprep.mubr.bf16.mxu0 0
        %1319 = vmatmul.mubr.bf16.gmra.mrb[0].mxu0 %v1180
        %v1320 = vpop.f32.mrb[0].mxu0
        %v1321 = vadd.f32 0.0, %v1320
        %v1322 = vpop.f32.mrb[0].mxu0
        %v1323 = vpop.f32.mrb[0].mxu0
        %v1324 = vadd.f32 0.0, %v1323
        %v1325 = vpop.f32.mrb[0].mxu0
        %1326 = vmatprep.mubr.bf16.mxu0 0
        %1327 = vmatmul.mubr.bf16.gmra.mrb[0].mxu0 %v1183
        %v1328 = vpop.f32.mrb[0].mxu0
        %v1329 = vadd.f32 0.0, %v1328
        %v1330 = vpop.f32.mrb[0].mxu0
        %v1331 = vpop.f32.mrb[0].mxu0
        %v1332 = vadd.f32 0.0, %v1331
        %v1333 = vpop.f32.mrb[0].mxu0
        %1334 = vmatprep.mubr.bf16.mxu0 0
        %1335 = vmatmul.mubr.bf16.gmra.mrb[0].mxu0 %v1186
        %v1336 = vpop.f32.mrb[0].mxu0
        %v1337 = vadd.f32 0.0, %v1336
        %v1338 = vpop.f32.mrb[0].mxu0
        %v1339 = vpop.f32.mrb[0].mxu0
        %v1340 = vadd.f32 0.0, %v1339
        %v1341 = vpop.f32.mrb[0].mxu0
        %1342 = vmatprep.mubr.bf16.mxu0 0
        %1343 = vmatmul.mubr.bf16.gmra.mrb[0].mxu0 %v1189
        %v1344 = vpop.f32.mrb[0].mxu0
        %v1345 = vadd.f32 0.0, %v1344
        %v1346 = vpop.f32.mrb[0].mxu0
        %v1347 = vpop.f32.mrb[0].mxu0
        %v1348 = vadd.f32 0.0, %v1347
        %v1349 = vpop.f32.mrb[0].mxu0
        %1350 = vmatprep.mubr.bf16.mxu0 0
        %1351 = vmatmul.mubr.bf16.gmra.mrb[0].mxu0 %v1192
        %v1352 = vpop.f32.mrb[0].mxu0
        %v1353 = vadd.f32 0.0, %v1352
        %v1354 = vpop.f32.mrb[0].mxu0
        %v1355 = vpop.f32.mrb[0].mxu0
        %v1356 = vadd.f32 0.0, %v1355
        %v1357 = vpop.f32.mrb[0].mxu0
        %1358 = vdwg.mxu0
        %v1360 = vsel %vm298, %v1111, 0
        %v1363 = vsel %vm298, %v1112, 0
        %v1366 = vsel %vm298, %v1113, 0
        %v1369 = vsel %vm298, %v1114, 0
        %v1372 = vsel %vm298, %v1115, 0
        %v1375 = vsel %vm298, %v1116, 0
        %v1378 = vsel %vm298, %v1117, 0
        %v1381 = vsel %vm298, %v1118, 0
        %v1384 = vsel %vm298, %v1119, 0
        %v1387 = vsel %vm298, %v1120, 0
        %v1390 = vsel %vm298, %v1121, 0
        %v1393 = vsel %vm298, %v1122, 0
        %v1396 = vsel %vm298, %v1123, 0
        %v1399 = vsel %vm298, %v1124, 0
        %v1402 = vsel %vm298, %v1125, 0
        %v1405 = vsel %vm298, %v1126, 0
        %v1408 = vsel %vm1194, %v1127, 0
        %1410 = vmatprep.subr.bf16.mxu0 0
        %1411 = vmatpush1.bf16.msra.mxu0 %v1408
        %1412 = vmatprep.subr.bf16.mxu0 0
        %1413 = vmatpush1.bf16.msra.mxu0 0
        %1414 = vmatprep.subr.bf16.mxu0 0
        %1415 = vmatpush1.bf16.msra.mxu0 0
        %1416 = vmatprep.subr.bf16.mxu0 0
        %1417 = vmatpush1.bf16.msra.mxu0 0
        %1418 = vmatprep.subr.bf16.mxu0 0
        %1419 = vmatpush1.bf16.msra.mxu0 0
        %1420 = vmatprep.subr.bf16.mxu0 0
        %1421 = vmatpush1.bf16.msra.mxu0 0
        %1422 = vmatprep.subr.bf16.mxu0 0
        %1423 = vmatpush1.bf16.msra.mxu0 0
        %1424 = vmatprep.subr.bf16.mxu0 0
        %1425 = vmatpush1.bf16.msra.mxu0 0
        %1426 = vmatprep.subr.bf16.mxu0 0
        %1427 = vmatpush1.bf16.msra.mxu0 0
        %1428 = vmatprep.subr.bf16.mxu0 0
        %1429 = vmatpush1.bf16.msra.mxu0 0
        %1430 = vmatprep.subr.bf16.mxu0 0
        %1431 = vmatpush1.bf16.msra.mxu0 0
        %1432 = vmatprep.subr.bf16.mxu0 0
        %1433 = vmatpush1.bf16.msra.mxu0 0
        %1434 = vmatprep.subr.bf16.mxu0 0
        %1435 = vmatpush1.bf16.msra.mxu0 0
        %1436 = vmatprep.subr.bf16.mxu0 0
        %1437 = vmatpush1.bf16.msra.mxu0 0
        %1438 = vmatprep.subr.bf16.mxu0 0
        %1439 = vmatpush1.bf16.msra.mxu0 0
        %1440 = vmatprep.subr.bf16.mxu0 0
        %1441 = vmatpush1.bf16.msra.mxu0 0
        %1442 = vmatprep.mubr.bf16.mxu0 0
        %1443 = vmatmul.mubr.bf16.gmra.mrb[0].mxu0 %v1360
        %v1444 = vpop.f32.mrb[0].mxu0
        %v1445 = vadd.f32 %v1233, %v1444
        %v1446 = vpop.f32.mrb[0].mxu0
        %v1447 = vpop.f32.mrb[0].mxu0
        %v1448 = vadd.f32 %v1236, %v1447
        %v1449 = vpop.f32.mrb[0].mxu0
        %1450 = vmatprep.mubr.bf16.mxu0 0
        %1451 = vmatmul.mubr.bf16.gmra.mrb[0].mxu0 %v1363
        %v1452 = vpop.f32.mrb[0].mxu0
        %v1453 = vadd.f32 %v1241, %v1452
        %v1454 = vpop.f32.mrb[0].mxu0
        %v1455 = vpop.f32.mrb[0].mxu0
        %v1456 = vadd.f32 %v1244, %v1455
        %v1457 = vpop.f32.mrb[0].mxu0
        %1458 = vmatprep.mubr.bf16.mxu0 0
        %1459 = vmatmul.mubr.bf16.gmra.mrb[0].mxu0 %v1366
        %v1460 = vpop.f32.mrb[0].mxu0
        %v1461 = vadd.f32 %v1249, %v1460
        %v1462 = vpop.f32.mrb[0].mxu0
        %v1463 = vpop.f32.mrb[0].mxu0
        %v1464 = vadd.f32 %v1252, %v1463
        %v1465 = vpop.f32.mrb[0].mxu0
        %1466 = vmatprep.mubr.bf16.mxu0 0
        %1467 = vmatmul.mubr.bf16.gmra.mrb[0].mxu0 %v1369
        %v1468 = vpop.f32.mrb[0].mxu0
        %v1469 = vadd.f32 %v1257, %v1468
        %v1470 = vpop.f32.mrb[0].mxu0
        %v1471 = vpop.f32.mrb[0].mxu0
        %v1472 = vadd.f32 %v1260, %v1471
        %v1473 = vpop.f32.mrb[0].mxu0
        %1474 = vmatprep.mubr.bf16.mxu0 0
        %1475 = vmatmul.mubr.bf16.gmra.mrb[0].mxu0 %v1372
        %v1476 = vpop.f32.mrb[0].mxu0
        %v1477 = vadd.f32 %v1265, %v1476
        %v1478 = vpop.f32.mrb[0].mxu0
        %v1479 = vpop.f32.mrb[0].mxu0
        %v1480 = vadd.f32 %v1268, %v1479
        %v1481 = vpop.f32.mrb[0].mxu0
        %1482 = vmatprep.mubr.bf16.mxu0 0
        %1483 = vmatmul.mubr.bf16.gmra.mrb[0].mxu0 %v1375
        %v1484 = vpop.f32.mrb[0].mxu0
        %v1485 = vadd.f32 %v1273, %v1484
        %v1486 = vpop.f32.mrb[0].mxu0
        %v1487 = vpop.f32.mrb[0].mxu0
        %v1488 = vadd.f32 %v1276, %v1487
        %v1489 = vpop.f32.mrb[0].mxu0
        %1490 = vmatprep.mubr.bf16.mxu0 0
        %1491 = vmatmul.mubr.bf16.gmra.mrb[0].mxu0 %v1378
        %v1492 = vpop.f32.mrb[0].mxu0
        %v1493 = vadd.f32 %v1281, %v1492
        %v1494 = vpop.f32.mrb[0].mxu0
        %v1495 = vpop.f32.mrb[0].mxu0
        %v1496 = vadd.f32 %v1284, %v1495
        %v1497 = vpop.f32.mrb[0].mxu0
        %1498 = vmatprep.mubr.bf16.mxu0 0
        %1499 = vmatmul.mubr.bf16.gmra.mrb[0].mxu0 %v1381
        %v1500 = vpop.f32.mrb[0].mxu0
        %v1501 = vadd.f32 %v1289, %v1500
        %v1502 = vpop.f32.mrb[0].mxu0
        %v1503 = vpop.f32.mrb[0].mxu0
        %v1504 = vadd.f32 %v1292, %v1503
        %v1505 = vpop.f32.mrb[0].mxu0
        %1506 = vmatprep.mubr.bf16.mxu0 0
        %1507 = vmatmul.mubr.bf16.gmra.mrb[0].mxu0 %v1384
        %v1508 = vpop.f32.mrb[0].mxu0
        %v1509 = vadd.f32 %v1297, %v1508
        %v1510 = vpop.f32.mrb[0].mxu0
        %v1511 = vpop.f32.mrb[0].mxu0
        %v1512 = vadd.f32 %v1300, %v1511
        %v1513 = vpop.f32.mrb[0].mxu0
        %1514 = vmatprep.mubr.bf16.mxu0 0
        %1515 = vmatmul.mubr.bf16.gmra.mrb[0].mxu0 %v1387
        %v1516 = vpop.f32.mrb[0].mxu0
        %v1517 = vadd.f32 %v1305, %v1516
        %v1518 = vpop.f32.mrb[0].mxu0
        %v1519 = vpop.f32.mrb[0].mxu0
        %v1520 = vadd.f32 %v1308, %v1519
        %v1521 = vpop.f32.mrb[0].mxu0
        %1522 = vmatprep.mubr.bf16.mxu0 0
        %1523 = vmatmul.mubr.bf16.gmra.mrb[0].mxu0 %v1390
        %v1524 = vpop.f32.mrb[0].mxu0
        %v1525 = vadd.f32 %v1313, %v1524
        %v1526 = vpop.f32.mrb[0].mxu0
        %v1527 = vpop.f32.mrb[0].mxu0
        %v1528 = vadd.f32 %v1316, %v1527
        %v1529 = vpop.f32.mrb[0].mxu0
        %1530 = vmatprep.mubr.bf16.mxu0 0
        %1531 = vmatmul.mubr.bf16.gmra.mrb[0].mxu0 %v1393
        %v1532 = vpop.f32.mrb[0].mxu0
        %v1533 = vadd.f32 %v1321, %v1532
        %v1534 = vpop.f32.mrb[0].mxu0
        %v1535 = vpop.f32.mrb[0].mxu0
        %v1536 = vadd.f32 %v1324, %v1535
        %v1537 = vpop.f32.mrb[0].mxu0
        %1538 = vmatprep.mubr.bf16.mxu0 0
        %1539 = vmatmul.mubr.bf16.gmra.mrb[0].mxu0 %v1396
        %v1540 = vpop.f32.mrb[0].mxu0
        %v1541 = vadd.f32 %v1329, %v1540
        %v1542 = vpop.f32.mrb[0].mxu0
        %v1543 = vpop.f32.mrb[0].mxu0
        %v1544 = vadd.f32 %v1332, %v1543
        %v1545 = vpop.f32.mrb[0].mxu0
        %1546 = vmatprep.mubr.bf16.mxu0 0
        %1547 = vmatmul.mubr.bf16.gmra.mrb[0].mxu0 %v1399
        %v1548 = vpop.f32.mrb[0].mxu0
        %v1549 = vadd.f32 %v1337, %v1548
        %v1550 = vpop.f32.mrb[0].mxu0
        %v1551 = vpop.f32.mrb[0].mxu0
        %v1552 = vadd.f32 %v1340, %v1551
        %v1553 = vpop.f32.mrb[0].mxu0
        %1554 = vmatprep.mubr.bf16.mxu0 0
        %1555 = vmatmul.mubr.bf16.gmra.mrb[0].mxu0 %v1402
        %v1556 = vpop.f32.mrb[0].mxu0
        %v1557 = vadd.f32 %v1345, %v1556
        %v1558 = vpop.f32.mrb[0].mxu0
        %v1559 = vpop.f32.mrb[0].mxu0
        %v1560 = vadd.f32 %v1348, %v1559
        %v1561 = vpop.f32.mrb[0].mxu0
        %1562 = vmatprep.mubr.bf16.mxu0 0
        %1563 = vmatmul.mubr.bf16.gmra.mrb[0].mxu0 %v1405
        %v1564 = vpop.f32.mrb[0].mxu0
        %v1565 = vadd.f32 %v1353, %v1564
        %v1566 = vpop.f32.mrb[0].mxu0
        %v1567 = vpop.f32.mrb[0].mxu0
        %v1568 = vadd.f32 %v1356, %v1567
        %v1569 = vpop.f32.mrb[0].mxu0
        %1570 = vdwg.mxu0
        %v1571 = vld [vmem:[#allocation4] sm:$0xff]
        %v1572 = vld [vmem:[#allocation4 + $0x8] sm:$0xff]
        %v1573 = vld [vmem:[#allocation4 + $0x10] sm:$0xff]
        %v1574 = vld [vmem:[#allocation4 + $0x18] sm:$0xff]
        %v1575 = vld [vmem:[#allocation4 + $0x20] sm:$0xff]
        %v1576 = vld [vmem:[#allocation4 + $0x28] sm:$0xff]
        %v1577 = vld [vmem:[#allocation4 + $0x30] sm:$0xff]
        %v1578 = vld [vmem:[#allocation4 + $0x38] sm:$0xff]
        %v1579 = vld [vmem:[#allocation4 + $0x40] sm:$0xff]
        %v1580 = vld [vmem:[#allocation4 + $0x48] sm:$0xff]
        %v1581 = vld [vmem:[#allocation4 + $0x50] sm:$0xff]
        %v1582 = vld [vmem:[#allocation4 + $0x58] sm:$0xff]
        %v1583 = vld [vmem:[#allocation4 + $0x60] sm:$0xff]
        %v1584 = vld [vmem:[#allocation4 + $0x68] sm:$0xff]
        %v1585 = vld [vmem:[#allocation4 + $0x70] sm:$0xff]
        %v1586 = vld [vmem:[#allocation4 + $0x78] sm:$0xff]
        %s1587 = scalar_lea.vmem %s3, 8
        %v1588 = vld [vmem:[%s1587] sm:$0xf]
        %v1590 = vsel %vm298, %v1571, 0
        %v1593 = vsel %vm298, %v1572, 0
        %v1596 = vsel %vm298, %v1573, 0
        %v1599 = vsel %vm298, %v1574, 0
        %v1602 = vsel %vm298, %v1575, 0
        %v1605 = vsel %vm298, %v1576, 0
        %v1608 = vsel %vm298, %v1577, 0
        %v1611 = vsel %vm298, %v1578, 0
        %v1614 = vsel %vm298, %v1579, 0
        %v1617 = vsel %vm298, %v1580, 0
        %v1620 = vsel %vm298, %v1581, 0
        %v1623 = vsel %vm298, %v1582, 0
        %v1626 = vsel %vm298, %v1583, 0
        %v1629 = vsel %vm298, %v1584, 0
        %v1632 = vsel %vm298, %v1585, 0
        %v1635 = vsel %vm298, %v1586, 0
        %v1638 = vsel %vm1194, %v1588, 0
        %1640 = vmatprep.subr.bf16.mxu0 0
        %1641 = vmatpush1.bf16.msra.mxu0 %v1638
        %1642 = vmatprep.subr.bf16.mxu0 0
        %1643 = vmatpush1.bf16.msra.mxu0 0
        %1644 = vmatprep.subr.bf16.mxu0 0
        %1645 = vmatpush1.bf16.msra.mxu0 0
        %1646 = vmatprep.subr.bf16.mxu0 0
        %1647 = vmatpush1.bf16.msra.mxu0 0
        %1648 = vmatprep.subr.bf16.mxu0 0
        %1649 = vmatpush1.bf16.msra.mxu0 0
        %1650 = vmatprep.subr.bf16.mxu0 0
        %1651 = vmatpush1.bf16.msra.mxu0 0
        %1652 = vmatprep.subr.bf16.mxu0 0
        %1653 = vmatpush1.bf16.msra.mxu0 0
        %1654 = vmatprep.subr.bf16.mxu0 0
        %1655 = vmatpush1.bf16.msra.mxu0 0
        %1656 = vmatprep.subr.bf16.mxu0 0
        %1657 = vmatpush1.bf16.msra.mxu0 0
        %1658 = vmatprep.subr.bf16.mxu0 0
        %1659 = vmatpush1.bf16.msra.mxu0 0
        %1660 = vmatprep.subr.bf16.mxu0 0
        %1661 = vmatpush1.bf16.msra.mxu0 0
        %1662 = vmatprep.subr.bf16.mxu0 0
        %1663 = vmatpush1.bf16.msra.mxu0 0
        %1664 = vmatprep.subr.bf16.mxu0 0
        %1665 = vmatpush1.bf16.msra.mxu0 0
        %1666 = vmatprep.subr.bf16.mxu0 0
        %1667 = vmatpush1.bf16.msra.mxu0 0
        %1668 = vmatprep.subr.bf16.mxu0 0
        %1669 = vmatpush1.bf16.msra.mxu0 0
        %1670 = vmatprep.subr.bf16.mxu0 0
        %1671 = vmatpush1.bf16.msra.mxu0 0
        %1672 = vmatprep.mubr.bf16.mxu0 0
        %1673 = vmatmul.mubr.bf16.gmra.mrb[0].mxu0 %v1590
        %v1674 = vpop.f32.mrb[0].mxu0
        %v1675 = vadd.f32 0.0, %v1674
        %v1676 = vpop.f32.mrb[0].mxu0
        %v1677 = vpop.f32.mrb[0].mxu0
        %v1678 = vadd.f32 0.0, %v1677
        %v1679 = vpop.f32.mrb[0].mxu0
        %1680 = vmatprep.mubr.bf16.mxu0 0
        %1681 = vmatmul.mubr.bf16.gmra.mrb[0].mxu0 %v1593
        %v1682 = vpop.f32.mrb[0].mxu0
        %v1683 = vadd.f32 0.0, %v1682
        %v1684 = vpop.f32.mrb[0].mxu0
        %v1685 = vpop.f32.mrb[0].mxu0
        %v1686 = vadd.f32 0.0, %v1685
        %v1687 = vpop.f32.mrb[0].mxu0
        %1688 = vmatprep.mubr.bf16.mxu0 0
        %1689 = vmatmul.mubr.bf16.gmra.mrb[0].mxu0 %v1596
        %v1690 = vpop.f32.mrb[0].mxu0
        %v1691 = vadd.f32 0.0, %v1690
        %v1692 = vpop.f32.mrb[0].mxu0
        %v1693 = vpop.f32.mrb[0].mxu0
        %v1694 = vadd.f32 0.0, %v1693
        %v1695 = vpop.f32.mrb[0].mxu0
        %1696 = vmatprep.mubr.bf16.mxu0 0
        %1697 = vmatmul.mubr.bf16.gmra.mrb[0].mxu0 %v1599
        %v1698 = vpop.f32.mrb[0].mxu0
        %v1699 = vadd.f32 0.0, %v1698
        %v1700 = vpop.f32.mrb[0].mxu0
        %v1701 = vpop.f32.mrb[0].mxu0
        %v1702 = vadd.f32 0.0, %v1701
        %v1703 = vpop.f32.mrb[0].mxu0
        %1704 = vmatprep.mubr.bf16.mxu0 0
        %1705 = vmatmul.mubr.bf16.gmra.mrb[0].mxu0 %v1602
        %v1706 = vpop.f32.mrb[0].mxu0
        %v1707 = vadd.f32 0.0, %v1706
        %v1708 = vpop.f32.mrb[0].mxu0
        %v1709 = vpop.f32.mrb[0].mxu0
        %v1710 = vadd.f32 0.0, %v1709
        %v1711 = vpop.f32.mrb[0].mxu0
        %1712 = vmatprep.mubr.bf16.mxu0 0
        %1713 = vmatmul.mubr.bf16.gmra.mrb[0].mxu0 %v1605
        %v1714 = vpop.f32.mrb[0].mxu0
        %v1715 = vadd.f32 0.0, %v1714
        %v1716 = vpop.f32.mrb[0].mxu0
        %v1717 = vpop.f32.mrb[0].mxu0
        %v1718 = vadd.f32 0.0, %v1717
        %v1719 = vpop.f32.mrb[0].mxu0
        %1720 = vmatprep.mubr.bf16.mxu0 0
        %1721 = vmatmul.mubr.bf16.gmra.mrb[0].mxu0 %v1608
        %v1722 = vpop.f32.mrb[0].mxu0
        %v1723 = vadd.f32 0.0, %v1722
        %v1724 = vpop.f32.mrb[0].mxu0
        %v1725 = vpop.f32.mrb[0].mxu0
        %v1726 = vadd.f32 0.0, %v1725
        %v1727 = vpop.f32.mrb[0].mxu0
        %1728 = vmatprep.mubr.bf16.mxu0 0
        %1729 = vmatmul.mubr.bf16.gmra.mrb[0].mxu0 %v1611
        %v1730 = vpop.f32.mrb[0].mxu0
        %v1731 = vadd.f32 0.0, %v1730
        %v1732 = vpop.f32.mrb[0].mxu0
        %v1733 = vpop.f32.mrb[0].mxu0
        %v1734 = vadd.f32 0.0, %v1733
        %v1735 = vpop.f32.mrb[0].mxu0
        %1736 = vmatprep.mubr.bf16.mxu0 0
        %1737 = vmatmul.mubr.bf16.gmra.mrb[0].mxu0 %v1614
        %v1738 = vpop.f32.mrb[0].mxu0
        %v1739 = vadd.f32 0.0, %v1738
        %v1740 = vpop.f32.mrb[0].mxu0
        %v1741 = vpop.f32.mrb[0].mxu0
        %v1742 = vadd.f32 0.0, %v1741
        %v1743 = vpop.f32.mrb[0].mxu0
        %1744 = vmatprep.mubr.bf16.mxu0 0
        %1745 = vmatmul.mubr.bf16.gmra.mrb[0].mxu0 %v1617
        %v1746 = vpop.f32.mrb[0].mxu0
        %v1747 = vadd.f32 0.0, %v1746
        %v1748 = vpop.f32.mrb[0].mxu0
        %v1749 = vpop.f32.mrb[0].mxu0
        %v1750 = vadd.f32 0.0, %v1749
        %v1751 = vpop.f32.mrb[0].mxu0
        %1752 = vmatprep.mubr.bf16.mxu0 0
        %1753 = vmatmul.mubr.bf16.gmra.mrb[0].mxu0 %v1620
        %v1754 = vpop.f32.mrb[0].mxu0
        %v1755 = vadd.f32 0.0, %v1754
        %v1756 = vpop.f32.mrb[0].mxu0
        %v1757 = vpop.f32.mrb[0].mxu0
        %v1758 = vadd.f32 0.0, %v1757
        %v1759 = vpop.f32.mrb[0].mxu0
        %1760 = vmatprep.mubr.bf16.mxu0 0
        %1761 = vmatmul.mubr.bf16.gmra.mrb[0].mxu0 %v1623
        %v1762 = vpop.f32.mrb[0].mxu0
        %v1763 = vadd.f32 0.0, %v1762
        %v1764 = vpop.f32.mrb[0].mxu0
        %v1765 = vpop.f32.mrb[0].mxu0
        %v1766 = vadd.f32 0.0, %v1765
        %v1767 = vpop.f32.mrb[0].mxu0
        %1768 = vmatprep.mubr.bf16.mxu0 0
        %1769 = vmatmul.mubr.bf16.gmra.mrb[0].mxu0 %v1626
        %v1770 = vpop.f32.mrb[0].mxu0
        %v1771 = vadd.f32 0.0, %v1770
        %v1772 = vpop.f32.mrb[0].mxu0
        %v1773 = vpop.f32.mrb[0].mxu0
        %v1774 = vadd.f32 0.0, %v1773
        %v1775 = vpop.f32.mrb[0].mxu0
        %1776 = vmatprep.mubr.bf16.mxu0 0
        %1777 = vmatmul.mubr.bf16.gmra.mrb[0].mxu0 %v1629
        %v1778 = vpop.f32.mrb[0].mxu0
        %v1779 = vadd.f32 0.0, %v1778
        %v1780 = vpop.f32.mrb[0].mxu0
        %v1781 = vpop.f32.mrb[0].mxu0
        %v1782 = vadd.f32 0.0, %v1781
        %v1783 = vpop.f32.mrb[0].mxu0
        %1784 = vmatprep.mubr.bf16.mxu0 0
        %1785 = vmatmul.mubr.bf16.gmra.mrb[0].mxu0 %v1632
        %v1786 = vpop.f32.mrb[0].mxu0
        %v1787 = vadd.f32 0.0, %v1786
        %v1788 = vpop.f32.mrb[0].mxu0
        %v1789 = vpop.f32.mrb[0].mxu0
        %v1790 = vadd.f32 0.0, %v1789
        %v1791 = vpop.f32.mrb[0].mxu0
        %1792 = vmatprep.mubr.bf16.mxu0 0
        %1793 = vmatmul.mubr.bf16.gmra.mrb[0].mxu0 %v1635
        %v1794 = vpop.f32.mrb[0].mxu0
        %v1795 = vadd.f32 0.0, %v1794
        %v1796 = vpop.f32.mrb[0].mxu0
        %v1797 = vpop.f32.mrb[0].mxu0
        %v1798 = vadd.f32 0.0, %v1797
        %v1799 = vpop.f32.mrb[0].mxu0
        %1800 = vdwg.mxu0
        %v1801 = vadd.f32 %v1445, %v1675
        %v1802 = vadd.f32 %v1448, %v1678
        %v1803 = vadd.f32 %v1453, %v1683
        %v1804 = vadd.f32 %v1456, %v1686
        %v1805 = vadd.f32 %v1461, %v1691
        %v1806 = vadd.f32 %v1464, %v1694
        %v1807 = vadd.f32 %v1469, %v1699
        %v1808 = vadd.f32 %v1472, %v1702
        %v1809 = vadd.f32 %v1477, %v1707
        %v1810 = vadd.f32 %v1480, %v1710
        %v1811 = vadd.f32 %v1485, %v1715
        %v1812 = vadd.f32 %v1488, %v1718
        %v1813 = vadd.f32 %v1493, %v1723
        %v1814 = vadd.f32 %v1496, %v1726
        %v1815 = vadd.f32 %v1501, %v1731
        %v1816 = vadd.f32 %v1504, %v1734
        %v1817 = vadd.f32 %v1509, %v1739
        %v1818 = vadd.f32 %v1512, %v1742
        %v1819 = vadd.f32 %v1517, %v1747
        %v1820 = vadd.f32 %v1520, %v1750
        %v1821 = vadd.f32 %v1525, %v1755
        %v1822 = vadd.f32 %v1528, %v1758
        %v1823 = vadd.f32 %v1533, %v1763
        %v1824 = vadd.f32 %v1536, %v1766
        %v1825 = vadd.f32 %v1541, %v1771
        %v1826 = vadd.f32 %v1544, %v1774
        %v1827 = vadd.f32 %v1549, %v1779
        %v1828 = vadd.f32 %v1552, %v1782
        %v1829 = vadd.f32 %v1557, %v1787
        %v1830 = vadd.f32 %v1560, %v1790
        %v1831 = vadd.f32 %v1565, %v1795
        %v1832 = vadd.f32 %v1568, %v1798
        %v1833 = vld [vmem:[%s960] sm:$0xff]
        %v1834 = vld [vmem:[%s960 + $0x8] sm:$0xff]
        %v1835 = vld [vmem:[%s960 + $0x10] sm:$0xff]
        %v1836 = vld [vmem:[%s960 + $0x18] sm:$0xff]
        %v1837 = vld [vmem:[%s960 + $0x20] sm:$0xff]
        %v1838 = vld [vmem:[%s960 + $0x28] sm:$0xff]
        %v1839 = vld [vmem:[%s960 + $0x30] sm:$0xff]
        %v1840 = vld [vmem:[%s960 + $0x38] sm:$0xff]
        %v1841 = vld [vmem:[%s960 + $0x40] sm:$0xff]
        %v1842 = vld [vmem:[%s960 + $0x48] sm:$0xff]
        %v1843 = vld [vmem:[%s960 + $0x50] sm:$0xff]
        %v1844 = vld [vmem:[%s960 + $0x58] sm:$0xff]
        %v1845 = vld [vmem:[%s960 + $0x60] sm:$0xff]
        %v1846 = vld [vmem:[%s960 + $0x68] sm:$0xff]
        %v1847 = vld [vmem:[%s960 + $0x70] sm:$0xff]
        %v1848 = vld [vmem:[%s960 + $0x78] sm:$0xff]
        %s1849 = scalar_lea.vmem %s3, 12
        %v1850 = vld [vmem:[%s1849] sm:$0xf]
        %v1852 = vsel %vm298, %v1833, 0
        %v1855 = vsel %vm298, %v1834, 0
        %v1858 = vsel %vm298, %v1835, 0
        %v1861 = vsel %vm298, %v1836, 0
        %v1864 = vsel %vm298, %v1837, 0
        %v1867 = vsel %vm298, %v1838, 0
        %v1870 = vsel %vm298, %v1839, 0
        %v1873 = vsel %vm298, %v1840, 0
        %v1876 = vsel %vm298, %v1841, 0
        %v1879 = vsel %vm298, %v1842, 0
        %v1882 = vsel %vm298, %v1843, 0
        %v1885 = vsel %vm298, %v1844, 0
        %v1888 = vsel %vm298, %v1845, 0
        %v1891 = vsel %vm298, %v1846, 0
        %v1894 = vsel %vm298, %v1847, 0
        %v1897 = vsel %vm298, %v1848, 0
        %v1900 = vsel %vm1194, %v1850, 0
        %1902 = vmatprep.subr.bf16.mxu0 0
        %1903 = vmatpush1.bf16.msra.mxu0 %v1900
        %1904 = vmatprep.subr.bf16.mxu0 0
        %1905 = vmatpush1.bf16.msra.mxu0 0
        %1906 = vmatprep.subr.bf16.mxu0 0
        %1907 = vmatpush1.bf16.msra.mxu0 0
        %1908 = vmatprep.subr.bf16.mxu0 0
        %1909 = vmatpush1.bf16.msra.mxu0 0
        %1910 = vmatprep.subr.bf16.mxu0 0
        %1911 = vmatpush1.bf16.msra.mxu0 0
        %1912 = vmatprep.subr.bf16.mxu0 0
        %1913 = vmatpush1.bf16.msra.mxu0 0
        %1914 = vmatprep.subr.bf16.mxu0 0
        %1915 = vmatpush1.bf16.msra.mxu0 0
        %1916 = vmatprep.subr.bf16.mxu0 0
        %1917 = vmatpush1.bf16.msra.mxu0 0
        %1918 = vmatprep.subr.bf16.mxu0 0
        %1919 = vmatpush1.bf16.msra.mxu0 0
        %1920 = vmatprep.subr.bf16.mxu0 0
        %1921 = vmatpush1.bf16.msra.mxu0 0
        %1922 = vmatprep.subr.bf16.mxu0 0
        %1923 = vmatpush1.bf16.msra.mxu0 0
        %1924 = vmatprep.subr.bf16.mxu0 0
        %1925 = vmatpush1.bf16.msra.mxu0 0
        %1926 = vmatprep.subr.bf16.mxu0 0
        %1927 = vmatpush1.bf16.msra.mxu0 0
        %1928 = vmatprep.subr.bf16.mxu0 0
        %1929 = vmatpush1.bf16.msra.mxu0 0
        %1930 = vmatprep.subr.bf16.mxu0 0
        %1931 = vmatpush1.bf16.msra.mxu0 0
        %1932 = vmatprep.subr.bf16.mxu0 0
        %1933 = vmatpush1.bf16.msra.mxu0 0
        %1934 = vmatprep.mubr.bf16.mxu0 0
        %1935 = vmatmul.mubr.bf16.gmra.mrb[0].mxu0 %v1852
        %v1936 = vpop.f32.mrb[0].mxu0
        %v1937 = vadd.f32 0.0, %v1936
        %v1938 = vpop.f32.mrb[0].mxu0
        %v1939 = vpop.f32.mrb[0].mxu0
        %v1940 = vadd.f32 0.0, %v1939
        %v1941 = vpop.f32.mrb[0].mxu0
        %1942 = vmatprep.mubr.bf16.mxu0 0
        %1943 = vmatmul.mubr.bf16.gmra.mrb[0].mxu0 %v1855
        %v1944 = vpop.f32.mrb[0].mxu0
        %v1945 = vadd.f32 0.0, %v1944
        %v1946 = vpop.f32.mrb[0].mxu0
        %v1947 = vpop.f32.mrb[0].mxu0
        %v1948 = vadd.f32 0.0, %v1947
        %v1949 = vpop.f32.mrb[0].mxu0
        %1950 = vmatprep.mubr.bf16.mxu0 0
        %1951 = vmatmul.mubr.bf16.gmra.mrb[0].mxu0 %v1858
        %v1952 = vpop.f32.mrb[0].mxu0
        %v1953 = vadd.f32 0.0, %v1952
        %v1954 = vpop.f32.mrb[0].mxu0
        %v1955 = vpop.f32.mrb[0].mxu0
        %v1956 = vadd.f32 0.0, %v1955
        %v1957 = vpop.f32.mrb[0].mxu0
        %1958 = vmatprep.mubr.bf16.mxu0 0
        %1959 = vmatmul.mubr.bf16.gmra.mrb[0].mxu0 %v1861
        %v1960 = vpop.f32.mrb[0].mxu0
        %v1961 = vadd.f32 0.0, %v1960
        %v1962 = vpop.f32.mrb[0].mxu0
        %v1963 = vpop.f32.mrb[0].mxu0
        %v1964 = vadd.f32 0.0, %v1963
        %v1965 = vpop.f32.mrb[0].mxu0
        %1966 = vmatprep.mubr.bf16.mxu0 0
        %1967 = vmatmul.mubr.bf16.gmra.mrb[0].mxu0 %v1864
        %v1968 = vpop.f32.mrb[0].mxu0
        %v1969 = vadd.f32 0.0, %v1968
        %v1970 = vpop.f32.mrb[0].mxu0
        %v1971 = vpop.f32.mrb[0].mxu0
        %v1972 = vadd.f32 0.0, %v1971
        %v1973 = vpop.f32.mrb[0].mxu0
        %1974 = vmatprep.mubr.bf16.mxu0 0
        %1975 = vmatmul.mubr.bf16.gmra.mrb[0].mxu0 %v1867
        %v1976 = vpop.f32.mrb[0].mxu0
        %v1977 = vadd.f32 0.0, %v1976
        %v1978 = vpop.f32.mrb[0].mxu0
        %v1979 = vpop.f32.mrb[0].mxu0
        %v1980 = vadd.f32 0.0, %v1979
        %v1981 = vpop.f32.mrb[0].mxu0
        %1982 = vmatprep.mubr.bf16.mxu0 0
        %1983 = vmatmul.mubr.bf16.gmra.mrb[0].mxu0 %v1870
        %v1984 = vpop.f32.mrb[0].mxu0
        %v1985 = vadd.f32 0.0, %v1984
        %v1986 = vpop.f32.mrb[0].mxu0
        %v1987 = vpop.f32.mrb[0].mxu0
        %v1988 = vadd.f32 0.0, %v1987
        %v1989 = vpop.f32.mrb[0].mxu0
        %1990 = vmatprep.mubr.bf16.mxu0 0
        %1991 = vmatmul.mubr.bf16.gmra.mrb[0].mxu0 %v1873
        %v1992 = vpop.f32.mrb[0].mxu0
        %v1993 = vadd.f32 0.0, %v1992
        %v1994 = vpop.f32.mrb[0].mxu0
        %v1995 = vpop.f32.mrb[0].mxu0
        %v1996 = vadd.f32 0.0, %v1995
        %v1997 = vpop.f32.mrb[0].mxu0
        %1998 = vmatprep.mubr.bf16.mxu0 0
        %1999 = vmatmul.mubr.bf16.gmra.mrb[0].mxu0 %v1876
        %v2000 = vpop.f32.mrb[0].mxu0
        %v2001 = vadd.f32 0.0, %v2000
        %v2002 = vpop.f32.mrb[0].mxu0
        %v2003 = vpop.f32.mrb[0].mxu0
        %v2004 = vadd.f32 0.0, %v2003
        %v2005 = vpop.f32.mrb[0].mxu0
        %2006 = vmatprep.mubr.bf16.mxu0 0
        %2007 = vmatmul.mubr.bf16.gmra.mrb[0].mxu0 %v1879
        %v2008 = vpop.f32.mrb[0].mxu0
        %v2009 = vadd.f32 0.0, %v2008
        %v2010 = vpop.f32.mrb[0].mxu0
        %v2011 = vpop.f32.mrb[0].mxu0
        %v2012 = vadd.f32 0.0, %v2011
        %v2013 = vpop.f32.mrb[0].mxu0
        %2014 = vmatprep.mubr.bf16.mxu0 0
        %2015 = vmatmul.mubr.bf16.gmra.mrb[0].mxu0 %v1882
        %v2016 = vpop.f32.mrb[0].mxu0
        %v2017 = vadd.f32 0.0, %v2016
        %v2018 = vpop.f32.mrb[0].mxu0
        %v2019 = vpop.f32.mrb[0].mxu0
        %v2020 = vadd.f32 0.0, %v2019
        %v2021 = vpop.f32.mrb[0].mxu0
        %2022 = vmatprep.mubr.bf16.mxu0 0
        %2023 = vmatmul.mubr.bf16.gmra.mrb[0].mxu0 %v1885
        %v2024 = vpop.f32.mrb[0].mxu0
        %v2025 = vadd.f32 0.0, %v2024
        %v2026 = vpop.f32.mrb[0].mxu0
        %v2027 = vpop.f32.mrb[0].mxu0
        %v2028 = vadd.f32 0.0, %v2027
        %v2029 = vpop.f32.mrb[0].mxu0
        %2030 = vmatprep.mubr.bf16.mxu0 0
        %2031 = vmatmul.mubr.bf16.gmra.mrb[0].mxu0 %v1888
        %v2032 = vpop.f32.mrb[0].mxu0
        %v2033 = vadd.f32 0.0, %v2032
        %v2034 = vpop.f32.mrb[0].mxu0
        %v2035 = vpop.f32.mrb[0].mxu0
        %v2036 = vadd.f32 0.0, %v2035
        %v2037 = vpop.f32.mrb[0].mxu0
        %2038 = vmatprep.mubr.bf16.mxu0 0
        %2039 = vmatmul.mubr.bf16.gmra.mrb[0].mxu0 %v1891
        %v2040 = vpop.f32.mrb[0].mxu0
        %v2041 = vadd.f32 0.0, %v2040
        %v2042 = vpop.f32.mrb[0].mxu0
        %v2043 = vpop.f32.mrb[0].mxu0
        %v2044 = vadd.f32 0.0, %v2043
        %v2045 = vpop.f32.mrb[0].mxu0
        %2046 = vmatprep.mubr.bf16.mxu0 0
        %2047 = vmatmul.mubr.bf16.gmra.mrb[0].mxu0 %v1894
        %v2048 = vpop.f32.mrb[0].mxu0
        %v2049 = vadd.f32 0.0, %v2048
        %v2050 = vpop.f32.mrb[0].mxu0
        %v2051 = vpop.f32.mrb[0].mxu0
        %v2052 = vadd.f32 0.0, %v2051
        %v2053 = vpop.f32.mrb[0].mxu0
        %2054 = vmatprep.mubr.bf16.mxu0 0
        %2055 = vmatmul.mubr.bf16.gmra.mrb[0].mxu0 %v1897
        %v2056 = vpop.f32.mrb[0].mxu0
        %v2057 = vadd.f32 0.0, %v2056
        %v2058 = vpop.f32.mrb[0].mxu0
        %v2059 = vpop.f32.mrb[0].mxu0
        %v2060 = vadd.f32 0.0, %v2059
        %v2061 = vpop.f32.mrb[0].mxu0
        %2062 = vdwg.mxu0
        %v2063 = vadd.f32 %v1801, %v1937
        %v2064 = vadd.f32 %v1802, %v1940
        %v2065 = vadd.f32 %v1803, %v1945
        %v2066 = vadd.f32 %v1804, %v1948
        %v2067 = vadd.f32 %v1805, %v1953
        %v2068 = vadd.f32 %v1806, %v1956
        %v2069 = vadd.f32 %v1807, %v1961
        %v2070 = vadd.f32 %v1808, %v1964
        %v2071 = vadd.f32 %v1809, %v1969
        %v2072 = vadd.f32 %v1810, %v1972
        %v2073 = vadd.f32 %v1811, %v1977
        %v2074 = vadd.f32 %v1812, %v1980
        %v2075 = vadd.f32 %v1813, %v1985
        %v2076 = vadd.f32 %v1814, %v1988
        %v2077 = vadd.f32 %v1815, %v1993
        %v2078 = vadd.f32 %v1816, %v1996
        %v2079 = vadd.f32 %v1817, %v2001
        %v2080 = vadd.f32 %v1818, %v2004
        %v2081 = vadd.f32 %v1819, %v2009
        %v2082 = vadd.f32 %v1820, %v2012
        %v2083 = vadd.f32 %v1821, %v2017
        %v2084 = vadd.f32 %v1822, %v2020
        %v2085 = vadd.f32 %v1823, %v2025
        %v2086 = vadd.f32 %v1824, %v2028
        %v2087 = vadd.f32 %v1825, %v2033
        %v2088 = vadd.f32 %v1826, %v2036
        %v2089 = vadd.f32 %v1827, %v2041
        %v2090 = vadd.f32 %v1828, %v2044
        %v2091 = vadd.f32 %v1829, %v2049
        %v2092 = vadd.f32 %v1830, %v2052
        %v2093 = vadd.f32 %v1831, %v2057
        %v2094 = vadd.f32 %v1832, %v2060
        %v2095 = vld [vmem:[%s815] sm:$0xff]
        %v2096 = vld [vmem:[%s815 + $0x8] sm:$0xff]
        %v2097 = vld [vmem:[%s815 + $0x10] sm:$0xff]
        %v2098 = vld [vmem:[%s815 + $0x18] sm:$0xff]
        %v2099 = vld [vmem:[%s815 + $0x20] sm:$0xff]
        %v2100 = vld [vmem:[%s815 + $0x28] sm:$0xff]
        %v2101 = vld [vmem:[%s815 + $0x30] sm:$0xff]
        %v2102 = vld [vmem:[%s815 + $0x38] sm:$0xff]
        %v2103 = vld [vmem:[%s815 + $0x40] sm:$0xff]
        %v2104 = vld [vmem:[%s815 + $0x48] sm:$0xff]
        %v2105 = vld [vmem:[%s815 + $0x50] sm:$0xff]
        %v2106 = vld [vmem:[%s815 + $0x58] sm:$0xff]
        %v2107 = vld [vmem:[%s815 + $0x60] sm:$0xff]
        %v2108 = vld [vmem:[%s815 + $0x68] sm:$0xff]
        %v2109 = vld [vmem:[%s815 + $0x70] sm:$0xff]
        %v2110 = vld [vmem:[%s815 + $0x78] sm:$0xff]
        %s2111 = scalar_lea.vmem %s3, 16
        %v2112 = vld [vmem:[%s2111] sm:$0xf]
        %v2114 = vsel %vm298, %v2095, 0
        %v2117 = vsel %vm298, %v2096, 0
        %v2120 = vsel %vm298, %v2097, 0
        %v2123 = vsel %vm298, %v2098, 0
        %v2126 = vsel %vm298, %v2099, 0
        %v2129 = vsel %vm298, %v2100, 0
        %v2132 = vsel %vm298, %v2101, 0
        %v2135 = vsel %vm298, %v2102, 0
        %v2138 = vsel %vm298, %v2103, 0
        %v2141 = vsel %vm298, %v2104, 0
        %v2144 = vsel %vm298, %v2105, 0
        %v2147 = vsel %vm298, %v2106, 0
        %v2150 = vsel %vm298, %v2107, 0
        %v2153 = vsel %vm298, %v2108, 0
        %v2156 = vsel %vm298, %v2109, 0
        %v2159 = vsel %vm298, %v2110, 0
        %v2162 = vsel %vm1194, %v2112, 0
        %2164 = vmatprep.subr.bf16.mxu0 0
        %2165 = vmatpush1.bf16.msra.mxu0 %v2162
        %2166 = vmatprep.subr.bf16.mxu0 0
        %2167 = vmatpush1.bf16.msra.mxu0 0
        %2168 = vmatprep.subr.bf16.mxu0 0
        %2169 = vmatpush1.bf16.msra.mxu0 0
        %2170 = vmatprep.subr.bf16.mxu0 0
        %2171 = vmatpush1.bf16.msra.mxu0 0
        %2172 = vmatprep.subr.bf16.mxu0 0
        %2173 = vmatpush1.bf16.msra.mxu0 0
        %2174 = vmatprep.subr.bf16.mxu0 0
        %2175 = vmatpush1.bf16.msra.mxu0 0
        %2176 = vmatprep.subr.bf16.mxu0 0
        %2177 = vmatpush1.bf16.msra.mxu0 0
        %2178 = vmatprep.subr.bf16.mxu0 0
        %2179 = vmatpush1.bf16.msra.mxu0 0
        %2180 = vmatprep.subr.bf16.mxu0 0
        %2181 = vmatpush1.bf16.msra.mxu0 0
        %2182 = vmatprep.subr.bf16.mxu0 0
        %2183 = vmatpush1.bf16.msra.mxu0 0
        %2184 = vmatprep.subr.bf16.mxu0 0
        %2185 = vmatpush1.bf16.msra.mxu0 0
        %2186 = vmatprep.subr.bf16.mxu0 0
        %2187 = vmatpush1.bf16.msra.mxu0 0
        %2188 = vmatprep.subr.bf16.mxu0 0
        %2189 = vmatpush1.bf16.msra.mxu0 0
        %2190 = vmatprep.subr.bf16.mxu0 0
        %2191 = vmatpush1.bf16.msra.mxu0 0
        %2192 = vmatprep.subr.bf16.mxu0 0
        %2193 = vmatpush1.bf16.msra.mxu0 0
        %2194 = vmatprep.subr.bf16.mxu0 0
        %2195 = vmatpush1.bf16.msra.mxu0 0
        %2196 = vmatprep.mubr.bf16.mxu0 0
        %2197 = vmatmul.mubr.bf16.gmra.mrb[0].mxu0 %v2114
        %v2198 = vpop.f32.mrb[0].mxu0
        %v2199 = vadd.f32 0.0, %v2198
        %v2200 = vpop.f32.mrb[0].mxu0
        %v2201 = vpop.f32.mrb[0].mxu0
        %v2202 = vadd.f32 0.0, %v2201
        %v2203 = vpop.f32.mrb[0].mxu0
        %2204 = vmatprep.mubr.bf16.mxu0 0
        %2205 = vmatmul.mubr.bf16.gmra.mrb[0].mxu0 %v2117
        %v2206 = vpop.f32.mrb[0].mxu0
        %v2207 = vadd.f32 0.0, %v2206
        %v2208 = vpop.f32.mrb[0].mxu0
        %v2209 = vpop.f32.mrb[0].mxu0
        %v2210 = vadd.f32 0.0, %v2209
        %v2211 = vpop.f32.mrb[0].mxu0
        %2212 = vmatprep.mubr.bf16.mxu0 0
        %2213 = vmatmul.mubr.bf16.gmra.mrb[0].mxu0 %v2120
        %v2214 = vpop.f32.mrb[0].mxu0
        %v2215 = vadd.f32 0.0, %v2214
        %v2216 = vpop.f32.mrb[0].mxu0
        %v2217 = vpop.f32.mrb[0].mxu0
        %v2218 = vadd.f32 0.0, %v2217
        %v2219 = vpop.f32.mrb[0].mxu0
        %2220 = vmatprep.mubr.bf16.mxu0 0
        %2221 = vmatmul.mubr.bf16.gmra.mrb[0].mxu0 %v2123
        %v2222 = vpop.f32.mrb[0].mxu0
        %v2223 = vadd.f32 0.0, %v2222
        %v2224 = vpop.f32.mrb[0].mxu0
        %v2225 = vpop.f32.mrb[0].mxu0
        %v2226 = vadd.f32 0.0, %v2225
        %v2227 = vpop.f32.mrb[0].mxu0
        %2228 = vmatprep.mubr.bf16.mxu0 0
        %2229 = vmatmul.mubr.bf16.gmra.mrb[0].mxu0 %v2126
        %v2230 = vpop.f32.mrb[0].mxu0
        %v2231 = vadd.f32 0.0, %v2230
        %v2232 = vpop.f32.mrb[0].mxu0
        %v2233 = vpop.f32.mrb[0].mxu0
        %v2234 = vadd.f32 0.0, %v2233
        %v2235 = vpop.f32.mrb[0].mxu0
        %2236 = vmatprep.mubr.bf16.mxu0 0
        %2237 = vmatmul.mubr.bf16.gmra.mrb[0].mxu0 %v2129
        %v2238 = vpop.f32.mrb[0].mxu0
        %v2239 = vadd.f32 0.0, %v2238
        %v2240 = vpop.f32.mrb[0].mxu0
        %v2241 = vpop.f32.mrb[0].mxu0
        %v2242 = vadd.f32 0.0, %v2241
        %v2243 = vpop.f32.mrb[0].mxu0
        %2244 = vmatprep.mubr.bf16.mxu0 0
        %2245 = vmatmul.mubr.bf16.gmra.mrb[0].mxu0 %v2132
        %v2246 = vpop.f32.mrb[0].mxu0
        %v2247 = vadd.f32 0.0, %v2246
        %v2248 = vpop.f32.mrb[0].mxu0
        %v2249 = vpop.f32.mrb[0].mxu0
        %v2250 = vadd.f32 0.0, %v2249
        %v2251 = vpop.f32.mrb[0].mxu0
        %2252 = vmatprep.mubr.bf16.mxu0 0
        %2253 = vmatmul.mubr.bf16.gmra.mrb[0].mxu0 %v2135
        %v2254 = vpop.f32.mrb[0].mxu0
        %v2255 = vadd.f32 0.0, %v2254
        %v2256 = vpop.f32.mrb[0].mxu0
        %v2257 = vpop.f32.mrb[0].mxu0
        %v2258 = vadd.f32 0.0, %v2257
        %v2259 = vpop.f32.mrb[0].mxu0
        %2260 = vmatprep.mubr.bf16.mxu0 0
        %2261 = vmatmul.mubr.bf16.gmra.mrb[0].mxu0 %v2138
        %v2262 = vpop.f32.mrb[0].mxu0
        %v2263 = vadd.f32 0.0, %v2262
        %v2264 = vpop.f32.mrb[0].mxu0
        %v2265 = vpop.f32.mrb[0].mxu0
        %v2266 = vadd.f32 0.0, %v2265
        %v2267 = vpop.f32.mrb[0].mxu0
        %2268 = vmatprep.mubr.bf16.mxu0 0
        %2269 = vmatmul.mubr.bf16.gmra.mrb[0].mxu0 %v2141
        %v2270 = vpop.f32.mrb[0].mxu0
        %v2271 = vadd.f32 0.0, %v2270
        %v2272 = vpop.f32.mrb[0].mxu0
        %v2273 = vpop.f32.mrb[0].mxu0
        %v2274 = vadd.f32 0.0, %v2273
        %v2275 = vpop.f32.mrb[0].mxu0
        %2276 = vmatprep.mubr.bf16.mxu0 0
        %2277 = vmatmul.mubr.bf16.gmra.mrb[0].mxu0 %v2144
        %v2278 = vpop.f32.mrb[0].mxu0
        %v2279 = vadd.f32 0.0, %v2278
        %v2280 = vpop.f32.mrb[0].mxu0
        %v2281 = vpop.f32.mrb[0].mxu0
        %v2282 = vadd.f32 0.0, %v2281
        %v2283 = vpop.f32.mrb[0].mxu0
        %2284 = vmatprep.mubr.bf16.mxu0 0
        %2285 = vmatmul.mubr.bf16.gmra.mrb[0].mxu0 %v2147
        %v2286 = vpop.f32.mrb[0].mxu0
        %v2287 = vadd.f32 0.0, %v2286
        %v2288 = vpop.f32.mrb[0].mxu0
        %v2289 = vpop.f32.mrb[0].mxu0
        %v2290 = vadd.f32 0.0, %v2289
        %v2291 = vpop.f32.mrb[0].mxu0
        %2292 = vmatprep.mubr.bf16.mxu0 0
        %2293 = vmatmul.mubr.bf16.gmra.mrb[0].mxu0 %v2150
        %v2294 = vpop.f32.mrb[0].mxu0
        %v2295 = vadd.f32 0.0, %v2294
        %v2296 = vpop.f32.mrb[0].mxu0
        %v2297 = vpop.f32.mrb[0].mxu0
        %v2298 = vadd.f32 0.0, %v2297
        %v2299 = vpop.f32.mrb[0].mxu0
        %2300 = vmatprep.mubr.bf16.mxu0 0
        %2301 = vmatmul.mubr.bf16.gmra.mrb[0].mxu0 %v2153
        %v2302 = vpop.f32.mrb[0].mxu0
        %v2303 = vadd.f32 0.0, %v2302
        %v2304 = vpop.f32.mrb[0].mxu0
        %v2305 = vpop.f32.mrb[0].mxu0
        %v2306 = vadd.f32 0.0, %v2305
        %v2307 = vpop.f32.mrb[0].mxu0
        %2308 = vmatprep.mubr.bf16.mxu0 0
        %2309 = vmatmul.mubr.bf16.gmra.mrb[0].mxu0 %v2156
        %v2310 = vpop.f32.mrb[0].mxu0
        %v2311 = vadd.f32 0.0, %v2310
        %v2312 = vpop.f32.mrb[0].mxu0
        %v2313 = vpop.f32.mrb[0].mxu0
        %v2314 = vadd.f32 0.0, %v2313
        %v2315 = vpop.f32.mrb[0].mxu0
        %2316 = vmatprep.mubr.bf16.mxu0 0
        %2317 = vmatmul.mubr.bf16.gmra.mrb[0].mxu0 %v2159
        %v2318 = vpop.f32.mrb[0].mxu0
        %v2319 = vadd.f32 0.0, %v2318
        %v2320 = vpop.f32.mrb[0].mxu0
        %v2321 = vpop.f32.mrb[0].mxu0
        %v2322 = vadd.f32 0.0, %v2321
        %v2323 = vpop.f32.mrb[0].mxu0
        %2324 = vdwg.mxu0
        %v2325 = vadd.f32 %v2063, %v2199
        %v2326 = vadd.f32 %v2064, %v2202
        %v2327 = vadd.f32 %v2065, %v2207
        %v2328 = vadd.f32 %v2066, %v2210
        %v2329 = vadd.f32 %v2067, %v2215
        %v2330 = vadd.f32 %v2068, %v2218
        %v2331 = vadd.f32 %v2069, %v2223
        %v2332 = vadd.f32 %v2070, %v2226
        %v2333 = vadd.f32 %v2071, %v2231
        %v2334 = vadd.f32 %v2072, %v2234
        %v2335 = vadd.f32 %v2073, %v2239
        %v2336 = vadd.f32 %v2074, %v2242
        %v2337 = vadd.f32 %v2075, %v2247
        %v2338 = vadd.f32 %v2076, %v2250
        %v2339 = vadd.f32 %v2077, %v2255
        %v2340 = vadd.f32 %v2078, %v2258
        %v2341 = vadd.f32 %v2079, %v2263
        %v2342 = vadd.f32 %v2080, %v2266
        %v2343 = vadd.f32 %v2081, %v2271
        %v2344 = vadd.f32 %v2082, %v2274
        %v2345 = vadd.f32 %v2083, %v2279
        %v2346 = vadd.f32 %v2084, %v2282
        %v2347 = vadd.f32 %v2085, %v2287
        %v2348 = vadd.f32 %v2086, %v2290
        %v2349 = vadd.f32 %v2087, %v2295
        %v2350 = vadd.f32 %v2088, %v2298
        %v2351 = vadd.f32 %v2089, %v2303
        %v2352 = vadd.f32 %v2090, %v2306
        %v2353 = vadd.f32 %v2091, %v2311
        %v2354 = vadd.f32 %v2092, %v2314
        %v2355 = vadd.f32 %v2093, %v2319
        %v2356 = vadd.f32 %v2094, %v2322
        %v2357 = vld [vmem:[%s1060] sm:$0xff]
        %v2358 = vld [vmem:[%s1060 + $0x8] sm:$0xff]
        %v2359 = vld [vmem:[%s1060 + $0x10] sm:$0xff]
        %v2360 = vld [vmem:[%s1060 + $0x18] sm:$0xff]
        %v2361 = vld [vmem:[%s1060 + $0x20] sm:$0xff]
        %v2362 = vld [vmem:[%s1060 + $0x28] sm:$0xff]
        %v2363 = vld [vmem:[%s1060 + $0x30] sm:$0xff]
        %v2364 = vld [vmem:[%s1060 + $0x38] sm:$0xff]
        %v2365 = vld [vmem:[%s1060 + $0x40] sm:$0xff]
        %v2366 = vld [vmem:[%s1060 + $0x48] sm:$0xff]
        %v2367 = vld [vmem:[%s1060 + $0x50] sm:$0xff]
        %v2368 = vld [vmem:[%s1060 + $0x58] sm:$0xff]
        %v2369 = vld [vmem:[%s1060 + $0x60] sm:$0xff]
        %v2370 = vld [vmem:[%s1060 + $0x68] sm:$0xff]
        %v2371 = vld [vmem:[%s1060 + $0x70] sm:$0xff]
        %v2372 = vld [vmem:[%s1060 + $0x78] sm:$0xff]
        %s2373 = scalar_lea.vmem %s3, 20
        %v2374 = vld [vmem:[%s2373] sm:$0xf]
        %v2376 = vsel %vm298, %v2357, 0
        %v2379 = vsel %vm298, %v2358, 0
        %v2382 = vsel %vm298, %v2359, 0
        %v2385 = vsel %vm298, %v2360, 0
        %v2388 = vsel %vm298, %v2361, 0
        %v2391 = vsel %vm298, %v2362, 0
        %v2394 = vsel %vm298, %v2363, 0
        %v2397 = vsel %vm298, %v2364, 0
        %v2400 = vsel %vm298, %v2365, 0
        %v2403 = vsel %vm298, %v2366, 0
        %v2406 = vsel %vm298, %v2367, 0
        %v2409 = vsel %vm298, %v2368, 0
        %v2412 = vsel %vm298, %v2369, 0
        %v2415 = vsel %vm298, %v2370, 0
        %v2418 = vsel %vm298, %v2371, 0
        %v2421 = vsel %vm298, %v2372, 0
        %v2424 = vsel %vm1194, %v2374, 0
        %2426 = vmatprep.subr.bf16.mxu0 0
        %2427 = vmatpush1.bf16.msra.mxu0 %v2424
        %2428 = vmatprep.subr.bf16.mxu0 0
        %2429 = vmatpush1.bf16.msra.mxu0 0
        %2430 = vmatprep.subr.bf16.mxu0 0
        %2431 = vmatpush1.bf16.msra.mxu0 0
        %2432 = vmatprep.subr.bf16.mxu0 0
        %2433 = vmatpush1.bf16.msra.mxu0 0
        %2434 = vmatprep.subr.bf16.mxu0 0
        %2435 = vmatpush1.bf16.msra.mxu0 0
        %2436 = vmatprep.subr.bf16.mxu0 0
        %2437 = vmatpush1.bf16.msra.mxu0 0
        %2438 = vmatprep.subr.bf16.mxu0 0
        %2439 = vmatpush1.bf16.msra.mxu0 0
        %2440 = vmatprep.subr.bf16.mxu0 0
        %2441 = vmatpush1.bf16.msra.mxu0 0
        %2442 = vmatprep.subr.bf16.mxu0 0
        %2443 = vmatpush1.bf16.msra.mxu0 0
        %2444 = vmatprep.subr.bf16.mxu0 0
        %2445 = vmatpush1.bf16.msra.mxu0 0
        %2446 = vmatprep.subr.bf16.mxu0 0
        %2447 = vmatpush1.bf16.msra.mxu0 0
        %2448 = vmatprep.subr.bf16.mxu0 0
        %2449 = vmatpush1.bf16.msra.mxu0 0
        %2450 = vmatprep.subr.bf16.mxu0 0
        %2451 = vmatpush1.bf16.msra.mxu0 0
        %2452 = vmatprep.subr.bf16.mxu0 0
        %2453 = vmatpush1.bf16.msra.mxu0 0
        %2454 = vmatprep.subr.bf16.mxu0 0
        %2455 = vmatpush1.bf16.msra.mxu0 0
        %2456 = vmatprep.subr.bf16.mxu0 0
        %2457 = vmatpush1.bf16.msra.mxu0 0
        %2458 = vmatprep.mubr.bf16.mxu0 0
        %2459 = vmatmul.mubr.bf16.gmra.mrb[0].mxu0 %v2376
        %v2460 = vpop.f32.mrb[0].mxu0
        %v2461 = vadd.f32 0.0, %v2460
        %v2462 = vpop.f32.mrb[0].mxu0
        %v2463 = vpop.f32.mrb[0].mxu0
        %v2464 = vadd.f32 0.0, %v2463
        %v2465 = vpop.f32.mrb[0].mxu0
        %2466 = vmatprep.mubr.bf16.mxu0 0
        %2467 = vmatmul.mubr.bf16.gmra.mrb[0].mxu0 %v2379
        %v2468 = vpop.f32.mrb[0].mxu0
        %v2469 = vadd.f32 0.0, %v2468
        %v2470 = vpop.f32.mrb[0].mxu0
        %v2471 = vpop.f32.mrb[0].mxu0
        %v2472 = vadd.f32 0.0, %v2471
        %v2473 = vpop.f32.mrb[0].mxu0
        %2474 = vmatprep.mubr.bf16.mxu0 0
        %2475 = vmatmul.mubr.bf16.gmra.mrb[0].mxu0 %v2382
        %v2476 = vpop.f32.mrb[0].mxu0
        %v2477 = vadd.f32 0.0, %v2476
        %v2478 = vpop.f32.mrb[0].mxu0
        %v2479 = vpop.f32.mrb[0].mxu0
        %v2480 = vadd.f32 0.0, %v2479
        %v2481 = vpop.f32.mrb[0].mxu0
        %2482 = vmatprep.mubr.bf16.mxu0 0
        %2483 = vmatmul.mubr.bf16.gmra.mrb[0].mxu0 %v2385
        %v2484 = vpop.f32.mrb[0].mxu0
        %v2485 = vadd.f32 0.0, %v2484
        %v2486 = vpop.f32.mrb[0].mxu0
        %v2487 = vpop.f32.mrb[0].mxu0
        %v2488 = vadd.f32 0.0, %v2487
        %v2489 = vpop.f32.mrb[0].mxu0
        %2490 = vmatprep.mubr.bf16.mxu0 0
        %2491 = vmatmul.mubr.bf16.gmra.mrb[0].mxu0 %v2388
        %v2492 = vpop.f32.mrb[0].mxu0
        %v2493 = vadd.f32 0.0, %v2492
        %v2494 = vpop.f32.mrb[0].mxu0
        %v2495 = vpop.f32.mrb[0].mxu0
        %v2496 = vadd.f32 0.0, %v2495
        %v2497 = vpop.f32.mrb[0].mxu0
        %2498 = vmatprep.mubr.bf16.mxu0 0
        %2499 = vmatmul.mubr.bf16.gmra.mrb[0].mxu0 %v2391
        %v2500 = vpop.f32.mrb[0].mxu0
        %v2501 = vadd.f32 0.0, %v2500
        %v2502 = vpop.f32.mrb[0].mxu0
        %v2503 = vpop.f32.mrb[0].mxu0
        %v2504 = vadd.f32 0.0, %v2503
        %v2505 = vpop.f32.mrb[0].mxu0
        %2506 = vmatprep.mubr.bf16.mxu0 0
        %2507 = vmatmul.mubr.bf16.gmra.mrb[0].mxu0 %v2394
        %v2508 = vpop.f32.mrb[0].mxu0
        %v2509 = vadd.f32 0.0, %v2508
        %v2510 = vpop.f32.mrb[0].mxu0
        %v2511 = vpop.f32.mrb[0].mxu0
        %v2512 = vadd.f32 0.0, %v2511
        %v2513 = vpop.f32.mrb[0].mxu0
        %2514 = vmatprep.mubr.bf16.mxu0 0
        %2515 = vmatmul.mubr.bf16.gmra.mrb[0].mxu0 %v2397
        %v2516 = vpop.f32.mrb[0].mxu0
        %v2517 = vadd.f32 0.0, %v2516
        %v2518 = vpop.f32.mrb[0].mxu0
        %v2519 = vpop.f32.mrb[0].mxu0
        %v2520 = vadd.f32 0.0, %v2519
        %v2521 = vpop.f32.mrb[0].mxu0
        %2522 = vmatprep.mubr.bf16.mxu0 0
        %2523 = vmatmul.mubr.bf16.gmra.mrb[0].mxu0 %v2400
        %v2524 = vpop.f32.mrb[0].mxu0
        %v2525 = vadd.f32 0.0, %v2524
        %v2526 = vpop.f32.mrb[0].mxu0
        %v2527 = vpop.f32.mrb[0].mxu0
        %v2528 = vadd.f32 0.0, %v2527
        %v2529 = vpop.f32.mrb[0].mxu0
        %2530 = vmatprep.mubr.bf16.mxu0 0
        %2531 = vmatmul.mubr.bf16.gmra.mrb[0].mxu0 %v2403
        %v2532 = vpop.f32.mrb[0].mxu0
        %v2533 = vadd.f32 0.0, %v2532
        %v2534 = vpop.f32.mrb[0].mxu0
        %v2535 = vpop.f32.mrb[0].mxu0
        %v2536 = vadd.f32 0.0, %v2535
        %v2537 = vpop.f32.mrb[0].mxu0
        %2538 = vmatprep.mubr.bf16.mxu0 0
        %2539 = vmatmul.mubr.bf16.gmra.mrb[0].mxu0 %v2406
        %v2540 = vpop.f32.mrb[0].mxu0
        %v2541 = vadd.f32 0.0, %v2540
        %v2542 = vpop.f32.mrb[0].mxu0
        %v2543 = vpop.f32.mrb[0].mxu0
        %v2544 = vadd.f32 0.0, %v2543
        %v2545 = vpop.f32.mrb[0].mxu0
        %2546 = vmatprep.mubr.bf16.mxu0 0
        %2547 = vmatmul.mubr.bf16.gmra.mrb[0].mxu0 %v2409
        %v2548 = vpop.f32.mrb[0].mxu0
        %v2549 = vadd.f32 0.0, %v2548
        %v2550 = vpop.f32.mrb[0].mxu0
        %v2551 = vpop.f32.mrb[0].mxu0
        %v2552 = vadd.f32 0.0, %v2551
        %v2553 = vpop.f32.mrb[0].mxu0
        %2554 = vmatprep.mubr.bf16.mxu0 0
        %2555 = vmatmul.mubr.bf16.gmra.mrb[0].mxu0 %v2412
        %v2556 = vpop.f32.mrb[0].mxu0
        %v2557 = vadd.f32 0.0, %v2556
        %v2558 = vpop.f32.mrb[0].mxu0
        %v2559 = vpop.f32.mrb[0].mxu0
        %v2560 = vadd.f32 0.0, %v2559
        %v2561 = vpop.f32.mrb[0].mxu0
        %2562 = vmatprep.mubr.bf16.mxu0 0
        %2563 = vmatmul.mubr.bf16.gmra.mrb[0].mxu0 %v2415
        %v2564 = vpop.f32.mrb[0].mxu0
        %v2565 = vadd.f32 0.0, %v2564
        %v2566 = vpop.f32.mrb[0].mxu0
        %v2567 = vpop.f32.mrb[0].mxu0
        %v2568 = vadd.f32 0.0, %v2567
        %v2569 = vpop.f32.mrb[0].mxu0
        %2570 = vmatprep.mubr.bf16.mxu0 0
        %2571 = vmatmul.mubr.bf16.gmra.mrb[0].mxu0 %v2418
        %v2572 = vpop.f32.mrb[0].mxu0
        %v2573 = vadd.f32 0.0, %v2572
        %v2574 = vpop.f32.mrb[0].mxu0
        %v2575 = vpop.f32.mrb[0].mxu0
        %v2576 = vadd.f32 0.0, %v2575
        %v2577 = vpop.f32.mrb[0].mxu0
        %2578 = vmatprep.mubr.bf16.mxu0 0
        %2579 = vmatmul.mubr.bf16.gmra.mrb[0].mxu0 %v2421
        %v2580 = vpop.f32.mrb[0].mxu0
        %v2581 = vadd.f32 0.0, %v2580
        %v2582 = vpop.f32.mrb[0].mxu0
        %v2583 = vpop.f32.mrb[0].mxu0
        %v2584 = vadd.f32 0.0, %v2583
        %v2585 = vpop.f32.mrb[0].mxu0
        %2586 = vdwg.mxu0
        %v2587 = vadd.f32 %v2325, %v2461
        %v2588 = vadd.f32 %v2326, %v2464
        %v2589 = vadd.f32 %v2327, %v2469
        %v2590 = vadd.f32 %v2328, %v2472
        %v2591 = vadd.f32 %v2329, %v2477
        %v2592 = vadd.f32 %v2330, %v2480
        %v2593 = vadd.f32 %v2331, %v2485
        %v2594 = vadd.f32 %v2332, %v2488
        %v2595 = vadd.f32 %v2333, %v2493
        %v2596 = vadd.f32 %v2334, %v2496
        %v2597 = vadd.f32 %v2335, %v2501
        %v2598 = vadd.f32 %v2336, %v2504
        %v2599 = vadd.f32 %v2337, %v2509
        %v2600 = vadd.f32 %v2338, %v2512
        %v2601 = vadd.f32 %v2339, %v2517
        %v2602 = vadd.f32 %v2340, %v2520
        %v2603 = vadd.f32 %v2341, %v2525
        %v2604 = vadd.f32 %v2342, %v2528
        %v2605 = vadd.f32 %v2343, %v2533
        %v2606 = vadd.f32 %v2344, %v2536
        %v2607 = vadd.f32 %v2345, %v2541
        %v2608 = vadd.f32 %v2346, %v2544
        %v2609 = vadd.f32 %v2347, %v2549
        %v2610 = vadd.f32 %v2348, %v2552
        %v2611 = vadd.f32 %v2349, %v2557
        %v2612 = vadd.f32 %v2350, %v2560
        %v2613 = vadd.f32 %v2351, %v2565
        %v2614 = vadd.f32 %v2352, %v2568
        %v2615 = vadd.f32 %v2353, %v2573
        %v2616 = vadd.f32 %v2354, %v2576
        %v2617 = vadd.f32 %v2355, %v2581
        %v2618 = vadd.f32 %v2356, %v2584
        %s2619 = scalar_lea.vmem [#allocation2], 16
        %v2620 = vld [vmem:[%s2619] sm:$0xff]
        %v2621 = vld [vmem:[%s2619 + $0x8] sm:$0xff]
        %v2622 = vld [vmem:[%s2619 + $0x10] sm:$0xff]
        %v2623 = vld [vmem:[%s2619 + $0x18] sm:$0xff]
        %v2624 = vld [vmem:[%s2619 + $0x20] sm:$0xff]
        %v2625 = vld [vmem:[%s2619 + $0x28] sm:$0xff]
        %v2626 = vld [vmem:[%s2619 + $0x30] sm:$0xff]
        %v2627 = vld [vmem:[%s2619 + $0x38] sm:$0xff]
        %v2628 = vld [vmem:[%s2619 + $0x40] sm:$0xff]
        %v2629 = vld [vmem:[%s2619 + $0x48] sm:$0xff]
        %v2630 = vld [vmem:[%s2619 + $0x50] sm:$0xff]
        %v2631 = vld [vmem:[%s2619 + $0x58] sm:$0xff]
        %v2632 = vld [vmem:[%s2619 + $0x60] sm:$0xff]
        %v2633 = vld [vmem:[%s2619 + $0x68] sm:$0xff]
        %v2634 = vld [vmem:[%s2619 + $0x70] sm:$0xff]
        %v2635 = vld [vmem:[%s2619 + $0x78] sm:$0xff]
        %s2636 = scalar_lea.vmem %s3, 24
        %v2637 = vld [vmem:[%s2636] sm:$0xf]
        %v2639 = vsel %vm298, %v2620, 0
        %v2642 = vsel %vm298, %v2621, 0
        %v2645 = vsel %vm298, %v2622, 0
        %v2648 = vsel %vm298, %v2623, 0
        %v2651 = vsel %vm298, %v2624, 0
        %v2654 = vsel %vm298, %v2625, 0
        %v2657 = vsel %vm298, %v2626, 0
        %v2660 = vsel %vm298, %v2627, 0
        %v2663 = vsel %vm298, %v2628, 0
        %v2666 = vsel %vm298, %v2629, 0
        %v2669 = vsel %vm298, %v2630, 0
        %v2672 = vsel %vm298, %v2631, 0
        %v2675 = vsel %vm298, %v2632, 0
        %v2678 = vsel %vm298, %v2633, 0
        %v2681 = vsel %vm298, %v2634, 0
        %v2684 = vsel %vm298, %v2635, 0
        %v2687 = vsel %vm1194, %v2637, 0
        %2689 = vmatprep.subr.bf16.mxu0 0
        %2690 = vmatpush1.bf16.msra.mxu0 %v2687
        %2691 = vmatprep.subr.bf16.mxu0 0
        %2692 = vmatpush1.bf16.msra.mxu0 0
        %2693 = vmatprep.subr.bf16.mxu0 0
        %2694 = vmatpush1.bf16.msra.mxu0 0
        %2695 = vmatprep.subr.bf16.mxu0 0
        %2696 = vmatpush1.bf16.msra.mxu0 0
        %2697 = vmatprep.subr.bf16.mxu0 0
        %2698 = vmatpush1.bf16.msra.mxu0 0
        %2699 = vmatprep.subr.bf16.mxu0 0
        %2700 = vmatpush1.bf16.msra.mxu0 0
        %2701 = vmatprep.subr.bf16.mxu0 0
        %2702 = vmatpush1.bf16.msra.mxu0 0
        %2703 = vmatprep.subr.bf16.mxu0 0
        %2704 = vmatpush1.bf16.msra.mxu0 0
        %2705 = vmatprep.subr.bf16.mxu0 0
        %2706 = vmatpush1.bf16.msra.mxu0 0
        %2707 = vmatprep.subr.bf16.mxu0 0
        %2708 = vmatpush1.bf16.msra.mxu0 0
        %2709 = vmatprep.subr.bf16.mxu0 0
        %2710 = vmatpush1.bf16.msra.mxu0 0
        %2711 = vmatprep.subr.bf16.mxu0 0
        %2712 = vmatpush1.bf16.msra.mxu0 0
        %2713 = vmatprep.subr.bf16.mxu0 0
        %2714 = vmatpush1.bf16.msra.mxu0 0
        %2715 = vmatprep.subr.bf16.mxu0 0
        %2716 = vmatpush1.bf16.msra.mxu0 0
        %2717 = vmatprep.subr.bf16.mxu0 0
        %2718 = vmatpush1.bf16.msra.mxu0 0
        %2719 = vmatprep.subr.bf16.mxu0 0
        %2720 = vmatpush1.bf16.msra.mxu0 0
        %2721 = vmatprep.mubr.bf16.mxu0 0
        %2722 = vmatmul.mubr.bf16.gmra.mrb[0].mxu0 %v2639
        %v2723 = vpop.f32.mrb[0].mxu0
        %v2724 = vadd.f32 0.0, %v2723
        %v2725 = vpop.f32.mrb[0].mxu0
        %v2726 = vpop.f32.mrb[0].mxu0
        %v2727 = vadd.f32 0.0, %v2726
        %v2728 = vpop.f32.mrb[0].mxu0
        %2729 = vmatprep.mubr.bf16.mxu0 0
        %2730 = vmatmul.mubr.bf16.gmra.mrb[0].mxu0 %v2642
        %v2731 = vpop.f32.mrb[0].mxu0
        %v2732 = vadd.f32 0.0, %v2731
        %v2733 = vpop.f32.mrb[0].mxu0
        %v2734 = vpop.f32.mrb[0].mxu0
        %v2735 = vadd.f32 0.0, %v2734
        %v2736 = vpop.f32.mrb[0].mxu0
        %2737 = vmatprep.mubr.bf16.mxu0 0
        %2738 = vmatmul.mubr.bf16.gmra.mrb[0].mxu0 %v2645
        %v2739 = vpop.f32.mrb[0].mxu0
        %v2740 = vadd.f32 0.0, %v2739
        %v2741 = vpop.f32.mrb[0].mxu0
        %v2742 = vpop.f32.mrb[0].mxu0
        %v2743 = vadd.f32 0.0, %v2742
        %v2744 = vpop.f32.mrb[0].mxu0
        %2745 = vmatprep.mubr.bf16.mxu0 0
        %2746 = vmatmul.mubr.bf16.gmra.mrb[0].mxu0 %v2648
        %v2747 = vpop.f32.mrb[0].mxu0
        %v2748 = vadd.f32 0.0, %v2747
        %v2749 = vpop.f32.mrb[0].mxu0
        %v2750 = vpop.f32.mrb[0].mxu0
        %v2751 = vadd.f32 0.0, %v2750
        %v2752 = vpop.f32.mrb[0].mxu0
        %2753 = vmatprep.mubr.bf16.mxu0 0
        %2754 = vmatmul.mubr.bf16.gmra.mrb[0].mxu0 %v2651
        %v2755 = vpop.f32.mrb[0].mxu0
        %v2756 = vadd.f32 0.0, %v2755
        %v2757 = vpop.f32.mrb[0].mxu0
        %v2758 = vpop.f32.mrb[0].mxu0
        %v2759 = vadd.f32 0.0, %v2758
        %v2760 = vpop.f32.mrb[0].mxu0
        %2761 = vmatprep.mubr.bf16.mxu0 0
        %2762 = vmatmul.mubr.bf16.gmra.mrb[0].mxu0 %v2654
        %v2763 = vpop.f32.mrb[0].mxu0
        %v2764 = vadd.f32 0.0, %v2763
        %v2765 = vpop.f32.mrb[0].mxu0
        %v2766 = vpop.f32.mrb[0].mxu0
        %v2767 = vadd.f32 0.0, %v2766
        %v2768 = vpop.f32.mrb[0].mxu0
        %2769 = vmatprep.mubr.bf16.mxu0 0
        %2770 = vmatmul.mubr.bf16.gmra.mrb[0].mxu0 %v2657
        %v2771 = vpop.f32.mrb[0].mxu0
        %v2772 = vadd.f32 0.0, %v2771
        %v2773 = vpop.f32.mrb[0].mxu0
        %v2774 = vpop.f32.mrb[0].mxu0
        %v2775 = vadd.f32 0.0, %v2774
        %v2776 = vpop.f32.mrb[0].mxu0
        %2777 = vmatprep.mubr.bf16.mxu0 0
        %2778 = vmatmul.mubr.bf16.gmra.mrb[0].mxu0 %v2660
        %v2779 = vpop.f32.mrb[0].mxu0
        %v2780 = vadd.f32 0.0, %v2779
        %v2781 = vpop.f32.mrb[0].mxu0
        %v2782 = vpop.f32.mrb[0].mxu0
        %v2783 = vadd.f32 0.0, %v2782
        %v2784 = vpop.f32.mrb[0].mxu0
        %2785 = vmatprep.mubr.bf16.mxu0 0
        %2786 = vmatmul.mubr.bf16.gmra.mrb[0].mxu0 %v2663
        %v2787 = vpop.f32.mrb[0].mxu0
        %v2788 = vadd.f32 0.0, %v2787
        %v2789 = vpop.f32.mrb[0].mxu0
        %v2790 = vpop.f32.mrb[0].mxu0
        %v2791 = vadd.f32 0.0, %v2790
        %v2792 = vpop.f32.mrb[0].mxu0
        %2793 = vmatprep.mubr.bf16.mxu0 0
        %2794 = vmatmul.mubr.bf16.gmra.mrb[0].mxu0 %v2666
        %v2795 = vpop.f32.mrb[0].mxu0
        %v2796 = vadd.f32 0.0, %v2795
        %v2797 = vpop.f32.mrb[0].mxu0
        %v2798 = vpop.f32.mrb[0].mxu0
        %v2799 = vadd.f32 0.0, %v2798
        %v2800 = vpop.f32.mrb[0].mxu0
        %2801 = vmatprep.mubr.bf16.mxu0 0
        %2802 = vmatmul.mubr.bf16.gmra.mrb[0].mxu0 %v2669
        %v2803 = vpop.f32.mrb[0].mxu0
        %v2804 = vadd.f32 0.0, %v2803
        %v2805 = vpop.f32.mrb[0].mxu0
        %v2806 = vpop.f32.mrb[0].mxu0
        %v2807 = vadd.f32 0.0, %v2806
        %v2808 = vpop.f32.mrb[0].mxu0
        %2809 = vmatprep.mubr.bf16.mxu0 0
        %2810 = vmatmul.mubr.bf16.gmra.mrb[0].mxu0 %v2672
        %v2811 = vpop.f32.mrb[0].mxu0
        %v2812 = vadd.f32 0.0, %v2811
        %v2813 = vpop.f32.mrb[0].mxu0
        %v2814 = vpop.f32.mrb[0].mxu0
        %v2815 = vadd.f32 0.0, %v2814
        %v2816 = vpop.f32.mrb[0].mxu0
        %2817 = vmatprep.mubr.bf16.mxu0 0
        %2818 = vmatmul.mubr.bf16.gmra.mrb[0].mxu0 %v2675
        %v2819 = vpop.f32.mrb[0].mxu0
        %v2820 = vadd.f32 0.0, %v2819
        %v2821 = vpop.f32.mrb[0].mxu0
        %v2822 = vpop.f32.mrb[0].mxu0
        %v2823 = vadd.f32 0.0, %v2822
        %v2824 = vpop.f32.mrb[0].mxu0
        %2825 = vmatprep.mubr.bf16.mxu0 0
        %2826 = vmatmul.mubr.bf16.gmra.mrb[0].mxu0 %v2678
        %v2827 = vpop.f32.mrb[0].mxu0
        %v2828 = vadd.f32 0.0, %v2827
        %v2829 = vpop.f32.mrb[0].mxu0
        %v2830 = vpop.f32.mrb[0].mxu0
        %v2831 = vadd.f32 0.0, %v2830
        %v2832 = vpop.f32.mrb[0].mxu0
        %2833 = vmatprep.mubr.bf16.mxu0 0
        %2834 = vmatmul.mubr.bf16.gmra.mrb[0].mxu0 %v2681
        %v2835 = vpop.f32.mrb[0].mxu0
        %v2836 = vadd.f32 0.0, %v2835
        %v2837 = vpop.f32.mrb[0].mxu0
        %v2838 = vpop.f32.mrb[0].mxu0
        %v2839 = vadd.f32 0.0, %v2838
        %v2840 = vpop.f32.mrb[0].mxu0
        %2841 = vmatprep.mubr.bf16.mxu0 0
        %2842 = vmatmul.mubr.bf16.gmra.mrb[0].mxu0 %v2684
        %v2843 = vpop.f32.mrb[0].mxu0
        %v2844 = vadd.f32 0.0, %v2843
        %v2845 = vpop.f32.mrb[0].mxu0
        %v2846 = vpop.f32.mrb[0].mxu0
        %v2847 = vadd.f32 0.0, %v2846
        %v2848 = vpop.f32.mrb[0].mxu0
        %2849 = vdwg.mxu0
        %v2850 = vadd.f32 %v2587, %v2724
        %v2851 = vadd.f32 %v2588, %v2727
        %v2852 = vadd.f32 %v2589, %v2732
        %v2853 = vadd.f32 %v2590, %v2735
        %v2854 = vadd.f32 %v2591, %v2740
        %v2855 = vadd.f32 %v2592, %v2743
        %v2856 = vadd.f32 %v2593, %v2748
        %v2857 = vadd.f32 %v2594, %v2751
        %v2858 = vadd.f32 %v2595, %v2756
        %v2859 = vadd.f32 %v2596, %v2759
        %v2860 = vadd.f32 %v2597, %v2764
        %v2861 = vadd.f32 %v2598, %v2767
        %v2862 = vadd.f32 %v2599, %v2772
        %v2863 = vadd.f32 %v2600, %v2775
        %v2864 = vadd.f32 %v2601, %v2780
        %v2865 = vadd.f32 %v2602, %v2783
        %v2866 = vadd.f32 %v2603, %v2788
        %v2867 = vadd.f32 %v2604, %v2791
        %v2868 = vadd.f32 %v2605, %v2796
        %v2869 = vadd.f32 %v2606, %v2799
        %v2870 = vadd.f32 %v2607, %v2804
        %v2871 = vadd.f32 %v2608, %v2807
        %v2872 = vadd.f32 %v2609, %v2812
        %v2873 = vadd.f32 %v2610, %v2815
        %v2874 = vadd.f32 %v2611, %v2820
        %v2875 = vadd.f32 %v2612, %v2823
        %v2876 = vadd.f32 %v2613, %v2828
        %v2877 = vadd.f32 %v2614, %v2831
        %v2878 = vadd.f32 %v2615, %v2836
        %v2879 = vadd.f32 %v2616, %v2839
        %v2880 = vadd.f32 %v2617, %v2844
        %v2881 = vadd.f32 %v2618, %v2847
        %s2882 = scalar_lea.vmem [#allocation3], 16
        %v2883 = vld [vmem:[%s2882] sm:$0xff]
        %v2884 = vld [vmem:[%s2882 + $0x8] sm:$0xff]
        %v2885 = vld [vmem:[%s2882 + $0x10] sm:$0xff]
        %v2886 = vld [vmem:[%s2882 + $0x18] sm:$0xff]
        %v2887 = vld [vmem:[%s2882 + $0x20] sm:$0xff]
        %v2888 = vld [vmem:[%s2882 + $0x28] sm:$0xff]
        %v2889 = vld [vmem:[%s2882 + $0x30] sm:$0xff]
        %v2890 = vld [vmem:[%s2882 + $0x38] sm:$0xff]
        %v2891 = vld [vmem:[%s2882 + $0x40] sm:$0xff]
        %v2892 = vld [vmem:[%s2882 + $0x48] sm:$0xff]
        %v2893 = vld [vmem:[%s2882 + $0x50] sm:$0xff]
        %v2894 = vld [vmem:[%s2882 + $0x58] sm:$0xff]
        %v2895 = vld [vmem:[%s2882 + $0x60] sm:$0xff]
        %v2896 = vld [vmem:[%s2882 + $0x68] sm:$0xff]
        %v2897 = vld [vmem:[%s2882 + $0x70] sm:$0xff]
        %v2898 = vld [vmem:[%s2882 + $0x78] sm:$0xff]
        %s2899 = scalar_lea.vmem %s3, 28
        %v2900 = vld [vmem:[%s2899] sm:$0xf]
        %v2902 = vsel %vm298, %v2883, 0
        %v2905 = vsel %vm298, %v2884, 0
        %v2908 = vsel %vm298, %v2885, 0
        %v2911 = vsel %vm298, %v2886, 0
        %v2914 = vsel %vm298, %v2887, 0
        %v2917 = vsel %vm298, %v2888, 0
        %v2920 = vsel %vm298, %v2889, 0
        %v2923 = vsel %vm298, %v2890, 0
        %v2926 = vsel %vm298, %v2891, 0
        %v2929 = vsel %vm298, %v2892, 0
        %v2932 = vsel %vm298, %v2893, 0
        %v2935 = vsel %vm298, %v2894, 0
        %v2938 = vsel %vm298, %v2895, 0
        %v2941 = vsel %vm298, %v2896, 0
        %v2944 = vsel %vm298, %v2897, 0
        %v2947 = vsel %vm298, %v2898, 0
        %v2950 = vsel %vm1194, %v2900, 0
        %2952 = vmatprep.subr.bf16.mxu0 0
        %2953 = vmatpush1.bf16.msra.mxu0 %v2950
        %2954 = vmatprep.subr.bf16.mxu0 0
        %2955 = vmatpush1.bf16.msra.mxu0 0
        %2956 = vmatprep.subr.bf16.mxu0 0
        %2957 = vmatpush1.bf16.msra.mxu0 0
        %2958 = vmatprep.subr.bf16.mxu0 0
        %2959 = vmatpush1.bf16.msra.mxu0 0
        %2960 = vmatprep.subr.bf16.mxu0 0
        %2961 = vmatpush1.bf16.msra.mxu0 0
        %2962 = vmatprep.subr.bf16.mxu0 0
        %2963 = vmatpush1.bf16.msra.mxu0 0
        %2964 = vmatprep.subr.bf16.mxu0 0
        %2965 = vmatpush1.bf16.msra.mxu0 0
        %2966 = vmatprep.subr.bf16.mxu0 0
        %2967 = vmatpush1.bf16.msra.mxu0 0
        %2968 = vmatprep.subr.bf16.mxu0 0
        %2969 = vmatpush1.bf16.msra.mxu0 0
        %2970 = vmatprep.subr.bf16.mxu0 0
        %2971 = vmatpush1.bf16.msra.mxu0 0
        %2972 = vmatprep.subr.bf16.mxu0 0
        %2973 = vmatpush1.bf16.msra.mxu0 0
        %2974 = vmatprep.subr.bf16.mxu0 0
        %2975 = vmatpush1.bf16.msra.mxu0 0
        %2976 = vmatprep.subr.bf16.mxu0 0
        %2977 = vmatpush1.bf16.msra.mxu0 0
        %2978 = vmatprep.subr.bf16.mxu0 0
        %2979 = vmatpush1.bf16.msra.mxu0 0
        %2980 = vmatprep.subr.bf16.mxu0 0
        %2981 = vmatpush1.bf16.msra.mxu0 0
        %2982 = vmatprep.subr.bf16.mxu0 0
        %2983 = vmatpush1.bf16.msra.mxu0 0
        %2984 = vmatprep.mubr.bf16.mxu0 0
        %2985 = vmatmul.mubr.bf16.gmra.mrb[0].mxu0 %v2902
        %v2986 = vpop.f32.mrb[0].mxu0
        %v2987 = vadd.f32 0.0, %v2986
        %v2988 = vpop.f32.mrb[0].mxu0
        %v2989 = vpop.f32.mrb[0].mxu0
        %v2990 = vadd.f32 0.0, %v2989
        %v2991 = vpop.f32.mrb[0].mxu0
        %2992 = vmatprep.mubr.bf16.mxu0 0
        %2993 = vmatmul.mubr.bf16.gmra.mrb[0].mxu0 %v2905
        %v2994 = vpop.f32.mrb[0].mxu0
        %v2995 = vadd.f32 0.0, %v2994
        %v2996 = vpop.f32.mrb[0].mxu0
        %v2997 = vpop.f32.mrb[0].mxu0
        %v2998 = vadd.f32 0.0, %v2997
        %v2999 = vpop.f32.mrb[0].mxu0
        %3000 = vmatprep.mubr.bf16.mxu0 0
        %3001 = vmatmul.mubr.bf16.gmra.mrb[0].mxu0 %v2908
        %v3002 = vpop.f32.mrb[0].mxu0
        %v3003 = vadd.f32 0.0, %v3002
        %v3004 = vpop.f32.mrb[0].mxu0
        %v3005 = vpop.f32.mrb[0].mxu0
        %v3006 = vadd.f32 0.0, %v3005
        %v3007 = vpop.f32.mrb[0].mxu0
        %3008 = vmatprep.mubr.bf16.mxu0 0
        %3009 = vmatmul.mubr.bf16.gmra.mrb[0].mxu0 %v2911
        %v3010 = vpop.f32.mrb[0].mxu0
        %v3011 = vadd.f32 0.0, %v3010
        %v3012 = vpop.f32.mrb[0].mxu0
        %v3013 = vpop.f32.mrb[0].mxu0
        %v3014 = vadd.f32 0.0, %v3013
        %v3015 = vpop.f32.mrb[0].mxu0
        %3016 = vmatprep.mubr.bf16.mxu0 0
        %3017 = vmatmul.mubr.bf16.gmra.mrb[0].mxu0 %v2914
        %v3018 = vpop.f32.mrb[0].mxu0
        %v3019 = vadd.f32 0.0, %v3018
        %v3020 = vpop.f32.mrb[0].mxu0
        %v3021 = vpop.f32.mrb[0].mxu0
        %v3022 = vadd.f32 0.0, %v3021
        %v3023 = vpop.f32.mrb[0].mxu0
        %3024 = vmatprep.mubr.bf16.mxu0 0
        %3025 = vmatmul.mubr.bf16.gmra.mrb[0].mxu0 %v2917
        %v3026 = vpop.f32.mrb[0].mxu0
        %v3027 = vadd.f32 0.0, %v3026
        %v3028 = vpop.f32.mrb[0].mxu0
        %v3029 = vpop.f32.mrb[0].mxu0
        %v3030 = vadd.f32 0.0, %v3029
        %v3031 = vpop.f32.mrb[0].mxu0
        %3032 = vmatprep.mubr.bf16.mxu0 0
        %3033 = vmatmul.mubr.bf16.gmra.mrb[0].mxu0 %v2920
        %v3034 = vpop.f32.mrb[0].mxu0
        %v3035 = vadd.f32 0.0, %v3034
        %v3036 = vpop.f32.mrb[0].mxu0
        %v3037 = vpop.f32.mrb[0].mxu0
        %v3038 = vadd.f32 0.0, %v3037
        %v3039 = vpop.f32.mrb[0].mxu0
        %3040 = vmatprep.mubr.bf16.mxu0 0
        %3041 = vmatmul.mubr.bf16.gmra.mrb[0].mxu0 %v2923
        %v3042 = vpop.f32.mrb[0].mxu0
        %v3043 = vadd.f32 0.0, %v3042
        %v3044 = vpop.f32.mrb[0].mxu0
        %v3045 = vpop.f32.mrb[0].mxu0
        %v3046 = vadd.f32 0.0, %v3045
        %v3047 = vpop.f32.mrb[0].mxu0
        %3048 = vmatprep.mubr.bf16.mxu0 0
        %3049 = vmatmul.mubr.bf16.gmra.mrb[0].mxu0 %v2926
        %v3050 = vpop.f32.mrb[0].mxu0
        %v3051 = vadd.f32 0.0, %v3050
        %v3052 = vpop.f32.mrb[0].mxu0
        %v3053 = vpop.f32.mrb[0].mxu0
        %v3054 = vadd.f32 0.0, %v3053
        %v3055 = vpop.f32.mrb[0].mxu0
        %3056 = vmatprep.mubr.bf16.mxu0 0
        %3057 = vmatmul.mubr.bf16.gmra.mrb[0].mxu0 %v2929
        %v3058 = vpop.f32.mrb[0].mxu0
        %v3059 = vadd.f32 0.0, %v3058
        %v3060 = vpop.f32.mrb[0].mxu0
        %v3061 = vpop.f32.mrb[0].mxu0
        %v3062 = vadd.f32 0.0, %v3061
        %v3063 = vpop.f32.mrb[0].mxu0
        %3064 = vmatprep.mubr.bf16.mxu0 0
        %3065 = vmatmul.mubr.bf16.gmra.mrb[0].mxu0 %v2932
        %v3066 = vpop.f32.mrb[0].mxu0
        %v3067 = vadd.f32 0.0, %v3066
        %v3068 = vpop.f32.mrb[0].mxu0
        %v3069 = vpop.f32.mrb[0].mxu0
        %v3070 = vadd.f32 0.0, %v3069
        %v3071 = vpop.f32.mrb[0].mxu0
        %3072 = vmatprep.mubr.bf16.mxu0 0
        %3073 = vmatmul.mubr.bf16.gmra.mrb[0].mxu0 %v2935
        %v3074 = vpop.f32.mrb[0].mxu0
        %v3075 = vadd.f32 0.0, %v3074
        %v3076 = vpop.f32.mrb[0].mxu0
        %v3077 = vpop.f32.mrb[0].mxu0
        %v3078 = vadd.f32 0.0, %v3077
        %v3079 = vpop.f32.mrb[0].mxu0
        %3080 = vmatprep.mubr.bf16.mxu0 0
        %3081 = vmatmul.mubr.bf16.gmra.mrb[0].mxu0 %v2938
        %v3082 = vpop.f32.mrb[0].mxu0
        %v3083 = vadd.f32 0.0, %v3082
        %v3084 = vpop.f32.mrb[0].mxu0
        %v3085 = vpop.f32.mrb[0].mxu0
        %v3086 = vadd.f32 0.0, %v3085
        %v3087 = vpop.f32.mrb[0].mxu0
        %3088 = vmatprep.mubr.bf16.mxu0 0
        %3089 = vmatmul.mubr.bf16.gmra.mrb[0].mxu0 %v2941
        %v3090 = vpop.f32.mrb[0].mxu0
        %v3091 = vadd.f32 0.0, %v3090
        %v3092 = vpop.f32.mrb[0].mxu0
        %v3093 = vpop.f32.mrb[0].mxu0
        %v3094 = vadd.f32 0.0, %v3093
        %v3095 = vpop.f32.mrb[0].mxu0
        %3096 = vmatprep.mubr.bf16.mxu0 0
        %3097 = vmatmul.mubr.bf16.gmra.mrb[0].mxu0 %v2944
        %v3098 = vpop.f32.mrb[0].mxu0
        %v3099 = vadd.f32 0.0, %v3098
        %v3100 = vpop.f32.mrb[0].mxu0
        %v3101 = vpop.f32.mrb[0].mxu0
        %v3102 = vadd.f32 0.0, %v3101
        %v3103 = vpop.f32.mrb[0].mxu0
        %3104 = vmatprep.mubr.bf16.mxu0 0
        %3105 = vmatmul.mubr.bf16.gmra.mrb[0].mxu0 %v2947
        %v3106 = vpop.f32.mrb[0].mxu0
        %v3107 = vadd.f32 0.0, %v3106
        %v3108 = vpop.f32.mrb[0].mxu0
        %v3109 = vpop.f32.mrb[0].mxu0
        %v3110 = vadd.f32 0.0, %v3109
        %v3111 = vpop.f32.mrb[0].mxu0
        %3112 = vdwg.mxu0
        %v3113 = vadd.f32 %v2850, %v2987
        %v3114 = vadd.f32 %v2851, %v2990
        %v3115 = vadd.f32 %v2852, %v2995
        %v3116 = vadd.f32 %v2853, %v2998
        %v3117 = vadd.f32 %v2854, %v3003
        %v3118 = vadd.f32 %v2855, %v3006
        %v3119 = vadd.f32 %v2856, %v3011
        %v3120 = vadd.f32 %v2857, %v3014
        %v3121 = vadd.f32 %v2858, %v3019
        %v3122 = vadd.f32 %v2859, %v3022
        %v3123 = vadd.f32 %v2860, %v3027
        %v3124 = vadd.f32 %v2861, %v3030
        %v3125 = vadd.f32 %v2862, %v3035
        %v3126 = vadd.f32 %v2863, %v3038
        %v3127 = vadd.f32 %v2864, %v3043
        %v3128 = vadd.f32 %v2865, %v3046
        %v3129 = vadd.f32 %v2866, %v3051
        %v3130 = vadd.f32 %v2867, %v3054
        %v3131 = vadd.f32 %v2868, %v3059
        %v3132 = vadd.f32 %v2869, %v3062
        %v3133 = vadd.f32 %v2870, %v3067
        %v3134 = vadd.f32 %v2871, %v3070
        %v3135 = vadd.f32 %v2872, %v3075
        %v3136 = vadd.f32 %v2873, %v3078
        %v3137 = vadd.f32 %v2874, %v3083
        %v3138 = vadd.f32 %v2875, %v3086
        %v3139 = vadd.f32 %v2876, %v3091
        %v3140 = vadd.f32 %v2877, %v3094
        %v3141 = vadd.f32 %v2878, %v3099
        %v3142 = vadd.f32 %v2879, %v3102
        %v3143 = vadd.f32 %v2880, %v3107
        %v3144 = vadd.f32 %v2881, %v3110
        %s3145 = scalar_lea.vmem [#allocation4], 16
        %v3146 = vld [vmem:[%s3145] sm:$0xff]
        %v3147 = vld [vmem:[%s3145 + $0x8] sm:$0xff]
        %v3148 = vld [vmem:[%s3145 + $0x10] sm:$0xff]
        %v3149 = vld [vmem:[%s3145 + $0x18] sm:$0xff]
        %v3150 = vld [vmem:[%s3145 + $0x20] sm:$0xff]
        %v3151 = vld [vmem:[%s3145 + $0x28] sm:$0xff]
        %v3152 = vld [vmem:[%s3145 + $0x30] sm:$0xff]
        %v3153 = vld [vmem:[%s3145 + $0x38] sm:$0xff]
        %v3154 = vld [vmem:[%s3145 + $0x40] sm:$0xff]
        %v3155 = vld [vmem:[%s3145 + $0x48] sm:$0xff]
        %v3156 = vld [vmem:[%s3145 + $0x50] sm:$0xff]
        %v3157 = vld [vmem:[%s3145 + $0x58] sm:$0xff]
        %v3158 = vld [vmem:[%s3145 + $0x60] sm:$0xff]
        %v3159 = vld [vmem:[%s3145 + $0x68] sm:$0xff]
        %v3160 = vld [vmem:[%s3145 + $0x70] sm:$0xff]
        %v3161 = vld [vmem:[%s3145 + $0x78] sm:$0xff]
        %s3162 = scalar_lea.vmem %s3, 32
        %v3163 = vld [vmem:[%s3162] sm:$0xf]
        %v3165 = vsel %vm298, %v3146, 0
        %v3168 = vsel %vm298, %v3147, 0
        %v3171 = vsel %vm298, %v3148, 0
        %v3174 = vsel %vm298, %v3149, 0
        %v3177 = vsel %vm298, %v3150, 0
        %v3180 = vsel %vm298, %v3151, 0
        %v3183 = vsel %vm298, %v3152, 0
        %v3186 = vsel %vm298, %v3153, 0
        %v3189 = vsel %vm298, %v3154, 0
        %v3192 = vsel %vm298, %v3155, 0
        %v3195 = vsel %vm298, %v3156, 0
        %v3198 = vsel %vm298, %v3157, 0
        %v3201 = vsel %vm298, %v3158, 0
        %v3204 = vsel %vm298, %v3159, 0
        %v3207 = vsel %vm298, %v3160, 0
        %v3210 = vsel %vm298, %v3161, 0
        %v3213 = vsel %vm1194, %v3163, 0
        %3215 = vmatprep.subr.bf16.mxu0 0
        %3216 = vmatpush1.bf16.msra.mxu0 %v3213
        %3217 = vmatprep.subr.bf16.mxu0 0
        %3218 = vmatpush1.bf16.msra.mxu0 0
        %3219 = vmatprep.subr.bf16.mxu0 0
        %3220 = vmatpush1.bf16.msra.mxu0 0
        %3221 = vmatprep.subr.bf16.mxu0 0
        %3222 = vmatpush1.bf16.msra.mxu0 0
        %3223 = vmatprep.subr.bf16.mxu0 0
        %3224 = vmatpush1.bf16.msra.mxu0 0
        %3225 = vmatprep.subr.bf16.mxu0 0
        %3226 = vmatpush1.bf16.msra.mxu0 0
        %3227 = vmatprep.subr.bf16.mxu0 0
        %3228 = vmatpush1.bf16.msra.mxu0 0
        %3229 = vmatprep.subr.bf16.mxu0 0
        %3230 = vmatpush1.bf16.msra.mxu0 0
        %3231 = vmatprep.subr.bf16.mxu0 0
        %3232 = vmatpush1.bf16.msra.mxu0 0
        %3233 = vmatprep.subr.bf16.mxu0 0
        %3234 = vmatpush1.bf16.msra.mxu0 0
        %3235 = vmatprep.subr.bf16.mxu0 0
        %3236 = vmatpush1.bf16.msra.mxu0 0
        %3237 = vmatprep.subr.bf16.mxu0 0
        %3238 = vmatpush1.bf16.msra.mxu0 0
        %3239 = vmatprep.subr.bf16.mxu0 0
        %3240 = vmatpush1.bf16.msra.mxu0 0
        %3241 = vmatprep.subr.bf16.mxu0 0
        %3242 = vmatpush1.bf16.msra.mxu0 0
        %3243 = vmatprep.subr.bf16.mxu0 0
        %3244 = vmatpush1.bf16.msra.mxu0 0
        %3245 = vmatprep.subr.bf16.mxu0 0
        %3246 = vmatpush1.bf16.msra.mxu0 0
        %3247 = vmatprep.mubr.bf16.mxu0 0
        %3248 = vmatmul.mubr.bf16.gmra.mrb[0].mxu0 %v3165
        %v3249 = vpop.f32.mrb[0].mxu0
        %v3250 = vadd.f32 0.0, %v3249
        %v3251 = vpop.f32.mrb[0].mxu0
        %v3252 = vpop.f32.mrb[0].mxu0
        %v3253 = vadd.f32 0.0, %v3252
        %v3254 = vpop.f32.mrb[0].mxu0
        %3255 = vmatprep.mubr.bf16.mxu0 0
        %3256 = vmatmul.mubr.bf16.gmra.mrb[0].mxu0 %v3168
        %v3257 = vpop.f32.mrb[0].mxu0
        %v3258 = vadd.f32 0.0, %v3257
        %v3259 = vpop.f32.mrb[0].mxu0
        %v3260 = vpop.f32.mrb[0].mxu0
        %v3261 = vadd.f32 0.0, %v3260
        %v3262 = vpop.f32.mrb[0].mxu0
        %3263 = vmatprep.mubr.bf16.mxu0 0
        %3264 = vmatmul.mubr.bf16.gmra.mrb[0].mxu0 %v3171
        %v3265 = vpop.f32.mrb[0].mxu0
        %v3266 = vadd.f32 0.0, %v3265
        %v3267 = vpop.f32.mrb[0].mxu0
        %v3268 = vpop.f32.mrb[0].mxu0
        %v3269 = vadd.f32 0.0, %v3268
        %v3270 = vpop.f32.mrb[0].mxu0
        %3271 = vmatprep.mubr.bf16.mxu0 0
        %3272 = vmatmul.mubr.bf16.gmra.mrb[0].mxu0 %v3174
        %v3273 = vpop.f32.mrb[0].mxu0
        %v3274 = vadd.f32 0.0, %v3273
        %v3275 = vpop.f32.mrb[0].mxu0
        %v3276 = vpop.f32.mrb[0].mxu0
        %v3277 = vadd.f32 0.0, %v3276
        %v3278 = vpop.f32.mrb[0].mxu0
        %3279 = vmatprep.mubr.bf16.mxu0 0
        %3280 = vmatmul.mubr.bf16.gmra.mrb[0].mxu0 %v3177
        %v3281 = vpop.f32.mrb[0].mxu0
        %v3282 = vadd.f32 0.0, %v3281
        %v3283 = vpop.f32.mrb[0].mxu0
        %v3284 = vpop.f32.mrb[0].mxu0
        %v3285 = vadd.f32 0.0, %v3284
        %v3286 = vpop.f32.mrb[0].mxu0
        %3287 = vmatprep.mubr.bf16.mxu0 0
        %3288 = vmatmul.mubr.bf16.gmra.mrb[0].mxu0 %v3180
        %v3289 = vpop.f32.mrb[0].mxu0
        %v3290 = vadd.f32 0.0, %v3289
        %v3291 = vpop.f32.mrb[0].mxu0
        %v3292 = vpop.f32.mrb[0].mxu0
        %v3293 = vadd.f32 0.0, %v3292
        %v3294 = vpop.f32.mrb[0].mxu0
        %3295 = vmatprep.mubr.bf16.mxu0 0
        %3296 = vmatmul.mubr.bf16.gmra.mrb[0].mxu0 %v3183
        %v3297 = vpop.f32.mrb[0].mxu0
        %v3298 = vadd.f32 0.0, %v3297
        %v3299 = vpop.f32.mrb[0].mxu0
        %v3300 = vpop.f32.mrb[0].mxu0
        %v3301 = vadd.f32 0.0, %v3300
        %v3302 = vpop.f32.mrb[0].mxu0
        %3303 = vmatprep.mubr.bf16.mxu0 0
        %3304 = vmatmul.mubr.bf16.gmra.mrb[0].mxu0 %v3186
        %v3305 = vpop.f32.mrb[0].mxu0
        %v3306 = vadd.f32 0.0, %v3305
        %v3307 = vpop.f32.mrb[0].mxu0
        %v3308 = vpop.f32.mrb[0].mxu0
        %v3309 = vadd.f32 0.0, %v3308
        %v3310 = vpop.f32.mrb[0].mxu0
        %3311 = vmatprep.mubr.bf16.mxu0 0
        %3312 = vmatmul.mubr.bf16.gmra.mrb[0].mxu0 %v3189
        %v3313 = vpop.f32.mrb[0].mxu0
        %v3314 = vadd.f32 0.0, %v3313
        %v3315 = vpop.f32.mrb[0].mxu0
        %v3316 = vpop.f32.mrb[0].mxu0
        %v3317 = vadd.f32 0.0, %v3316
        %v3318 = vpop.f32.mrb[0].mxu0
        %3319 = vmatprep.mubr.bf16.mxu0 0
        %3320 = vmatmul.mubr.bf16.gmra.mrb[0].mxu0 %v3192
        %v3321 = vpop.f32.mrb[0].mxu0
        %v3322 = vadd.f32 0.0, %v3321
        %v3323 = vpop.f32.mrb[0].mxu0
        %v3324 = vpop.f32.mrb[0].mxu0
        %v3325 = vadd.f32 0.0, %v3324
        %v3326 = vpop.f32.mrb[0].mxu0
        %3327 = vmatprep.mubr.bf16.mxu0 0
        %3328 = vmatmul.mubr.bf16.gmra.mrb[0].mxu0 %v3195
        %v3329 = vpop.f32.mrb[0].mxu0
        %v3330 = vadd.f32 0.0, %v3329
        %v3331 = vpop.f32.mrb[0].mxu0
        %v3332 = vpop.f32.mrb[0].mxu0
        %v3333 = vadd.f32 0.0, %v3332
        %v3334 = vpop.f32.mrb[0].mxu0
        %3335 = vmatprep.mubr.bf16.mxu0 0
        %3336 = vmatmul.mubr.bf16.gmra.mrb[0].mxu0 %v3198
        %v3337 = vpop.f32.mrb[0].mxu0
        %v3338 = vadd.f32 0.0, %v3337
        %v3339 = vpop.f32.mrb[0].mxu0
        %v3340 = vpop.f32.mrb[0].mxu0
        %v3341 = vadd.f32 0.0, %v3340
        %v3342 = vpop.f32.mrb[0].mxu0
        %3343 = vmatprep.mubr.bf16.mxu0 0
        %3344 = vmatmul.mubr.bf16.gmra.mrb[0].mxu0 %v3201
        %v3345 = vpop.f32.mrb[0].mxu0
        %v3346 = vadd.f32 0.0, %v3345
        %v3347 = vpop.f32.mrb[0].mxu0
        %v3348 = vpop.f32.mrb[0].mxu0
        %v3349 = vadd.f32 0.0, %v3348
        %v3350 = vpop.f32.mrb[0].mxu0
        %3351 = vmatprep.mubr.bf16.mxu0 0
        %3352 = vmatmul.mubr.bf16.gmra.mrb[0].mxu0 %v3204
        %v3353 = vpop.f32.mrb[0].mxu0
        %v3354 = vadd.f32 0.0, %v3353
        %v3355 = vpop.f32.mrb[0].mxu0
        %v3356 = vpop.f32.mrb[0].mxu0
        %v3357 = vadd.f32 0.0, %v3356
        %v3358 = vpop.f32.mrb[0].mxu0
        %3359 = vmatprep.mubr.bf16.mxu0 0
        %3360 = vmatmul.mubr.bf16.gmra.mrb[0].mxu0 %v3207
        %v3361 = vpop.f32.mrb[0].mxu0
        %v3362 = vadd.f32 0.0, %v3361
        %v3363 = vpop.f32.mrb[0].mxu0
        %v3364 = vpop.f32.mrb[0].mxu0
        %v3365 = vadd.f32 0.0, %v3364
        %v3366 = vpop.f32.mrb[0].mxu0
        %3367 = vmatprep.mubr.bf16.mxu0 0
        %3368 = vmatmul.mubr.bf16.gmra.mrb[0].mxu0 %v3210
        %v3369 = vpop.f32.mrb[0].mxu0
        %v3370 = vadd.f32 0.0, %v3369
        %v3371 = vpop.f32.mrb[0].mxu0
        %v3372 = vpop.f32.mrb[0].mxu0
        %v3373 = vadd.f32 0.0, %v3372
        %v3374 = vpop.f32.mrb[0].mxu0
        %3375 = vdwg.mxu0
        %v3376 = vadd.f32 %v3113, %v3250
        %v3377 = vadd.f32 %v3114, %v3253
        %v3378 = vadd.f32 %v3115, %v3258
        %v3379 = vadd.f32 %v3116, %v3261
        %v3380 = vadd.f32 %v3117, %v3266
        %v3381 = vadd.f32 %v3118, %v3269
        %v3382 = vadd.f32 %v3119, %v3274
        %v3383 = vadd.f32 %v3120, %v3277
        %v3384 = vadd.f32 %v3121, %v3282
        %v3385 = vadd.f32 %v3122, %v3285
        %v3386 = vadd.f32 %v3123, %v3290
        %v3387 = vadd.f32 %v3124, %v3293
        %v3388 = vadd.f32 %v3125, %v3298
        %v3389 = vadd.f32 %v3126, %v3301
        %v3390 = vadd.f32 %v3127, %v3306
        %v3391 = vadd.f32 %v3128, %v3309
        %v3392 = vadd.f32 %v3129, %v3314
        %v3393 = vadd.f32 %v3130, %v3317
        %v3394 = vadd.f32 %v3131, %v3322
        %v3395 = vadd.f32 %v3132, %v3325
        %v3396 = vadd.f32 %v3133, %v3330
        %v3397 = vadd.f32 %v3134, %v3333
        %v3398 = vadd.f32 %v3135, %v3338
        %v3399 = vadd.f32 %v3136, %v3341
        %v3400 = vadd.f32 %v3137, %v3346
        %v3401 = vadd.f32 %v3138, %v3349
        %v3402 = vadd.f32 %v3139, %v3354
        %v3403 = vadd.f32 %v3140, %v3357
        %v3404 = vadd.f32 %v3141, %v3362
        %v3405 = vadd.f32 %v3142, %v3365
        %v3406 = vadd.f32 %v3143, %v3370
        %v3407 = vadd.f32 %v3144, %v3373
        %v3408 = vld [vmem:[%s4] sm:$0x1]
        %v3410 = vlaneseq
        %v3411 = vshrl.u32 %v3410, 7
        %v3412 = vsub.s32 0, %v3411
        %v3413 = vrot.slane %v3408, %v3412
        %v3415 = vadd.f32 %v3376, %v3413
        %v3416 = vadd.f32 %v3377, %v3413
        %v3417 = vadd.f32 %v3378, %v3413
        %v3418 = vadd.f32 %v3379, %v3413
        %v3419 = vadd.f32 %v3380, %v3413
        %v3420 = vadd.f32 %v3381, %v3413
        %v3421 = vadd.f32 %v3382, %v3413
        %v3422 = vadd.f32 %v3383, %v3413
        %v3423 = vadd.f32 %v3384, %v3413
        %v3424 = vadd.f32 %v3385, %v3413
        %v3425 = vadd.f32 %v3386, %v3413
        %v3426 = vadd.f32 %v3387, %v3413
        %v3427 = vadd.f32 %v3388, %v3413
        %v3428 = vadd.f32 %v3389, %v3413
        %v3429 = vadd.f32 %v3390, %v3413
        %v3430 = vadd.f32 %v3391, %v3413
        %v3431 = vadd.f32 %v3392, %v3413
        %v3432 = vadd.f32 %v3393, %v3413
        %v3433 = vadd.f32 %v3394, %v3413
        %v3434 = vadd.f32 %v3395, %v3413
        %v3435 = vadd.f32 %v3396, %v3413
        %v3436 = vadd.f32 %v3397, %v3413
        %v3437 = vadd.f32 %v3398, %v3413
        %v3438 = vadd.f32 %v3399, %v3413
        %v3439 = vadd.f32 %v3400, %v3413
        %v3440 = vadd.f32 %v3401, %v3413
        %v3441 = vadd.f32 %v3402, %v3413
        %v3442 = vadd.f32 %v3403, %v3413
        %v3443 = vadd.f32 %v3404, %v3413
        %v3444 = vadd.f32 %v3405, %v3413
        %v3445 = vadd.f32 %v3406, %v3413
        %v3446 = vadd.f32 %v3407, %v3413
        %v3447 = vmax.f32 %v3415, 0.0
        %v3448 = vmax.f32 %v3416, 0.0
        %v3449 = vmax.f32 %v3417, 0.0
        %v3450 = vmax.f32 %v3418, 0.0
        %v3451 = vmax.f32 %v3419, 0.0
        %v3452 = vmax.f32 %v3420, 0.0
        %v3453 = vmax.f32 %v3421, 0.0
        %v3454 = vmax.f32 %v3422, 0.0
        %v3455 = vmax.f32 %v3423, 0.0
        %v3456 = vmax.f32 %v3424, 0.0
        %v3457 = vmax.f32 %v3425, 0.0
        %v3458 = vmax.f32 %v3426, 0.0
        %v3459 = vmax.f32 %v3427, 0.0
        %v3460 = vmax.f32 %v3428, 0.0
        %v3461 = vmax.f32 %v3429, 0.0
        %v3462 = vmax.f32 %v3430, 0.0
        %v3463 = vmax.f32 %v3431, 0.0
        %v3464 = vmax.f32 %v3432, 0.0
        %v3465 = vmax.f32 %v3433, 0.0
        %v3466 = vmax.f32 %v3434, 0.0
        %v3467 = vmax.f32 %v3435, 0.0
        %v3468 = vmax.f32 %v3436, 0.0
        %v3469 = vmax.f32 %v3437, 0.0
        %v3470 = vmax.f32 %v3438, 0.0
        %v3471 = vmax.f32 %v3439, 0.0
        %v3472 = vmax.f32 %v3440, 0.0
        %v3473 = vmax.f32 %v3441, 0.0
        %v3474 = vmax.f32 %v3442, 0.0
        %v3475 = vmax.f32 %v3443, 0.0
        %v3476 = vmax.f32 %v3444, 0.0
        %v3477 = vmax.f32 %v3445, 0.0
        %v3478 = vmax.f32 %v3446, 0.0
        %v3479 = vpack.c.bf16 %v3448, %v3447
        %v3480 = vpack.c.bf16 %v3450, %v3449
        %v3481 = vpack.c.bf16 %v3452, %v3451
        %v3482 = vpack.c.bf16 %v3454, %v3453
        %v3483 = vpack.c.bf16 %v3456, %v3455
        %v3484 = vpack.c.bf16 %v3458, %v3457
        %v3485 = vpack.c.bf16 %v3460, %v3459
        %v3486 = vpack.c.bf16 %v3462, %v3461
        %v3487 = vpack.c.bf16 %v3464, %v3463
        %v3488 = vpack.c.bf16 %v3466, %v3465
        %v3489 = vpack.c.bf16 %v3468, %v3467
        %v3490 = vpack.c.bf16 %v3470, %v3469
        %v3491 = vpack.c.bf16 %v3472, %v3471
        %v3492 = vpack.c.bf16 %v3474, %v3473
        %v3493 = vpack.c.bf16 %v3476, %v3475
        %v3494 = vpack.c.bf16 %v3478, %v3477
        %v3495 = vld [vmem:[%s5] sm:$0xf]
        %v3496 = vld [vmem:[%s6] sm:$0x1]
        %v3498 = vlaneseq
        %v3499 = vshrl.u32 %v3498, 7
        %v3500 = vsub.s32 0, %v3499
        %v3501 = vrot.slane %v3496, %v3500
        %v3504 = vsel %vm298, %v3479, 0
        %v3507 = vsel %vm298, %v3480, 0
        %v3510 = vsel %vm298, %v3481, 0
        %v3513 = vsel %vm298, %v3482, 0
        %v3516 = vsel %vm298, %v3483, 0
        %v3519 = vsel %vm298, %v3484, 0
        %v3522 = vsel %vm298, %v3485, 0
        %v3525 = vsel %vm298, %v3486, 0
        %v3528 = vsel %vm298, %v3487, 0
        %v3531 = vsel %vm298, %v3488, 0
        %v3534 = vsel %vm298, %v3489, 0
        %v3537 = vsel %vm298, %v3490, 0
        %v3540 = vsel %vm298, %v3491, 0
        %v3543 = vsel %vm298, %v3492, 0
        %v3546 = vsel %vm298, %v3493, 0
        %v3549 = vsel %vm298, %v3494, 0
        %v3552 = vsel %vm1194, %v3495, 0
        %3554 = vmatprep.subr.bf16.mxu0 0
        %3555 = vmatpush1.bf16.msra.mxu0 %v3552
        %3556 = vmatprep.subr.bf16.mxu0 0
        %3557 = vmatpush1.bf16.msra.mxu0 0
        %3558 = vmatprep.subr.bf16.mxu0 0
        %3559 = vmatpush1.bf16.msra.mxu0 0
        %3560 = vmatprep.subr.bf16.mxu0 0
        %3561 = vmatpush1.bf16.msra.mxu0 0
        %3562 = vmatprep.subr.bf16.mxu0 0
        %3563 = vmatpush1.bf16.msra.mxu0 0
        %3564 = vmatprep.subr.bf16.mxu0 0
        %3565 = vmatpush1.bf16.msra.mxu0 0
        %3566 = vmatprep.subr.bf16.mxu0 0
        %3567 = vmatpush1.bf16.msra.mxu0 0
        %3568 = vmatprep.subr.bf16.mxu0 0
        %3569 = vmatpush1.bf16.msra.mxu0 0
        %3570 = vmatprep.subr.bf16.mxu0 0
        %3571 = vmatpush1.bf16.msra.mxu0 0
        %3572 = vmatprep.subr.bf16.mxu0 0
        %3573 = vmatpush1.bf16.msra.mxu0 0
        %3574 = vmatprep.subr.bf16.mxu0 0
        %3575 = vmatpush1.bf16.msra.mxu0 0
        %3576 = vmatprep.subr.bf16.mxu0 0
        %3577 = vmatpush1.bf16.msra.mxu0 0
        %3578 = vmatprep.subr.bf16.mxu0 0
        %3579 = vmatpush1.bf16.msra.mxu0 0
        %3580 = vmatprep.subr.bf16.mxu0 0
        %3581 = vmatpush1.bf16.msra.mxu0 0
        %3582 = vmatprep.subr.bf16.mxu0 0
        %3583 = vmatpush1.bf16.msra.mxu0 0
        %3584 = vmatprep.subr.bf16.mxu0 0
        %3585 = vmatpush1.bf16.msra.mxu0 0
        %3586 = vmatprep.mubr.bf16.mxu0 0
        %3587 = vmatmul.mubr.bf16.gmra.mrb[0].mxu0 %v3504
        %v3588 = vpop.f32.mrb[0].mxu0
        %v3589 = vadd.f32 %v3501, %v3588
        %v3590 = vpop.f32.mrb[0].mxu0
        %v3591 = vpop.f32.mrb[0].mxu0
        %v3592 = vadd.f32 %v3501, %v3591
        %v3593 = vpop.f32.mrb[0].mxu0
        %3594 = vmatprep.mubr.bf16.mxu0 0
        %3595 = vmatmul.mubr.bf16.gmra.mrb[0].mxu0 %v3507
        %v3596 = vpop.f32.mrb[0].mxu0
        %v3597 = vadd.f32 %v3501, %v3596
        %v3598 = vpop.f32.mrb[0].mxu0
        %v3599 = vpop.f32.mrb[0].mxu0
        %v3600 = vadd.f32 %v3501, %v3599
        %v3601 = vpop.f32.mrb[0].mxu0
        %3602 = vmatprep.mubr.bf16.mxu0 0
        %3603 = vmatmul.mubr.bf16.gmra.mrb[0].mxu0 %v3510
        %v3604 = vpop.f32.mrb[0].mxu0
        %v3605 = vadd.f32 %v3501, %v3604
        %v3606 = vpop.f32.mrb[0].mxu0
        %v3607 = vpop.f32.mrb[0].mxu0
        %v3608 = vadd.f32 %v3501, %v3607
        %v3609 = vpop.f32.mrb[0].mxu0
        %3610 = vmatprep.mubr.bf16.mxu0 0
        %3611 = vmatmul.mubr.bf16.gmra.mrb[0].mxu0 %v3513
        %v3612 = vpop.f32.mrb[0].mxu0
        %v3613 = vadd.f32 %v3501, %v3612
        %v3614 = vpop.f32.mrb[0].mxu0
        %v3615 = vpop.f32.mrb[0].mxu0
        %v3616 = vadd.f32 %v3501, %v3615
        %v3617 = vpop.f32.mrb[0].mxu0
        %3618 = vmatprep.mubr.bf16.mxu0 0
        %3619 = vmatmul.mubr.bf16.gmra.mrb[0].mxu0 %v3516
        %v3620 = vpop.f32.mrb[0].mxu0
        %v3621 = vadd.f32 %v3501, %v3620
        %v3622 = vpop.f32.mrb[0].mxu0
        %v3623 = vpop.f32.mrb[0].mxu0
        %v3624 = vadd.f32 %v3501, %v3623
        %v3625 = vpop.f32.mrb[0].mxu0
        %3626 = vmatprep.mubr.bf16.mxu0 0
        %3627 = vmatmul.mubr.bf16.gmra.mrb[0].mxu0 %v3519
        %v3628 = vpop.f32.mrb[0].mxu0
        %v3629 = vadd.f32 %v3501, %v3628
        %v3630 = vpop.f32.mrb[0].mxu0
        %v3631 = vpop.f32.mrb[0].mxu0
        %v3632 = vadd.f32 %v3501, %v3631
        %v3633 = vpop.f32.mrb[0].mxu0
        %3634 = vmatprep.mubr.bf16.mxu0 0
        %3635 = vmatmul.mubr.bf16.gmra.mrb[0].mxu0 %v3522
        %v3636 = vpop.f32.mrb[0].mxu0
        %v3637 = vadd.f32 %v3501, %v3636
        %v3638 = vpop.f32.mrb[0].mxu0
        %v3639 = vpop.f32.mrb[0].mxu0
        %v3640 = vadd.f32 %v3501, %v3639
        %v3641 = vpop.f32.mrb[0].mxu0
        %3642 = vmatprep.mubr.bf16.mxu0 0
        %3643 = vmatmul.mubr.bf16.gmra.mrb[0].mxu0 %v3525
        %v3644 = vpop.f32.mrb[0].mxu0
        %v3645 = vadd.f32 %v3501, %v3644
        %v3646 = vpop.f32.mrb[0].mxu0
        %v3647 = vpop.f32.mrb[0].mxu0
        %v3648 = vadd.f32 %v3501, %v3647
        %v3649 = vpop.f32.mrb[0].mxu0
        %3650 = vmatprep.mubr.bf16.mxu0 0
        %3651 = vmatmul.mubr.bf16.gmra.mrb[0].mxu0 %v3528
        %v3652 = vpop.f32.mrb[0].mxu0
        %v3653 = vadd.f32 %v3501, %v3652
        %v3654 = vpop.f32.mrb[0].mxu0
        %v3655 = vpop.f32.mrb[0].mxu0
        %v3656 = vadd.f32 %v3501, %v3655
        %v3657 = vpop.f32.mrb[0].mxu0
        %3658 = vmatprep.mubr.bf16.mxu0 0
        %3659 = vmatmul.mubr.bf16.gmra.mrb[0].mxu0 %v3531
        %v3660 = vpop.f32.mrb[0].mxu0
        %v3661 = vadd.f32 %v3501, %v3660
        %v3662 = vpop.f32.mrb[0].mxu0
        %v3663 = vpop.f32.mrb[0].mxu0
        %v3664 = vadd.f32 %v3501, %v3663
        %v3665 = vpop.f32.mrb[0].mxu0
        %3666 = vmatprep.mubr.bf16.mxu0 0
        %3667 = vmatmul.mubr.bf16.gmra.mrb[0].mxu0 %v3534
        %v3668 = vpop.f32.mrb[0].mxu0
        %v3669 = vadd.f32 %v3501, %v3668
        %v3670 = vpop.f32.mrb[0].mxu0
        %v3671 = vpop.f32.mrb[0].mxu0
        %v3672 = vadd.f32 %v3501, %v3671
        %v3673 = vpop.f32.mrb[0].mxu0
        %3674 = vmatprep.mubr.bf16.mxu0 0
        %3675 = vmatmul.mubr.bf16.gmra.mrb[0].mxu0 %v3537
        %v3676 = vpop.f32.mrb[0].mxu0
        %v3677 = vadd.f32 %v3501, %v3676
        %v3678 = vpop.f32.mrb[0].mxu0
        %v3679 = vpop.f32.mrb[0].mxu0
        %v3680 = vadd.f32 %v3501, %v3679
        %v3681 = vpop.f32.mrb[0].mxu0
        %3682 = vmatprep.mubr.bf16.mxu0 0
        %3683 = vmatmul.mubr.bf16.gmra.mrb[0].mxu0 %v3540
        %v3684 = vpop.f32.mrb[0].mxu0
        %v3685 = vadd.f32 %v3501, %v3684
        %v3686 = vpop.f32.mrb[0].mxu0
        %v3687 = vpop.f32.mrb[0].mxu0
        %v3688 = vadd.f32 %v3501, %v3687
        %v3689 = vpop.f32.mrb[0].mxu0
        %3690 = vmatprep.mubr.bf16.mxu0 0
        %3691 = vmatmul.mubr.bf16.gmra.mrb[0].mxu0 %v3543
        %v3692 = vpop.f32.mrb[0].mxu0
        %v3693 = vadd.f32 %v3501, %v3692
        %v3694 = vpop.f32.mrb[0].mxu0
        %v3695 = vpop.f32.mrb[0].mxu0
        %v3696 = vadd.f32 %v3501, %v3695
        %v3697 = vpop.f32.mrb[0].mxu0
        %3698 = vmatprep.mubr.bf16.mxu0 0
        %3699 = vmatmul.mubr.bf16.gmra.mrb[0].mxu0 %v3546
        %v3700 = vpop.f32.mrb[0].mxu0
        %v3701 = vadd.f32 %v3501, %v3700
        %v3702 = vpop.f32.mrb[0].mxu0
        %v3703 = vpop.f32.mrb[0].mxu0
        %v3704 = vadd.f32 %v3501, %v3703
        %v3705 = vpop.f32.mrb[0].mxu0
        %3706 = vmatprep.mubr.bf16.mxu0 0
        %3707 = vmatmul.mubr.bf16.gmra.mrb[0].mxu0 %v3549
        %v3708 = vpop.f32.mrb[0].mxu0
        %v3709 = vadd.f32 %v3501, %v3708
        %v3710 = vpop.f32.mrb[0].mxu0
        %v3711 = vpop.f32.mrb[0].mxu0
        %v3712 = vadd.f32 %v3501, %v3711
        %v3713 = vpop.f32.mrb[0].mxu0
        %3714 = vdwg.mxu0
        %v3715 = vld [vmem:[%s266] sm:$0xf]
        %v3716 = vld [vmem:[%s266 + $0x4] sm:$0xf]
        %v3717 = vld [vmem:[%s266 + $0x8] sm:$0xf]
        %v3718 = vld [vmem:[%s266 + $0xc] sm:$0xf]
        %v3719 = vld [vmem:[%s266 + $0x10] sm:$0xf]
        %v3720 = vld [vmem:[%s266 + $0x14] sm:$0xf]
        %v3721 = vld [vmem:[%s266 + $0x18] sm:$0xf]
        %v3722 = vld [vmem:[%s266 + $0x1c] sm:$0xf]
        %v3723 = vld [vmem:[%s266 + $0x20] sm:$0xf]
        %v3724 = vld [vmem:[%s266 + $0x24] sm:$0xf]
        %v3725 = vld [vmem:[%s266 + $0x28] sm:$0xf]
        %v3726 = vld [vmem:[%s266 + $0x2c] sm:$0xf]
        %v3727 = vld [vmem:[%s266 + $0x30] sm:$0xf]
        %v3728 = vld [vmem:[%s266 + $0x34] sm:$0xf]
        %v3729 = vld [vmem:[%s266 + $0x38] sm:$0xf]
        %v3730 = vld [vmem:[%s266 + $0x3c] sm:$0xf]
        %v3731 = vld [vmem:[%s266 + $0x40] sm:$0xf]
        %v3732 = vld [vmem:[%s266 + $0x44] sm:$0xf]
        %v3733 = vld [vmem:[%s266 + $0x48] sm:$0xf]
        %v3734 = vld [vmem:[%s266 + $0x4c] sm:$0xf]
        %v3735 = vld [vmem:[%s266 + $0x50] sm:$0xf]
        %v3736 = vld [vmem:[%s266 + $0x54] sm:$0xf]
        %v3737 = vld [vmem:[%s266 + $0x58] sm:$0xf]
        %v3738 = vld [vmem:[%s266 + $0x5c] sm:$0xf]
        %v3739 = vld [vmem:[%s266 + $0x60] sm:$0xf]
        %v3740 = vld [vmem:[%s266 + $0x64] sm:$0xf]
        %v3741 = vld [vmem:[%s266 + $0x68] sm:$0xf]
        %v3742 = vld [vmem:[%s266 + $0x6c] sm:$0xf]
        %v3743 = vld [vmem:[%s266 + $0x70] sm:$0xf]
        %v3744 = vld [vmem:[%s266 + $0x74] sm:$0xf]
        %v3745 = vld [vmem:[%s266 + $0x78] sm:$0xf]
        %v3746 = vld [vmem:[%s266 + $0x7c] sm:$0xf]
        %v3747 = vunpack.c.l.bf16 %v3715
        %v3748 = vunpack.c.l.bf16 %v3716
        %v3749 = vunpack.c.l.bf16 %v3717
        %v3750 = vunpack.c.l.bf16 %v3718
        %v3751 = vunpack.c.l.bf16 %v3719
        %v3752 = vunpack.c.l.bf16 %v3720
        %v3753 = vunpack.c.l.bf16 %v3721
        %v3754 = vunpack.c.l.bf16 %v3722
        %v3755 = vunpack.c.l.bf16 %v3723
        %v3756 = vunpack.c.l.bf16 %v3724
        %v3757 = vunpack.c.l.bf16 %v3725
        %v3758 = vunpack.c.l.bf16 %v3726
        %v3759 = vunpack.c.l.bf16 %v3727
        %v3760 = vunpack.c.l.bf16 %v3728
        %v3761 = vunpack.c.l.bf16 %v3729
        %v3762 = vunpack.c.l.bf16 %v3730
        %v3763 = vunpack.c.l.bf16 %v3731
        %v3764 = vunpack.c.l.bf16 %v3732
        %v3765 = vunpack.c.l.bf16 %v3733
        %v3766 = vunpack.c.l.bf16 %v3734
        %v3767 = vunpack.c.l.bf16 %v3735
        %v3768 = vunpack.c.l.bf16 %v3736
        %v3769 = vunpack.c.l.bf16 %v3737
        %v3770 = vunpack.c.l.bf16 %v3738
        %v3771 = vunpack.c.l.bf16 %v3739
        %v3772 = vunpack.c.l.bf16 %v3740
        %v3773 = vunpack.c.l.bf16 %v3741
        %v3774 = vunpack.c.l.bf16 %v3742
        %v3775 = vunpack.c.l.bf16 %v3743
        %v3776 = vunpack.c.l.bf16 %v3744
        %v3777 = vunpack.c.l.bf16 %v3745
        %v3778 = vunpack.c.l.bf16 %v3746
        %v3779 = vadd.f32 %v3589, %v3747
        %v3780 = vadd.f32 %v3592, %v3748
        %v3781 = vadd.f32 %v3597, %v3749
        %v3782 = vadd.f32 %v3600, %v3750
        %v3783 = vadd.f32 %v3605, %v3751
        %v3784 = vadd.f32 %v3608, %v3752
        %v3785 = vadd.f32 %v3613, %v3753
        %v3786 = vadd.f32 %v3616, %v3754
        %v3787 = vadd.f32 %v3621, %v3755
        %v3788 = vadd.f32 %v3624, %v3756
        %v3789 = vadd.f32 %v3629, %v3757
        %v3790 = vadd.f32 %v3632, %v3758
        %v3791 = vadd.f32 %v3637, %v3759
        %v3792 = vadd.f32 %v3640, %v3760
        %v3793 = vadd.f32 %v3645, %v3761
        %v3794 = vadd.f32 %v3648, %v3762
        %v3795 = vadd.f32 %v3653, %v3763
        %v3796 = vadd.f32 %v3656, %v3764
        %v3797 = vadd.f32 %v3661, %v3765
        %v3798 = vadd.f32 %v3664, %v3766
        %v3799 = vadd.f32 %v3669, %v3767
        %v3800 = vadd.f32 %v3672, %v3768
        %v3801 = vadd.f32 %v3677, %v3769
        %v3802 = vadd.f32 %v3680, %v3770
        %v3803 = vadd.f32 %v3685, %v3771
        %v3804 = vadd.f32 %v3688, %v3772
        %v3805 = vadd.f32 %v3693, %v3773
        %v3806 = vadd.f32 %v3696, %v3774
        %v3807 = vadd.f32 %v3701, %v3775
        %v3808 = vadd.f32 %v3704, %v3776
        %v3809 = vadd.f32 %v3709, %v3777
        %v3810 = vadd.f32 %v3712, %v3778
        %v3811 = vmax.f32 %v3779, 0.0
        %v3812 = vmax.f32 %v3780, 0.0
        %v3813 = vmax.f32 %v3781, 0.0
        %v3814 = vmax.f32 %v3782, 0.0
        %v3815 = vmax.f32 %v3783, 0.0
        %v3816 = vmax.f32 %v3784, 0.0
        %v3817 = vmax.f32 %v3785, 0.0
        %v3818 = vmax.f32 %v3786, 0.0
        %v3819 = vmax.f32 %v3787, 0.0
        %v3820 = vmax.f32 %v3788, 0.0
        %v3821 = vmax.f32 %v3789, 0.0
        %v3822 = vmax.f32 %v3790, 0.0
        %v3823 = vmax.f32 %v3791, 0.0
        %v3824 = vmax.f32 %v3792, 0.0
        %v3825 = vmax.f32 %v3793, 0.0
        %v3826 = vmax.f32 %v3794, 0.0
        %v3827 = vmax.f32 %v3795, 0.0
        %v3828 = vmax.f32 %v3796, 0.0
        %v3829 = vmax.f32 %v3797, 0.0
        %v3830 = vmax.f32 %v3798, 0.0
        %v3831 = vmax.f32 %v3799, 0.0
        %v3832 = vmax.f32 %v3800, 0.0
        %v3833 = vmax.f32 %v3801, 0.0
        %v3834 = vmax.f32 %v3802, 0.0
        %v3835 = vmax.f32 %v3803, 0.0
        %v3836 = vmax.f32 %v3804, 0.0
        %v3837 = vmax.f32 %v3805, 0.0
        %v3838 = vmax.f32 %v3806, 0.0
        %v3839 = vmax.f32 %v3807, 0.0
        %v3840 = vmax.f32 %v3808, 0.0
        %v3841 = vmax.f32 %v3809, 0.0
        %v3842 = vmax.f32 %v3810, 0.0
        %v3843 = vpack.c.bf16 %v3812, %v3811
        %v3844 = vpack.c.bf16 %v3814, %v3813
        %v3845 = vpack.c.bf16 %v3816, %v3815
        %v3846 = vpack.c.bf16 %v3818, %v3817
        %v3847 = vpack.c.bf16 %v3820, %v3819
        %v3848 = vpack.c.bf16 %v3822, %v3821
        %v3849 = vpack.c.bf16 %v3824, %v3823
        %v3850 = vpack.c.bf16 %v3826, %v3825
        %v3851 = vpack.c.bf16 %v3828, %v3827
        %v3852 = vpack.c.bf16 %v3830, %v3829
        %v3853 = vpack.c.bf16 %v3832, %v3831
        %v3854 = vpack.c.bf16 %v3834, %v3833
        %v3855 = vpack.c.bf16 %v3836, %v3835
        %v3856 = vpack.c.bf16 %v3838, %v3837
        %v3857 = vpack.c.bf16 %v3840, %v3839
        %v3858 = vpack.c.bf16 %v3842, %v3841
        %v3875 = vunpack.c.l.b16 %v3843
        %v3876 = vunpack.c.h.b16 %v3843
        %v3877 = vunpack.c.l.b16 %v3844
        %v3878 = vunpack.c.h.b16 %v3844
        %v3879 = vunpack.c.l.b16 %v3845
        %v3880 = vunpack.c.h.b16 %v3845
        %v3881 = vunpack.c.l.b16 %v3846
        %v3882 = vunpack.c.h.b16 %v3846
        %v3883 = vunpack.c.l.b16 %v3847
        %v3884 = vunpack.c.h.b16 %v3847
        %v3885 = vunpack.c.l.b16 %v3848
        %v3886 = vunpack.c.h.b16 %v3848
        %v3887 = vunpack.c.l.b16 %v3849
        %v3888 = vunpack.c.h.b16 %v3849
        %v3889 = vunpack.c.l.b16 %v3850
        %v3890 = vunpack.c.h.b16 %v3850
        %v3891 = vunpack.c.l.b16 %v3851
        %v3892 = vunpack.c.h.b16 %v3851
        %v3893 = vunpack.c.l.b16 %v3852
        %v3894 = vunpack.c.h.b16 %v3852
        %v3895 = vunpack.c.l.b16 %v3853
        %v3896 = vunpack.c.h.b16 %v3853
        %v3897 = vunpack.c.l.b16 %v3854
        %v3898 = vunpack.c.h.b16 %v3854
        %v3899 = vunpack.c.l.b16 %v3855
        %v3900 = vunpack.c.h.b16 %v3855
        %v3901 = vunpack.c.l.b16 %v3856
        %v3902 = vunpack.c.h.b16 %v3856
        %v3903 = vunpack.c.l.b16 %v3857
        %v3904 = vunpack.c.h.b16 %v3857
        %v3905 = vunpack.c.l.b16 %v3858
        %v3906 = vunpack.c.h.b16 %v3858
        %v3907 = vpack.c.b16 %v3875, %v3875
        %v3908 = vpack.c.b16 %v3876, %v3876
        %v3909 = vpack.c.b16 %v3877, %v3877
        %v3910 = vpack.c.b16 %v3878, %v3878
        %v3911 = vpack.c.b16 %v3879, %v3879
        %v3912 = vpack.c.b16 %v3880, %v3880
        %v3913 = vpack.c.b16 %v3881, %v3881
        %v3914 = vpack.c.b16 %v3882, %v3882
        %v3915 = vpack.c.b16 %v3883, %v3883
        %v3916 = vpack.c.b16 %v3884, %v3884
        %v3917 = vpack.c.b16 %v3885, %v3885
        %v3918 = vpack.c.b16 %v3886, %v3886
        %v3919 = vpack.c.b16 %v3887, %v3887
        %v3920 = vpack.c.b16 %v3888, %v3888
        %v3921 = vpack.c.b16 %v3889, %v3889
        %v3922 = vpack.c.b16 %v3890, %v3890
        %v3923 = vpack.c.b16 %v3891, %v3891
        %v3924 = vpack.c.b16 %v3892, %v3892
        %v3925 = vpack.c.b16 %v3893, %v3893
        %v3926 = vpack.c.b16 %v3894, %v3894
        %v3927 = vpack.c.b16 %v3895, %v3895
        %v3928 = vpack.c.b16 %v3896, %v3896
        %v3929 = vpack.c.b16 %v3897, %v3897
        %v3930 = vpack.c.b16 %v3898, %v3898
        %v3931 = vpack.c.b16 %v3899, %v3899
        %v3932 = vpack.c.b16 %v3900, %v3900
        %v3933 = vpack.c.b16 %v3901, %v3901
        %v3934 = vpack.c.b16 %v3902, %v3902
        %v3935 = vpack.c.b16 %v3903, %v3903
        %v3936 = vpack.c.b16 %v3904, %v3904
        %v3937 = vpack.c.b16 %v3905, %v3905
        %v3938 = vpack.c.b16 %v3906, %v3906
        %vm3971 = vcmask 257024
        %3972 = vst.msk [vmem:[%s296] sm:$0xf] %vm3971, %v3907
        %3973 = vst.msk [vmem:[%s296 + $0x4] sm:$0xf] %vm3971, %v3908
        %3974 = vst.msk [vmem:[%s296 + $0x8] sm:$0xf] %vm3971, %v3909
        %3975 = vst.msk [vmem:[%s296 + $0xc] sm:$0xf] %vm3971, %v3910
        %3976 = vst.msk [vmem:[%s296 + $0x10] sm:$0xf] %vm3971, %v3911
        %3977 = vst.msk [vmem:[%s296 + $0x14] sm:$0xf] %vm3971, %v3912
        %3978 = vst.msk [vmem:[%s296 + $0x18] sm:$0xf] %vm3971, %v3913
        %3979 = vst.msk [vmem:[%s296 + $0x1c] sm:$0xf] %vm3971, %v3914
        %3980 = vst.msk [vmem:[%s296 + $0x20] sm:$0xf] %vm3971, %v3915
        %3981 = vst.msk [vmem:[%s296 + $0x24] sm:$0xf] %vm3971, %v3916
        %3982 = vst.msk [vmem:[%s296 + $0x28] sm:$0xf] %vm3971, %v3917
        %3983 = vst.msk [vmem:[%s296 + $0x2c] sm:$0xf] %vm3971, %v3918
        %3984 = vst.msk [vmem:[%s296 + $0x30] sm:$0xf] %vm3971, %v3919
        %3985 = vst.msk [vmem:[%s296 + $0x34] sm:$0xf] %vm3971, %v3920
        %3986 = vst.msk [vmem:[%s296 + $0x38] sm:$0xf] %vm3971, %v3921
        %3987 = vst.msk [vmem:[%s296 + $0x3c] sm:$0xf] %vm3971, %v3922
        %3988 = vst.msk [vmem:[%s296 + $0x40] sm:$0xf] %vm3971, %v3923
        %3989 = vst.msk [vmem:[%s296 + $0x44] sm:$0xf] %vm3971, %v3924
        %3990 = vst.msk [vmem:[%s296 + $0x48] sm:$0xf] %vm3971, %v3925
        %3991 = vst.msk [vmem:[%s296 + $0x4c] sm:$0xf] %vm3971, %v3926
        %3992 = vst.msk [vmem:[%s296 + $0x50] sm:$0xf] %vm3971, %v3927
        %3993 = vst.msk [vmem:[%s296 + $0x54] sm:$0xf] %vm3971, %v3928
        %3994 = vst.msk [vmem:[%s296 + $0x58] sm:$0xf] %vm3971, %v3929
        %3995 = vst.msk [vmem:[%s296 + $0x5c] sm:$0xf] %vm3971, %v3930
        %3996 = vst.msk [vmem:[%s296 + $0x60] sm:$0xf] %vm3971, %v3931
        %3997 = vst.msk [vmem:[%s296 + $0x64] sm:$0xf] %vm3971, %v3932
        %3998 = vst.msk [vmem:[%s296 + $0x68] sm:$0xf] %vm3971, %v3933
        %3999 = vst.msk [vmem:[%s296 + $0x6c] sm:$0xf] %vm3971, %v3934
        %4000 = vst.msk [vmem:[%s296 + $0x70] sm:$0xf] %vm3971, %v3935
        %4001 = vst.msk [vmem:[%s296 + $0x74] sm:$0xf] %vm3971, %v3936
        %4002 = vst.msk [vmem:[%s296 + $0x78] sm:$0xf] %vm3971, %v3937
        %4003 = vst.msk [vmem:[%s296 + $0x7c] sm:$0xf] %vm3971, %v3938
        %s4004 = sand.u32 %s184, 1
        %s4005 = scalar_lea.sflag [#allocation7], %s4004
        %s4006 = sand.u32 %s184, 1
        %s4007 = smul.addr %s4006, 128
        %s4008 = scalar_lea.vmem [#allocation8], %s4007
        // Predicated region
        $region53: #{tpu_custom_call.1} parent=47 // pred_check
          %p4009 = pneg %p194
        $region54: #{tpu_custom_call.1} parent=47 // pred_check_branch
          %4011 = sbr.rel (%p4009) target = $region56
        $region55: #{tpu_custom_call.1} parent=47 // pred_region
          %s4013 = ssub.s32 2048, 2048
          %4014 = vsyncadd %s4005, %s4013
          %s4015 = smul.addr %s24, 32
          %s4016 = smul.addr %s4015, 64
          %s4017 = scalar_lea.hbm %s7, %s4016
          %s4018 = sshll.u32 %s4008, 4
          %s4019 = int_to_ptr.vmem [resolvable:$true] %s4018
          %4024 = dma.vmem_to_hbm [thread:$0]  %s4019, 2048, %s4017, %s4005, 64, 64, 4
        $region56: #{tpu_custom_call.1} parent=47 // pred_fallthru
          _
      $region48: #{tpu_custom_call.1} parent=5 // pred_fallthru
        _
      %p4025 = scmp.le.s32.totalorder 2, %s19
      // Predicated region
      $region57: #{tpu_custom_call.1} parent=5 // pred_check
        %p4026 = pneg %p4025
      $region58: #{tpu_custom_call.1} parent=5 // pred_check_branch
        %4028 = sbr.rel (%p4026) target = $region60
      $region59: #{tpu_custom_call.1} parent=5 // pred_region
        %s4029 = ssub.s32 %s19, 2
        // Predicated region
        $region61: #{tpu_custom_call.1} parent=59 // pred_check
          %p4030 = pneg %p200
        $region62: #{tpu_custom_call.1} parent=59 // pred_check_branch
          %4032 = sbr.rel (%p4030) target = $region64
        $region63: #{tpu_custom_call.1} parent=59 // pred_region
          %s4033 = sand.u32 %s185, 1
          %s4034 = scalar_lea.sflag [#allocation7], %s4033
          %s4035 = sand.u32 %s185, 1
          %s4036 = smul.addr %s4035, 128
          %s4037 = scalar_lea.vmem [#allocation8], %s4036
          %4038 = dma.done %s4034, 2048
        $region64: #{tpu_custom_call.1} parent=59 // pred_fallthru
          _
      $region60: #{tpu_custom_call.1} parent=5 // pred_fallthru
        _
    $region6: #{tpu_custom_call.1} parent=1 // loop_footer
      %s23 = sadd.s32 1, %s19
    $region7: #{tpu_custom_call.1} parent=1 // loop_footer_branch
      %18 = sbr.rel target = $region3
    $region8: #{tpu_custom_call.1} parent=1 // loop_exit
      _
    %4039 = vsyncpa [#allocation6], 1
    %s4040 = scalar_lea.sflag [#allocation6], 1
    %4041 = vsyncpa %s4040, 1
    %4042 = vsyncpa [#allocation7], 1
    %s4043 = scalar_lea.sflag [#allocation7], 1
    %4044 = vsyncpa %s4043, 1

</llo_original>
